<compile_context>
chip_gen: v7x
topology: tpu7x:2x2x1
jax: 0.10.0
libtpu: 0.0.40
codegen_flags: <defaults>
</compile_context>

<pallas_src>
import jax
import jax.numpy as jnp
from jax import lax
from jax.experimental import pallas as pl
from jax.experimental.pallas import tpu as pltpu


# ----------------------------------------------------------------------------
# Fused LeNet forward kernel (one grid step = TB complete images, batch on lanes)
# ----------------------------------------------------------------------------
def _lenet_kernel(x_ref,                              # (1024, TB)  padded 32x32 input, row = h*32+w
                  c1e_ref, c1o_ref, c1b_ref,          # (96, 160) x2, (96, 1)
                  c2e_ref, c2o_ref, c2b_ref,          # (128, 480) x2, (128, 1)
                  fc1w_ref, fc1b_ref,                 # (120, 640), (120, 1)
                  fc2w_ref, fc2b_ref,                 # (84, 120),  (84, 1)
                  fc3w_ref, fc3b_ref,                 # (10, 84),   (10, 1)
                  out_ref,                            # (10, TB) logits, batch on lanes
                  x1_ref,                             # scratch (1344, TB): relu(pool(conv1)),
                                                      #   row = hp*96 + ci*16 + w  (w<14 valid)
                  feat_ref):                          # scratch (640, TB): fc1 features,
                                                      #   row = hp*128 + co*8 + wp (wp<5 valid)
    f32 = jnp.float32

    # ---- conv1 (1->6, k=5, pad=2) + 2x2 max-pool + relu, all on the MXU -------
    # For conv output row h, the im2col block is the contiguous slice
    # x[h*32 : h*32+160] (5 input rows).  c1e/c1o are banded weight matrices that
    # also apply the even/odd width-pool selection; the height pool is a running max.
    def conv1_row(hp, carry):                         # hp: pooled output row in [0, 14)
        r0 = pl.multiple_of(hp * 64, 64)              # (2*hp) * 32
        s0 = x_ref[pl.ds(r0, 160), :]                 # rows for conv row 2hp
        s1 = x_ref[pl.ds(r0 + 32, 160), :]            # rows for conv row 2hp+1
        acc = jnp.dot(c1e_ref[...], s0, preferred_element_type=f32)
        acc = jnp.maximum(acc, jnp.dot(c1o_ref[...], s0, preferred_element_type=f32))
        acc = jnp.maximum(acc, jnp.dot(c1e_ref[...], s1, preferred_element_type=f32))
        acc = jnp.maximum(acc, jnp.dot(c1o_ref[...], s1, preferred_element_type=f32))
        x1_ref[pl.ds(pl.multiple_of(hp * 96, 32), 96), :] = \
            jnp.maximum(acc + c1b_ref[...], 0.0)      # (96, TB): rows co*16 + w
        return carry
    lax.fori_loop(0, 14, conv1_row, 0)

    # ---- conv2 (6->16, k=5, valid) + 2x2 max-pool + relu, all on the MXU -------
    # x1 layout makes the conv2 im2col for conv row h a single contiguous slice
    # x1[h*96 : h*96+480] (5 height rows x 6 channels x 16-padded width).
    def conv2_row(hp, carry):                         # hp: pooled output row in [0, 5)
        r0 = pl.multiple_of(hp * 192, 64)             # (2*hp) * 96
        s0 = x1_ref[pl.ds(r0, 480), :]                # conv row 2hp
        s1 = x1_ref[pl.ds(r0 + 96, 480), :]           # conv row 2hp+1
        acc = jnp.dot(c2e_ref[...], s0, preferred_element_type=f32)
        acc = jnp.maximum(acc, jnp.dot(c2o_ref[...], s0, preferred_element_type=f32))
        acc = jnp.maximum(acc, jnp.dot(c2e_ref[...], s1, preferred_element_type=f32))
        acc = jnp.maximum(acc, jnp.dot(c2o_ref[...], s1, preferred_element_type=f32))
        feat_ref[pl.ds(pl.multiple_of(hp * 128, 128), 128), :] = \
            jnp.maximum(acc + c2b_ref[...], 0.0)      # (128, TB): rows co*8 + wp
        return carry
    lax.fori_loop(0, 5, conv2_row, 0)

    # ---- fc1 -> relu -> fc2 -> relu -> fc3 (batch stays on lanes) -------------
    f = feat_ref[...]                                                 # (640, TB)
    h1 = jnp.maximum(
        jnp.dot(fc1w_ref[...], f, preferred_element_type=f32) + fc1b_ref[...], 0.0)
    h2 = jnp.maximum(
        jnp.dot(fc2w_ref[...], h1, preferred_element_type=f32) + fc2b_ref[...], 0.0)
    out_ref[...] = jnp.dot(fc3w_ref[...], h2, preferred_element_type=f32) + fc3b_ref[...]


# ----------------------------------------------------------------------------
# Host-side wrapper
# ----------------------------------------------------------------------------
def cnn_forward(x_nchw, packed):
    """x_nchw: (N, 1, 28, 28) float32 -> logits (N, 10) float32."""
    N = x_nchw.shape[0]
    if N >= 128:
        TB = 128
        Np = ((N + 127) // 128) * 128
    else:
        TB, Np = N, N

    # Glue (tiny): squeeze channel, spatial zero-pad by 2 (conv1 padding), batch-pad,
    # put batch on lanes, flatten spatial to sublanes (row = h*32 + w).
    x = x_nchw[:, 0, :, :].astype(jnp.float32)                        # (N, 28, 28)
    x = jnp.pad(x, ((0, Np - N), (2, 2), (2, 2)))                     # (Np, 32, 32)
    x = jnp.transpose(x, (1, 2, 0)).reshape(32 * 32, Np)              # (1024, Np)

    const = lambda shape: pl.BlockSpec(shape, lambda i: (0, 0))
    out = pl.pallas_call(
        _lenet_kernel,
        out_shape=jax.ShapeDtypeStruct((10, Np), jnp.float32),
        grid=(Np // TB,),
        in_specs=[
            pl.BlockSpec((1024, TB), lambda i: (0, i)),
            const((96, 160)), const((96, 160)), const((96, 1)),
            const((128, 480)), const((128, 480)), const((128, 1)),
            const((120, 640)), const((120, 1)),
            const((84, 120)), const((84, 1)),
            const((10, 84)), const((10, 1)),
        ],
        out_specs=pl.BlockSpec((10, TB), lambda i: (0, i)),
        scratch_shapes=[
            pltpu.VMEM((1344, TB), jnp.float32),      # relu(pool(conv1)) activations
            pltpu.VMEM((640, TB), jnp.float32),       # flattened features for fc1
        ],
        compiler_params=pltpu.CompilerParams(dimension_semantics=("parallel",)),
    )(x,
      packed["c1_e"], packed["c1_o"], packed["c1_b"],
      packed["c2_e"], packed["c2_o"], packed["c2_b"],
      packed["fc1_w"], packed["fc1_b"], packed["fc2_w"], packed["fc2_b"],
      packed["fc3_w"], packed["fc3_b"])

    return out[:, :N].T                                               # (N, 10)


# ----------------------------------------------------------------------------
# Parameters: PyTorch-style init + one-time packing into kernel layout
# ----------------------------------------------------------------------------
def init_params(key):
    def uniform(key, shape, fan_in):
        bound = 1.0 / (fan_in ** 0.5)
        return jax.random.uniform(key, shape, jnp.float32, -bound, bound)

    ks = jax.random.split(key, 10)
    return {
        "conv1_w": uniform(ks[0], (6, 1, 5, 5), 25),
        "conv1_b": uniform(ks[1], (6,), 25),
        "conv2_w": uniform(ks[2], (16, 6, 5, 5), 150),
        "conv2_b": uniform(ks[3], (16,), 150),
        "fc1_w": uniform(ks[4], (120, 400), 400),
        "fc1_b": uniform(ks[5], (120,), 400),
        "fc2_w": uniform(ks[6], (84, 120), 120),
        "fc2_b": uniform(ks[7], (84,), 120),
        "fc3_w": uniform(ks[8], (10, 84), 84),
        "fc3_b": uniform(ks[9], (10,), 84),
    }


def pack_params(p):
    """One-time repack (hoisted out of the forward path).

    Builds banded conv weight matrices that fold the width-direction 5-tap
    convolution AND the even/odd phase of the 2x2 width max-pool into MXU
    matmul operands, plus matching broadcast-bias column vectors, plus the
    permuted/zero-padded fc1 weight matching the in-kernel feature layout.
    """
    f32 = jnp.float32
    w1 = p["conv1_w"].astype(f32)                     # (6, 1, 5, 5)
    w2 = p["conv2_w"].astype(f32)                     # (16, 6, 5, 5)

    def conv1_band(parity):
        co, wp, kh, kw = jnp.meshgrid(jnp.arange(6), jnp.arange(14),
                                      jnp.arange(5), jnp.arange(5), indexing="ij")
        rows = co * 16 + wp                           # output row: channel-major, width-minor
        cols = kh * 32 + 2 * wp + parity + kw         # im2col column (5 rows x 32 cols)
        vals = w1[co, 0, kh, kw]
        return jnp.zeros((96, 160), f32).at[rows, cols].set(vals)

    def conv2_band(parity):
        co, wp, ci, kh, kw = jnp.meshgrid(jnp.arange(16), jnp.arange(5), jnp.arange(6),
                                          jnp.arange(5), jnp.arange(5), indexing="ij")
        rows = co * 8 + wp
        cols = kh * 96 + ci * 16 + 2 * wp + parity + kw
        vals = w2[co, ci, kh, kw]
        return jnp.zeros((128, 480), f32).at[rows, cols].set(vals)

    co1, wp1 = jnp.meshgrid(jnp.arange(6), jnp.arange(14), indexing="ij")
    b1v = jnp.zeros((96, 1), f32).at[co1 * 16 + wp1, 0].set(
        jnp.broadcast_to(p["conv1_b"].astype(f32)[:, None], (6, 14)))
    co2, wp2 = jnp.meshgrid(jnp.arange(16), jnp.arange(5), indexing="ij")
    b2v = jnp.zeros((128, 1), f32).at[co2 * 8 + wp2, 0].set(
        jnp.broadcast_to(p["conv2_b"].astype(f32)[:, None], (16, 5)))

    # fc1: PyTorch flatten index f = co*25 + hp*5 + wp  ->  kernel feature row
    # hp*128 + co*8 + wp (padding rows wp in {5,6,7} are zero on both sides).
    f = jnp.arange(400)
    co, rem = f // 25, f % 25
    hp, wp = rem // 5, rem % 5
    newcol = hp * 128 + co * 8 + wp
    fc1w = jnp.zeros((120, 640), f32).at[:, newcol].set(p["fc1_w"].astype(f32))

    return {
        "c1_e": conv1_band(0), "c1_o": conv1_band(1), "c1_b": b1v,
        "c2_e": conv2_band(0), "c2_o": conv2_band(1), "c2_b": b2v,
        "fc1_w": fc1w, "fc1_b": p["fc1_b"].reshape(120, 1).astype(f32),
        "fc2_w": p["fc2_w"].astype(f32), "fc2_b": p["fc2_b"].reshape(84, 1).astype(f32),
        "fc3_w": p["fc3_w"].astype(f32), "fc3_b": p["fc3_b"].reshape(10, 1).astype(f32),
    }


# ----------------------------------------------------------------------------
# Pure-JAX reference (for correctness verification)
# ----------------------------------------------------------------------------
def cnn_forward_reference(x_nchw, params):
    x = x_nchw.astype(jnp.float32)
    dn = ("NCHW", "OIHW", "NCHW")
    y = lax.conv_general_dilated(x, params["conv1_w"], (1, 1), ((2, 2), (2, 2)),
                                 dimension_numbers=dn)
    y = y + params["conv1_b"].reshape(1, 6, 1, 1)
    y = lax.reduce_window(y, -jnp.inf, lax.max, (1, 1, 2, 2), (1, 1, 2, 2), "VALID")
    y = jnp.maximum(y, 0.0)
    y = lax.conv_general_dilated(y, params["conv2_w"], (1, 1), ((0, 0), (0, 0)),
                                 dimension_numbers=dn)
    y = y + params["conv2_b"].reshape(1, 16, 1, 1)
    y = lax.reduce_window(y, -jnp.inf, lax.max, (1, 1, 2, 2), (1, 1, 2, 2), "VALID")
    y = jnp.maximum(y, 0.0)
    y = y.reshape(y.shape[0], 400)
    y = jnp.maximum(y @ params["fc1_w"].T + params["fc1_b"], 0.0)
    y = jnp.maximum(y @ params["fc2_w"].T + params["fc2_b"], 0.0)
    return y @ params["fc3_w"].T + params["fc3_b"]


if __name__ == "__main__":
    # MNIST-shaped input is required by the 16*5*5 flatten in the module.
    x = jax.random.normal(jax.random.PRNGKey(0), (2, 1, 28, 28), jnp.float32)
    params = init_params(jax.random.PRNGKey(42))
    packed = pack_params(params)

    logits = jax.jit(cnn_forward)(x, packed)
    jax.block_until_ready(logits)
    assert logits.shape == (2, 10) and logits.dtype == jnp.float32

    with jax.default_matmul_precision("highest"):
        ref = cnn_forward_reference(x, params)
    err = float(jnp.max(jnp.abs(logits - ref)))
    assert err < 5e-2, f"mismatch vs reference: max abs err = {err}"

    print("KERNEL_OK")
</pallas_src>

<mosaic_0001>
module attributes {stable_mosaic.version = 11 : i64} {
  func.func @_lenet_kernel(%arg0: i32, %arg1: memref<1024x2xf32, #tpu.memory_space<vmem>>, %arg2: memref<96x160xf32, #tpu.memory_space<vmem>>, %arg3: memref<96x160xf32, #tpu.memory_space<vmem>>, %arg4: memref<96x1xf32, #tpu.memory_space<vmem>>, %arg5: memref<128x480xf32, #tpu.memory_space<vmem>>, %arg6: memref<128x480xf32, #tpu.memory_space<vmem>>, %arg7: memref<128x1xf32, #tpu.memory_space<vmem>>, %arg8: memref<120x640xf32, #tpu.memory_space<vmem>>, %arg9: memref<120x1xf32, #tpu.memory_space<vmem>>, %arg10: memref<84x120xf32, #tpu.memory_space<vmem>>, %arg11: memref<84x1xf32, #tpu.memory_space<vmem>>, %arg12: memref<10x84xf32, #tpu.memory_space<vmem>>, %arg13: memref<10x1xf32, #tpu.memory_space<vmem>>, %arg14: memref<10x2xf32, #tpu.memory_space<vmem>>, %arg15: memref<1344x2xf32, #tpu.memory_space<vmem>>, %arg16: memref<640x2xf32, #tpu.memory_space<vmem>>) attributes {dimension_semantics = [#tpu.dimension_semantics<parallel>], iteration_bounds = array<i64: 1>, scalar_prefetch = 0 : i64, scratch_operands = 2 : i64, tpu.core_type = #tpu.core_type<tc>, window_params = [{transform_indices = @transform_0, window_bounds = array<i64: 1024, 2>}, {pipeline_mode = #tpu.pipeline_mode<synchronous>, transform_indices = @transform_1, window_bounds = array<i64: 96, 160>}, {pipeline_mode = #tpu.pipeline_mode<synchronous>, transform_indices = @transform_2, window_bounds = array<i64: 96, 160>}, {pipeline_mode = #tpu.pipeline_mode<synchronous>, transform_indices = @transform_3, window_bounds = array<i64: 96, 1>}, {pipeline_mode = #tpu.pipeline_mode<synchronous>, transform_indices = @transform_4, window_bounds = array<i64: 128, 480>}, {pipeline_mode = #tpu.pipeline_mode<synchronous>, transform_indices = @transform_5, window_bounds = array<i64: 128, 480>}, {pipeline_mode = #tpu.pipeline_mode<synchronous>, transform_indices = @transform_6, window_bounds = array<i64: 128, 1>}, {pipeline_mode = #tpu.pipeline_mode<synchronous>, transform_indices = @transform_7, window_bounds = array<i64: 120, 640>}, {pipeline_mode = #tpu.pipeline_mode<synchronous>, transform_indices = @transform_8, window_bounds = array<i64: 120, 1>}, {pipeline_mode = #tpu.pipeline_mode<synchronous>, transform_indices = @transform_9, window_bounds = array<i64: 84, 120>}, {pipeline_mode = #tpu.pipeline_mode<synchronous>, transform_indices = @transform_10, window_bounds = array<i64: 84, 1>}, {pipeline_mode = #tpu.pipeline_mode<synchronous>, transform_indices = @transform_11, window_bounds = array<i64: 10, 84>}, {pipeline_mode = #tpu.pipeline_mode<synchronous>, transform_indices = @transform_12, window_bounds = array<i64: 10, 1>}, {transform_indices = @transform_13, window_bounds = array<i64: 10, 2>}]} {
    %c0_i32 = arith.constant 0 : i32
    %c14_i32 = arith.constant 14 : i32
    %0 = arith.addi %c0_i32, %c14_i32 : i32
    %c1_i32 = arith.constant 1 : i32
    scf.for %arg17 = %c0_i32 to %0 step %c1_i32  : i32 {
      %c64_i32 = arith.constant 64 : i32
      %23 = arith.muli %arg17, %c64_i32 : i32
      %24 = tpu.assume_multiple %23, 64 : i32
      %25 = arith.index_cast %24 : i32 to index
      %c0_23 = arith.constant 0 : index
      %26 = vector.load %arg1[%25, %c0_23] : memref<1024x2xf32, #tpu.memory_space<vmem>>, vector<160x2xf32>
      %c32_i32 = arith.constant 32 : i32
      %27 = arith.addi %24, %c32_i32 : i32
      %28 = arith.index_cast %27 : i32 to index
      %c0_24 = arith.constant 0 : index
      %29 = vector.load %arg1[%28, %c0_24] : memref<1024x2xf32, #tpu.memory_space<vmem>>, vector<160x2xf32>
      %c0_25 = arith.constant 0 : index
      %c0_26 = arith.constant 0 : index
      %30 = vector.load %arg2[%c0_25, %c0_26] : memref<96x160xf32, #tpu.memory_space<vmem>>, vector<96x160xf32>
      %cst_27 = arith.constant dense<0.000000e+00> : vector<96x2xf32>
      %31 = tpu.matmul %30, %26, %cst_27 {dimension_numbers = #tpu.dot_dimension_numbers<[1], [0], [0], [1], [0, 0, 1, 1], [], []>} : vector<96x160xf32>, vector<160x2xf32>, vector<96x2xf32> -> vector<96x2xf32>
      %c0_28 = arith.constant 0 : index
      %c0_29 = arith.constant 0 : index
      %32 = vector.load %arg3[%c0_28, %c0_29] : memref<96x160xf32, #tpu.memory_space<vmem>>, vector<96x160xf32>
      %cst_30 = arith.constant dense<0.000000e+00> : vector<96x2xf32>
      %33 = tpu.matmul %32, %26, %cst_30 {dimension_numbers = #tpu.dot_dimension_numbers<[1], [0], [0], [1], [0, 0, 1, 1], [], []>} : vector<96x160xf32>, vector<160x2xf32>, vector<96x2xf32> -> vector<96x2xf32>
      %34 = arith.maximumf %31, %33 : vector<96x2xf32>
      %c0_31 = arith.constant 0 : index
      %c0_32 = arith.constant 0 : index
      %35 = vector.load %arg2[%c0_31, %c0_32] : memref<96x160xf32, #tpu.memory_space<vmem>>, vector<96x160xf32>
      %cst_33 = arith.constant dense<0.000000e+00> : vector<96x2xf32>
      %36 = tpu.matmul %35, %29, %cst_33 {dimension_numbers = #tpu.dot_dimension_numbers<[1], [0], [0], [1], [0, 0, 1, 1], [], []>} : vector<96x160xf32>, vector<160x2xf32>, vector<96x2xf32> -> vector<96x2xf32>
      %37 = arith.maximumf %34, %36 : vector<96x2xf32>
      %c0_34 = arith.constant 0 : index
      %c0_35 = arith.constant 0 : index
      %38 = vector.load %arg3[%c0_34, %c0_35] : memref<96x160xf32, #tpu.memory_space<vmem>>, vector<96x160xf32>
      %cst_36 = arith.constant dense<0.000000e+00> : vector<96x2xf32>
      %39 = tpu.matmul %38, %29, %cst_36 {dimension_numbers = #tpu.dot_dimension_numbers<[1], [0], [0], [1], [0, 0, 1, 1], [], []>} : vector<96x160xf32>, vector<160x2xf32>, vector<96x2xf32> -> vector<96x2xf32>
      %40 = arith.maximumf %37, %39 : vector<96x2xf32>
      %c0_37 = arith.constant 0 : index
      %c0_38 = arith.constant 0 : index
      %41 = vector.load %arg4[%c0_37, %c0_38] : memref<96x1xf32, #tpu.memory_space<vmem>>, vector<96x1xf32>
      %42 = vector.broadcast %41 : vector<96x1xf32> to vector<96x2xf32>
      %43 = arith.addf %40, %42 : vector<96x2xf32>
      %cst_39 = arith.constant 0.000000e+00 : f32
      %44 = vector.broadcast %cst_39 : f32 to vector<96x2xf32>
      %45 = arith.maximumf %43, %44 : vector<96x2xf32>
      %c96_i32 = arith.constant 96 : i32
      %46 = arith.muli %arg17, %c96_i32 : i32
      %47 = tpu.assume_multiple %46, 32 : i32
      %48 = arith.index_cast %47 : i32 to index
      %c0_40 = arith.constant 0 : index
      %49 = vector.load %arg15[%48, %c0_40] : memref<1344x2xf32, #tpu.memory_space<vmem>>, vector<96x2xf32>
      tpu.vector_store %arg15[%48, %c0_40], %45 {strides = array<i32>} : memref<1344x2xf32, #tpu.memory_space<vmem>>, vector<96x2xf32>,
    }
    %c14_i32_0 = arith.constant 14 : i32
    %c0_i32_1 = arith.constant 0 : i32
    %c5_i32 = arith.constant 5 : i32
    %1 = arith.addi %c0_i32_1, %c5_i32 : i32
    %c1_i32_2 = arith.constant 1 : i32
    scf.for %arg17 = %c0_i32_1 to %1 step %c1_i32_2  : i32 {
      %c192_i32 = arith.constant 192 : i32
      %23 = arith.muli %arg17, %c192_i32 : i32
      %24 = tpu.assume_multiple %23, 64 : i32
      %25 = arith.index_cast %24 : i32 to index
      %c0_23 = arith.constant 0 : index
      %26 = vector.load %arg15[%25, %c0_23] : memref<1344x2xf32, #tpu.memory_space<vmem>>, vector<480x2xf32>
      %c96_i32 = arith.constant 96 : i32
      %27 = arith.addi %24, %c96_i32 : i32
      %28 = arith.index_cast %27 : i32 to index
      %c0_24 = arith.constant 0 : index
      %29 = vector.load %arg15[%28, %c0_24] : memref<1344x2xf32, #tpu.memory_space<vmem>>, vector<480x2xf32>
      %c0_25 = arith.constant 0 : index
      %c0_26 = arith.constant 0 : index
      %30 = vector.load %arg5[%c0_25, %c0_26] : memref<128x480xf32, #tpu.memory_space<vmem>>, vector<128x480xf32>
      %cst_27 = arith.constant dense<0.000000e+00> : vector<128x2xf32>
      %31 = tpu.matmul %30, %26, %cst_27 {dimension_numbers = #tpu.dot_dimension_numbers<[1], [0], [0], [1], [0, 0, 1, 1], [], []>} : vector<128x480xf32>, vector<480x2xf32>, vector<128x2xf32> -> vector<128x2xf32>
      %c0_28 = arith.constant 0 : index
      %c0_29 = arith.constant 0 : index
      %32 = vector.load %arg6[%c0_28, %c0_29] : memref<128x480xf32, #tpu.memory_space<vmem>>, vector<128x480xf32>
      %cst_30 = arith.constant dense<0.000000e+00> : vector<128x2xf32>
      %33 = tpu.matmul %32, %26, %cst_30 {dimension_numbers = #tpu.dot_dimension_numbers<[1], [0], [0], [1], [0, 0, 1, 1], [], []>} : vector<128x480xf32>, vector<480x2xf32>, vector<128x2xf32> -> vector<128x2xf32>
      %34 = arith.maximumf %31, %33 : vector<128x2xf32>
      %c0_31 = arith.constant 0 : index
      %c0_32 = arith.constant 0 : index
      %35 = vector.load %arg5[%c0_31, %c0_32] : memref<128x480xf32, #tpu.memory_space<vmem>>, vector<128x480xf32>
      %cst_33 = arith.constant dense<0.000000e+00> : vector<128x2xf32>
      %36 = tpu.matmul %35, %29, %cst_33 {dimension_numbers = #tpu.dot_dimension_numbers<[1], [0], [0], [1], [0, 0, 1, 1], [], []>} : vector<128x480xf32>, vector<480x2xf32>, vector<128x2xf32> -> vector<128x2xf32>
      %37 = arith.maximumf %34, %36 : vector<128x2xf32>
      %c0_34 = arith.constant 0 : index
      %c0_35 = arith.constant 0 : index
      %38 = vector.load %arg6[%c0_34, %c0_35] : memref<128x480xf32, #tpu.memory_space<vmem>>, vector<128x480xf32>
      %cst_36 = arith.constant dense<0.000000e+00> : vector<128x2xf32>
      %39 = tpu.matmul %38, %29, %cst_36 {dimension_numbers = #tpu.dot_dimension_numbers<[1], [0], [0], [1], [0, 0, 1, 1], [], []>} : vector<128x480xf32>, vector<480x2xf32>, vector<128x2xf32> -> vector<128x2xf32>
      %40 = arith.maximumf %37, %39 : vector<128x2xf32>
      %c0_37 = arith.constant 0 : index
      %c0_38 = arith.constant 0 : index
      %41 = vector.load %arg7[%c0_37, %c0_38] : memref<128x1xf32, #tpu.memory_space<vmem>>, vector<128x1xf32>
      %42 = vector.broadcast %41 : vector<128x1xf32> to vector<128x2xf32>
      %43 = arith.addf %40, %42 : vector<128x2xf32>
      %cst_39 = arith.constant 0.000000e+00 : f32
      %44 = vector.broadcast %cst_39 : f32 to vector<128x2xf32>
      %45 = arith.maximumf %43, %44 : vector<128x2xf32>
      %c128_i32 = arith.constant 128 : i32
      %46 = arith.muli %arg17, %c128_i32 : i32
      %47 = tpu.assume_multiple %46, 128 : i32
      %48 = arith.index_cast %47 : i32 to index
      %c0_40 = arith.constant 0 : index
      %49 = vector.load %arg16[%48, %c0_40] : memref<640x2xf32, #tpu.memory_space<vmem>>, vector<128x2xf32>
      tpu.vector_store %arg16[%48, %c0_40], %45 {strides = array<i32>} : memref<640x2xf32, #tpu.memory_space<vmem>>, vector<128x2xf32>,
    }
    %c5_i32_3 = arith.constant 5 : i32
    %c0 = arith.constant 0 : index
    %c0_4 = arith.constant 0 : index
    %2 = vector.load %arg16[%c0, %c0_4] : memref<640x2xf32, #tpu.memory_space<vmem>>, vector<640x2xf32>
    %c0_5 = arith.constant 0 : index
    %c0_6 = arith.constant 0 : index
    %3 = vector.load %arg8[%c0_5, %c0_6] : memref<120x640xf32, #tpu.memory_space<vmem>>, vector<120x640xf32>
    %cst = arith.constant dense<0.000000e+00> : vector<120x2xf32>
    %4 = tpu.matmul %3, %2, %cst {dimension_numbers = #tpu.dot_dimension_numbers<[1], [0], [0], [1], [0, 0, 1, 1], [], []>} : vector<120x640xf32>, vector<640x2xf32>, vector<120x2xf32> -> vector<120x2xf32>
    %c0_7 = arith.constant 0 : index
    %c0_8 = arith.constant 0 : index
    %5 = vector.load %arg9[%c0_7, %c0_8] : memref<120x1xf32, #tpu.memory_space<vmem>>, vector<120x1xf32>
    %6 = vector.broadcast %5 : vector<120x1xf32> to vector<120x2xf32>
    %7 = arith.addf %4, %6 : vector<120x2xf32>
    %cst_9 = arith.constant 0.000000e+00 : f32
    %8 = vector.broadcast %cst_9 : f32 to vector<120x2xf32>
    %9 = arith.maximumf %7, %8 : vector<120x2xf32>
    %c0_10 = arith.constant 0 : index
    %c0_11 = arith.constant 0 : index
    %10 = vector.load %arg10[%c0_10, %c0_11] : memref<84x120xf32, #tpu.memory_space<vmem>>, vector<84x120xf32>
    %cst_12 = arith.constant dense<0.000000e+00> : vector<84x2xf32>
    %11 = tpu.matmul %10, %9, %cst_12 {dimension_numbers = #tpu.dot_dimension_numbers<[1], [0], [0], [1], [0, 0, 1, 1], [], []>} : vector<84x120xf32>, vector<120x2xf32>, vector<84x2xf32> -> vector<84x2xf32>
    %c0_13 = arith.constant 0 : index
    %c0_14 = arith.constant 0 : index
    %12 = vector.load %arg11[%c0_13, %c0_14] : memref<84x1xf32, #tpu.memory_space<vmem>>, vector<84x1xf32>
    %13 = vector.broadcast %12 : vector<84x1xf32> to vector<84x2xf32>
    %14 = arith.addf %11, %13 : vector<84x2xf32>
    %cst_15 = arith.constant 0.000000e+00 : f32
    %15 = vector.broadcast %cst_15 : f32 to vector<84x2xf32>
    %16 = arith.maximumf %14, %15 : vector<84x2xf32>
    %c0_16 = arith.constant 0 : index
    %c0_17 = arith.constant 0 : index
    %17 = vector.load %arg12[%c0_16, %c0_17] : memref<10x84xf32, #tpu.memory_space<vmem>>, vector<10x84xf32>
    %cst_18 = arith.constant dense<0.000000e+00> : vector<10x2xf32>
    %18 = tpu.matmul %17, %16, %cst_18 {dimension_numbers = #tpu.dot_dimension_numbers<[1], [0], [0], [1], [0, 0, 1, 1], [], []>} : vector<10x84xf32>, vector<84x2xf32>, vector<10x2xf32> -> vector<10x2xf32>
    %c0_19 = arith.constant 0 : index
    %c0_20 = arith.constant 0 : index
    %19 = vector.load %arg13[%c0_19, %c0_20] : memref<10x1xf32, #tpu.memory_space<vmem>>, vector<10x1xf32>
    %20 = vector.broadcast %19 : vector<10x1xf32> to vector<10x2xf32>
    %21 = arith.addf %18, %20 : vector<10x2xf32>
    %c0_21 = arith.constant 0 : index
    %c0_22 = arith.constant 0 : index
    %22 = vector.load %arg14[%c0_21, %c0_22] : memref<10x2xf32, #tpu.memory_space<vmem>>, vector<10x2xf32>
    tpu.vector_store %arg14[%c0_21, %c0_22], %21 {strides = array<i32>} : memref<10x2xf32, #tpu.memory_space<vmem>>, vector<10x2xf32>,
    return
  }
  func.func @transform_0(%arg0: i32) -> (i32, i32) {
    %c0_i32 = arith.constant 0 : i32
    %c0_i32_0 = arith.constant 0 : i32
    return %c0_i32, %arg0 : i32, i32
  }
  func.func @transform_1(%arg0: i32) -> (i32, i32) {
    %c0_i32 = arith.constant 0 : i32
    %c0_i32_0 = arith.constant 0 : i32
    %c0_i32_1 = arith.constant 0 : i32
    return %c0_i32, %c0_i32_0 : i32, i32
  }
  func.func @transform_2(%arg0: i32) -> (i32, i32) {
    %c0_i32 = arith.constant 0 : i32
    %c0_i32_0 = arith.constant 0 : i32
    %c0_i32_1 = arith.constant 0 : i32
    return %c0_i32, %c0_i32_0 : i32, i32
  }
  func.func @transform_3(%arg0: i32) -> (i32, i32) {
    %c0_i32 = arith.constant 0 : i32
    %c0_i32_0 = arith.constant 0 : i32
    %c0_i32_1 = arith.constant 0 : i32
    return %c0_i32, %c0_i32_0 : i32, i32
  }
  func.func @transform_4(%arg0: i32) -> (i32, i32) {
    %c0_i32 = arith.constant 0 : i32
    %c0_i32_0 = arith.constant 0 : i32
    %c0_i32_1 = arith.constant 0 : i32
    return %c0_i32, %c0_i32_0 : i32, i32
  }
  func.func @transform_5(%arg0: i32) -> (i32, i32) {
    %c0_i32 = arith.constant 0 : i32
    %c0_i32_0 = arith.constant 0 : i32
    %c0_i32_1 = arith.constant 0 : i32
    return %c0_i32, %c0_i32_0 : i32, i32
  }
  func.func @transform_6(%arg0: i32) -> (i32, i32) {
    %c0_i32 = arith.constant 0 : i32
    %c0_i32_0 = arith.constant 0 : i32
    %c0_i32_1 = arith.constant 0 : i32
    return %c0_i32, %c0_i32_0 : i32, i32
  }
  func.func @transform_7(%arg0: i32) -> (i32, i32) {
    %c0_i32 = arith.constant 0 : i32
    %c0_i32_0 = arith.constant 0 : i32
    %c0_i32_1 = arith.constant 0 : i32
    return %c0_i32, %c0_i32_0 : i32, i32
  }
  func.func @transform_8(%arg0: i32) -> (i32, i32) {
    %c0_i32 = arith.constant 0 : i32
    %c0_i32_0 = arith.constant 0 : i32
    %c0_i32_1 = arith.constant 0 : i32
    return %c0_i32, %c0_i32_0 : i32, i32
  }
  func.func @transform_9(%arg0: i32) -> (i32, i32) {
    %c0_i32 = arith.constant 0 : i32
    %c0_i32_0 = arith.constant 0 : i32
    %c0_i32_1 = arith.constant 0 : i32
    return %c0_i32, %c0_i32_0 : i32, i32
  }
  func.func @transform_10(%arg0: i32) -> (i32, i32) {
    %c0_i32 = arith.constant 0 : i32
    %c0_i32_0 = arith.constant 0 : i32
    %c0_i32_1 = arith.constant 0 : i32
    return %c0_i32, %c0_i32_0 : i32, i32
  }
  func.func @transform_11(%arg0: i32) -> (i32, i32) {
    %c0_i32 = arith.constant 0 : i32
    %c0_i32_0 = arith.constant 0 : i32
    %c0_i32_1 = arith.constant 0 : i32
    return %c0_i32, %c0_i32_0 : i32, i32
  }
  func.func @transform_12(%arg0: i32) -> (i32, i32) {
    %c0_i32 = arith.constant 0 : i32
    %c0_i32_0 = arith.constant 0 : i32
    %c0_i32_1 = arith.constant 0 : i32
    return %c0_i32, %c0_i32_0 : i32, i32
  }
  func.func @transform_13(%arg0: i32) -> (i32, i32) {
    %c0_i32 = arith.constant 0 : i32
    %c0_i32_0 = arith.constant 0 : i32
    return %c0_i32, %arg0 : i32, i32
  }
}

</mosaic_0001>

<llo_original>
// kernel: cnn_forward.1
$region0: #{cnn_forward.1}
  #allocation0 [shape = 'u32[]', space=smem, size = 0x4, offset = 0x4, fixed_abs, tag = 'smem constant byte address 0x4 - core index']
  #allocation1 [shape = 'u32[144,128]{1,0:T(1,128)}', space=vmem, size = 0x12000, scoped, tag = 'internal scratch']
  #allocation2 [shape = 'f32[1344,2]{1,0:T(8,128)}', space=vmem, size = 0xa8000, scoped, tag = 'scratch operand']
  #allocation3 [shape = 'f32[640,2]{1,0:T(8,128)}', space=vmem, size = 0x50000, scoped, tag = 'scratch operand']
  %s0 = inlined_call_operand.vmem [shape: f32[1024,2], index: 0, kind: input, shape index: {}]
  %s1 = inlined_call_operand.vmem [shape: f32[96,160], index: 1, kind: input, shape index: {}]
  %s2 = inlined_call_operand.vmem [shape: f32[96,160], index: 2, kind: input, shape index: {}]
  %s3 = inlined_call_operand.vmem [shape: f32[96,1], index: 3, kind: input, shape index: {}]
  %s4 = inlined_call_operand.vmem [shape: f32[128,480], index: 4, kind: input, shape index: {}]
  %s5 = inlined_call_operand.vmem [shape: f32[128,480], index: 5, kind: input, shape index: {}]
  %s6 = inlined_call_operand.vmem [shape: f32[128,1], index: 6, kind: input, shape index: {}]
  %s7 = inlined_call_operand.vmem [shape: f32[120,640], index: 7, kind: input, shape index: {}]
  %s8 = inlined_call_operand.vmem [shape: f32[120,1], index: 8, kind: input, shape index: {}]
  %s9 = inlined_call_operand.vmem [shape: f32[84,120], index: 9, kind: input, shape index: {}]
  %s10 = inlined_call_operand.vmem [shape: f32[84,1], index: 10, kind: input, shape index: {}]
  %s11 = inlined_call_operand.vmem [shape: f32[10,84], index: 11, kind: input, shape index: {}]
  %s12 = inlined_call_operand.vmem [shape: f32[10,1], index: 12, kind: input, shape index: {}]
  %s13 = inlined_call_operand.vmem [shape: f32[10,2], index: 13, kind: output, shape index: {}]
  %s14 = sld [smem:[#allocation0]]
  $region76: #{cnn_forward.1} parent=0
    _
  %s16 = ssub.s32 1, %s14
  %s17 = scalar_select 0, %s16, %s14
  // Predicated region
  $region2: #{cnn_forward.1} parent=0 // pred_check
    _
  $region3: #{cnn_forward.1} parent=0 // pred_check_branch
    %19 = sbr.rel (0) target = $region5
  $region4: #{cnn_forward.1} parent=0 // pred_region
    _
  $region5: #{cnn_forward.1} parent=0 // pred_fallthru
    _
  // Predicated region
  $region6: #{cnn_forward.1} parent=0 // pred_check
    _
  $region7: #{cnn_forward.1} parent=0 // pred_check_branch
    %21 = sbr.rel (0) target = $region9
  $region8: #{cnn_forward.1} parent=0 // pred_region
    _
  $region9: #{cnn_forward.1} parent=0 // pred_fallthru
    _
  // Predicated region
  $region10: #{cnn_forward.1} parent=0 // pred_check
    _
  $region11: #{cnn_forward.1} parent=0 // pred_check_branch
    %23 = sbr.rel (0) target = $region13
  $region12: #{cnn_forward.1} parent=0 // pred_region
    _
  $region13: #{cnn_forward.1} parent=0 // pred_fallthru
    _
  // Predicated region
  $region14: #{cnn_forward.1} parent=0 // pred_check
    _
  $region15: #{cnn_forward.1} parent=0 // pred_check_branch
    %25 = sbr.rel (0) target = $region17
  $region16: #{cnn_forward.1} parent=0 // pred_region
    _
  $region17: #{cnn_forward.1} parent=0 // pred_fallthru
    _
  // Predicated region
  $region18: #{cnn_forward.1} parent=0 // pred_check
    _
  $region19: #{cnn_forward.1} parent=0 // pred_check_branch
    %27 = sbr.rel (0) target = $region21
  $region20: #{cnn_forward.1} parent=0 // pred_region
    _
  $region21: #{cnn_forward.1} parent=0 // pred_fallthru
    _
  // Predicated region
  $region22: #{cnn_forward.1} parent=0 // pred_check
    _
  $region23: #{cnn_forward.1} parent=0 // pred_check_branch
    %29 = sbr.rel (0) target = $region25
  $region24: #{cnn_forward.1} parent=0 // pred_region
    _
  $region25: #{cnn_forward.1} parent=0 // pred_fallthru
    _
  // Predicated region
  $region26: #{cnn_forward.1} parent=0 // pred_check
    _
  $region27: #{cnn_forward.1} parent=0 // pred_check_branch
    %31 = sbr.rel (0) target = $region29
  $region28: #{cnn_forward.1} parent=0 // pred_region
    _
  $region29: #{cnn_forward.1} parent=0 // pred_fallthru
    _
  // Predicated region
  $region30: #{cnn_forward.1} parent=0 // pred_check
    _
  $region31: #{cnn_forward.1} parent=0 // pred_check_branch
    %33 = sbr.rel (0) target = $region33
  $region32: #{cnn_forward.1} parent=0 // pred_region
    _
  $region33: #{cnn_forward.1} parent=0 // pred_fallthru
    _
  // Predicated region
  $region34: #{cnn_forward.1} parent=0 // pred_check
    _
  $region35: #{cnn_forward.1} parent=0 // pred_check_branch
    %35 = sbr.rel (0) target = $region37
  $region36: #{cnn_forward.1} parent=0 // pred_region
    _
  $region37: #{cnn_forward.1} parent=0 // pred_fallthru
    _
  // Predicated region
  $region38: #{cnn_forward.1} parent=0 // pred_check
    _
  $region39: #{cnn_forward.1} parent=0 // pred_check_branch
    %37 = sbr.rel (0) target = $region41
  $region40: #{cnn_forward.1} parent=0 // pred_region
    _
  $region41: #{cnn_forward.1} parent=0 // pred_fallthru
    _
  // Predicated region
  $region42: #{cnn_forward.1} parent=0 // pred_check
    _
  $region43: #{cnn_forward.1} parent=0 // pred_check_branch
    %39 = sbr.rel (0) target = $region45
  $region44: #{cnn_forward.1} parent=0 // pred_region
    _
  $region45: #{cnn_forward.1} parent=0 // pred_fallthru
    _
  // Predicated region
  $region46: #{cnn_forward.1} parent=0 // pred_check
    _
  $region47: #{cnn_forward.1} parent=0 // pred_check_branch
    %41 = sbr.rel (0) target = $region49
  $region48: #{cnn_forward.1} parent=0 // pred_region
    _
  $region49: #{cnn_forward.1} parent=0 // pred_fallthru
    _
  // Predicated region
  $region50: #{cnn_forward.1} parent=0 // pred_check
    _
  $region51: #{cnn_forward.1} parent=0 // pred_check_branch
    %43 = sbr.rel (0) target = $region53
  $region52: #{cnn_forward.1} parent=0 // pred_region
    _
  $region53: #{cnn_forward.1} parent=0 // pred_fallthru
    _
  loop: start=0, step=1, limit=14
  $region54: #{cnn_forward.1} parent=0 // loop_pre_header
    _
  $region55: #{cnn_forward.1} parent=0 // loop_header
    %s45 = sphi 0, %s49
    %p46 = scmp.ge.s32.totalorder %s45, 14
  $region56: #{cnn_forward.1} parent=0 // loop_header_branch
    %48 = sbr.rel (%p46) target = $region60
  $region57: #{cnn_forward.1} parent=0 // loop_body
    %s50 = smul.u32 %s45, 64
    %s51 = scalar_lea.vmem %s0, %s50
    %v52 = vld [vmem:[%s51] sm:$0xff]
    %v53 = vld [vmem:[%s51 + $0x8] sm:$0xff]
    %v54 = vld [vmem:[%s51 + $0x10] sm:$0xff]
    %v55 = vld [vmem:[%s51 + $0x18] sm:$0xff]
    %v56 = vld [vmem:[%s51 + $0x20] sm:$0xff]
    %v57 = vld [vmem:[%s51 + $0x28] sm:$0xff]
    %v58 = vld [vmem:[%s51 + $0x30] sm:$0xff]
    %v59 = vld [vmem:[%s51 + $0x38] sm:$0xff]
    %v60 = vld [vmem:[%s51 + $0x40] sm:$0xff]
    %v61 = vld [vmem:[%s51 + $0x48] sm:$0xff]
    %v62 = vld [vmem:[%s51 + $0x50] sm:$0xff]
    %v63 = vld [vmem:[%s51 + $0x58] sm:$0xff]
    %v64 = vld [vmem:[%s51 + $0x60] sm:$0xff]
    %v65 = vld [vmem:[%s51 + $0x68] sm:$0xff]
    %v66 = vld [vmem:[%s51 + $0x70] sm:$0xff]
    %v67 = vld [vmem:[%s51 + $0x78] sm:$0xff]
    %v68 = vld [vmem:[%s51 + $0x80] sm:$0xff]
    %v69 = vld [vmem:[%s51 + $0x88] sm:$0xff]
    %v70 = vld [vmem:[%s51 + $0x90] sm:$0xff]
    %v71 = vld [vmem:[%s51 + $0x98] sm:$0xff]
    %s72 = sadd.s32 %s50, 32
    %s73 = scalar_lea.vmem %s0, %s72
    %v74 = vld [vmem:[%s73] sm:$0xff]
    %v75 = vld [vmem:[%s73 + $0x8] sm:$0xff]
    %v76 = vld [vmem:[%s73 + $0x10] sm:$0xff]
    %v77 = vld [vmem:[%s73 + $0x18] sm:$0xff]
    %v78 = vld [vmem:[%s73 + $0x20] sm:$0xff]
    %v79 = vld [vmem:[%s73 + $0x28] sm:$0xff]
    %v80 = vld [vmem:[%s73 + $0x30] sm:$0xff]
    %v81 = vld [vmem:[%s73 + $0x38] sm:$0xff]
    %v82 = vld [vmem:[%s73 + $0x40] sm:$0xff]
    %v83 = vld [vmem:[%s73 + $0x48] sm:$0xff]
    %v84 = vld [vmem:[%s73 + $0x50] sm:$0xff]
    %v85 = vld [vmem:[%s73 + $0x58] sm:$0xff]
    %v86 = vld [vmem:[%s73 + $0x60] sm:$0xff]
    %v87 = vld [vmem:[%s73 + $0x68] sm:$0xff]
    %v88 = vld [vmem:[%s73 + $0x70] sm:$0xff]
    %v89 = vld [vmem:[%s73 + $0x78] sm:$0xff]
    %v90 = vld [vmem:[%s73 + $0x80] sm:$0xff]
    %v91 = vld [vmem:[%s73 + $0x88] sm:$0xff]
    %v92 = vld [vmem:[%s73 + $0x90] sm:$0xff]
    %v93 = vld [vmem:[%s73 + $0x98] sm:$0xff]
    %v94 = vld [vmem:[%s1] sm:$0xff]
    %v95 = vld [vmem:[%s1 + $0x8] sm:$0xff]
    %v96 = vld [vmem:[%s1 + $0x10] sm:$0xff]
    %v97 = vld [vmem:[%s1 + $0x18] sm:$0xff]
    %v98 = vld [vmem:[%s1 + $0x20] sm:$0xff]
    %v99 = vld [vmem:[%s1 + $0x28] sm:$0xff]
    %v100 = vld [vmem:[%s1 + $0x30] sm:$0xff]
    %v101 = vld [vmem:[%s1 + $0x38] sm:$0xff]
    %v102 = vld [vmem:[%s1 + $0x40] sm:$0xff]
    %v103 = vld [vmem:[%s1 + $0x48] sm:$0xff]
    %v104 = vld [vmem:[%s1 + $0x50] sm:$0xff]
    %v105 = vld [vmem:[%s1 + $0x58] sm:$0xff]
    %v106 = vld [vmem:[%s1 + $0x60] sm:$0xff]
    %v107 = vld [vmem:[%s1 + $0x68] sm:$0xff]
    %v108 = vld [vmem:[%s1 + $0x70] sm:$0xff]
    %v109 = vld [vmem:[%s1 + $0x78] sm:$0xff]
    %v110 = vld [vmem:[%s1 + $0x80] sm:$0xff]
    %v111 = vld [vmem:[%s1 + $0x88] sm:$0xff]
    %v112 = vld [vmem:[%s1 + $0x90] sm:$0xff]
    %v113 = vld [vmem:[%s1 + $0x98] sm:$0xff]
    %v114 = vld [vmem:[%s1 + $0xa0] sm:$0xff]
    %v115 = vld [vmem:[%s1 + $0xa8] sm:$0xff]
    %v116 = vld [vmem:[%s1 + $0xb0] sm:$0xff]
    %v117 = vld [vmem:[%s1 + $0xb8] sm:$0xff]
    %vm118 = vcmask 261120
    %v120 = vsel %vm118, %v95, 0
    %v123 = vsel %vm118, %v97, 0
    %v126 = vsel %vm118, %v99, 0
    %v129 = vsel %vm118, %v101, 0
    %v132 = vsel %vm118, %v103, 0
    %v135 = vsel %vm118, %v105, 0
    %v138 = vsel %vm118, %v107, 0
    %v141 = vsel %vm118, %v109, 0
    %v144 = vsel %vm118, %v111, 0
    %v147 = vsel %vm118, %v113, 0
    %v150 = vsel %vm118, %v115, 0
    %v153 = vsel %vm118, %v117, 0
    %155 = vmatprep.subr.mxu0 0.0
    %156 = vmatpush1.msra.mxu0 %v52
    %157 = vmatprep.subr.mxu0 0.0
    %158 = vmatpush1.msra.mxu0 %v53
    %159 = vmatprep.subr.mxu0 0.0
    %160 = vmatpush1.msra.mxu0 %v54
    %161 = vmatprep.subr.mxu0 0.0
    %162 = vmatpush1.msra.mxu0 %v55
    %163 = vmatprep.subr.mxu0 0.0
    %164 = vmatpush1.msra.mxu0 %v56
    %165 = vmatprep.subr.mxu0 0.0
    %166 = vmatpush1.msra.mxu0 %v57
    %167 = vmatprep.subr.mxu0 0.0
    %168 = vmatpush1.msra.mxu0 %v58
    %169 = vmatprep.subr.mxu0 0.0
    %170 = vmatpush1.msra.mxu0 %v59
    %171 = vmatprep.subr.mxu0 0.0
    %172 = vmatpush1.msra.mxu0 %v60
    %173 = vmatprep.subr.mxu0 0.0
    %174 = vmatpush1.msra.mxu0 %v61
    %175 = vmatprep.subr.mxu0 0.0
    %176 = vmatpush1.msra.mxu0 %v62
    %177 = vmatprep.subr.mxu0 0.0
    %178 = vmatpush1.msra.mxu0 %v63
    %179 = vmatprep.subr.mxu0 0.0
    %180 = vmatpush1.msra.mxu0 %v64
    %181 = vmatprep.subr.mxu0 0.0
    %182 = vmatpush1.msra.mxu0 %v65
    %183 = vmatprep.subr.mxu0 0.0
    %184 = vmatpush1.msra.mxu0 %v66
    %185 = vmatprep.subr.mxu0 0.0
    %186 = vmatpush1.msra.mxu0 %v67
    %187 = vmatprep.subr.mxu0 0.0
    %188 = vmatpush1.msra.mxu0 %v68
    %189 = vmatprep.subr.mxu0 0.0
    %190 = vmatpush1.msra.mxu0 %v69
    %191 = vmatprep.subr.mxu0 0.0
    %192 = vmatpush1.msra.mxu0 %v70
    %193 = vmatprep.subr.mxu0 0.0
    %194 = vmatpush1.msra.mxu0 %v71
    %195 = vmatprep.subr.mxu0 0.0
    %196 = vmatpush1.msra.mxu0 0.0
    %197 = vmatprep.subr.mxu0 0.0
    %198 = vmatpush1.msra.mxu0 0.0
    %199 = vmatprep.subr.mxu0 0.0
    %200 = vmatpush1.msra.mxu0 0.0
    %201 = vmatprep.subr.mxu0 0.0
    %202 = vmatpush1.msra.mxu0 0.0
    %203 = vmatprep.subr.mxu0 0.0
    %204 = vmatpush1.msra.mxu0 0.0
    %205 = vmatprep.subr.mxu0 0.0
    %206 = vmatpush1.msra.mxu0 0.0
    %207 = vmatprep.subr.mxu0 0.0
    %208 = vmatpush1.msra.mxu0 0.0
    %209 = vmatprep.subr.mxu0 0.0
    %210 = vmatpush1.msra.mxu0 0.0
    %211 = vmatprep.subr.mxu0 0.0
    %212 = vmatpush1.msra.mxu0 0.0
    %213 = vmatprep.subr.mxu0 0.0
    %214 = vmatpush1.msra.mxu0 0.0
    %215 = vmatprep.subr.mxu0 0.0
    %216 = vmatpush1.msra.mxu0 0.0
    %217 = vmatprep.subr.mxu0 0.0
    %218 = vmatpush1.msra.mxu0 0.0
    %219 = vmatprep.mubr.f32.mxu0 %v120
    %220 = vmatmul.mubr.f32.gmra.mrb[0].mxu0 %v94
    %v221 = vpop.f32.mrb[0].mxu0
    %v222 = vadd.f32 0.0, %v221
    %v223 = vpop.f32.mrb[0].mxu0
    %224 = vmatprep.mubr.f32.mxu0 %v123
    %225 = vmatmul.mubr.f32.gmra.mrb[0].mxu0 %v96
    %v226 = vpop.f32.mrb[0].mxu0
    %v227 = vadd.f32 0.0, %v226
    %v228 = vpop.f32.mrb[0].mxu0
    %229 = vmatprep.mubr.f32.mxu0 %v126
    %230 = vmatmul.mubr.f32.gmra.mrb[0].mxu0 %v98
    %v231 = vpop.f32.mrb[0].mxu0
    %v232 = vadd.f32 0.0, %v231
    %v233 = vpop.f32.mrb[0].mxu0
    %234 = vmatprep.mubr.f32.mxu0 %v129
    %235 = vmatmul.mubr.f32.gmra.mrb[0].mxu0 %v100
    %v236 = vpop.f32.mrb[0].mxu0
    %v237 = vadd.f32 0.0, %v236
    %v238 = vpop.f32.mrb[0].mxu0
    %239 = vmatprep.mubr.f32.mxu0 %v132
    %240 = vmatmul.mubr.f32.gmra.mrb[0].mxu0 %v102
    %v241 = vpop.f32.mrb[0].mxu0
    %v242 = vadd.f32 0.0, %v241
    %v243 = vpop.f32.mrb[0].mxu0
    %244 = vmatprep.mubr.f32.mxu0 %v135
    %245 = vmatmul.mubr.f32.gmra.mrb[0].mxu0 %v104
    %v246 = vpop.f32.mrb[0].mxu0
    %v247 = vadd.f32 0.0, %v246
    %v248 = vpop.f32.mrb[0].mxu0
    %249 = vmatprep.mubr.f32.mxu0 %v138
    %250 = vmatmul.mubr.f32.gmra.mrb[0].mxu0 %v106
    %v251 = vpop.f32.mrb[0].mxu0
    %v252 = vadd.f32 0.0, %v251
    %v253 = vpop.f32.mrb[0].mxu0
    %254 = vmatprep.mubr.f32.mxu0 %v141
    %255 = vmatmul.mubr.f32.gmra.mrb[0].mxu0 %v108
    %v256 = vpop.f32.mrb[0].mxu0
    %v257 = vadd.f32 0.0, %v256
    %v258 = vpop.f32.mrb[0].mxu0
    %259 = vmatprep.mubr.f32.mxu0 %v144
    %260 = vmatmul.mubr.f32.gmra.mrb[0].mxu0 %v110
    %v261 = vpop.f32.mrb[0].mxu0
    %v262 = vadd.f32 0.0, %v261
    %v263 = vpop.f32.mrb[0].mxu0
    %264 = vmatprep.mubr.f32.mxu0 %v147
    %265 = vmatmul.mubr.f32.gmra.mrb[0].mxu0 %v112
    %v266 = vpop.f32.mrb[0].mxu0
    %v267 = vadd.f32 0.0, %v266
    %v268 = vpop.f32.mrb[0].mxu0
    %269 = vmatprep.mubr.f32.mxu0 %v150
    %270 = vmatmul.mubr.f32.gmra.mrb[0].mxu0 %v114
    %v271 = vpop.f32.mrb[0].mxu0
    %v272 = vadd.f32 0.0, %v271
    %v273 = vpop.f32.mrb[0].mxu0
    %274 = vmatprep.mubr.f32.mxu0 %v153
    %275 = vmatmul.mubr.f32.gmra.mrb[0].mxu0 %v116
    %v276 = vpop.f32.mrb[0].mxu0
    %v277 = vadd.f32 0.0, %v276
    %v278 = vpop.f32.mrb[0].mxu0
    %279 = vdwg.mxu0
    %v280 = vld [vmem:[%s2] sm:$0xff]
    %v281 = vld [vmem:[%s2 + $0x8] sm:$0xff]
    %v282 = vld [vmem:[%s2 + $0x10] sm:$0xff]
    %v283 = vld [vmem:[%s2 + $0x18] sm:$0xff]
    %v284 = vld [vmem:[%s2 + $0x20] sm:$0xff]
    %v285 = vld [vmem:[%s2 + $0x28] sm:$0xff]
    %v286 = vld [vmem:[%s2 + $0x30] sm:$0xff]
    %v287 = vld [vmem:[%s2 + $0x38] sm:$0xff]
    %v288 = vld [vmem:[%s2 + $0x40] sm:$0xff]
    %v289 = vld [vmem:[%s2 + $0x48] sm:$0xff]
    %v290 = vld [vmem:[%s2 + $0x50] sm:$0xff]
    %v291 = vld [vmem:[%s2 + $0x58] sm:$0xff]
    %v292 = vld [vmem:[%s2 + $0x60] sm:$0xff]
    %v293 = vld [vmem:[%s2 + $0x68] sm:$0xff]
    %v294 = vld [vmem:[%s2 + $0x70] sm:$0xff]
    %v295 = vld [vmem:[%s2 + $0x78] sm:$0xff]
    %v296 = vld [vmem:[%s2 + $0x80] sm:$0xff]
    %v297 = vld [vmem:[%s2 + $0x88] sm:$0xff]
    %v298 = vld [vmem:[%s2 + $0x90] sm:$0xff]
    %v299 = vld [vmem:[%s2 + $0x98] sm:$0xff]
    %v300 = vld [vmem:[%s2 + $0xa0] sm:$0xff]
    %v301 = vld [vmem:[%s2 + $0xa8] sm:$0xff]
    %v302 = vld [vmem:[%s2 + $0xb0] sm:$0xff]
    %v303 = vld [vmem:[%s2 + $0xb8] sm:$0xff]
    %v305 = vsel %vm118, %v281, 0
    %v308 = vsel %vm118, %v283, 0
    %v311 = vsel %vm118, %v285, 0
    %v314 = vsel %vm118, %v287, 0
    %v317 = vsel %vm118, %v289, 0
    %v320 = vsel %vm118, %v291, 0
    %v323 = vsel %vm118, %v293, 0
    %v326 = vsel %vm118, %v295, 0
    %v329 = vsel %vm118, %v297, 0
    %v332 = vsel %vm118, %v299, 0
    %v335 = vsel %vm118, %v301, 0
    %v338 = vsel %vm118, %v303, 0
    %340 = vmatprep.subr.mxu0 0.0
    %341 = vmatpush1.msra.mxu0 %v52
    %342 = vmatprep.subr.mxu0 0.0
    %343 = vmatpush1.msra.mxu0 %v53
    %344 = vmatprep.subr.mxu0 0.0
    %345 = vmatpush1.msra.mxu0 %v54
    %346 = vmatprep.subr.mxu0 0.0
    %347 = vmatpush1.msra.mxu0 %v55
    %348 = vmatprep.subr.mxu0 0.0
    %349 = vmatpush1.msra.mxu0 %v56
    %350 = vmatprep.subr.mxu0 0.0
    %351 = vmatpush1.msra.mxu0 %v57
    %352 = vmatprep.subr.mxu0 0.0
    %353 = vmatpush1.msra.mxu0 %v58
    %354 = vmatprep.subr.mxu0 0.0
    %355 = vmatpush1.msra.mxu0 %v59
    %356 = vmatprep.subr.mxu0 0.0
    %357 = vmatpush1.msra.mxu0 %v60
    %358 = vmatprep.subr.mxu0 0.0
    %359 = vmatpush1.msra.mxu0 %v61
    %360 = vmatprep.subr.mxu0 0.0
    %361 = vmatpush1.msra.mxu0 %v62
    %362 = vmatprep.subr.mxu0 0.0
    %363 = vmatpush1.msra.mxu0 %v63
    %364 = vmatprep.subr.mxu0 0.0
    %365 = vmatpush1.msra.mxu0 %v64
    %366 = vmatprep.subr.mxu0 0.0
    %367 = vmatpush1.msra.mxu0 %v65
    %368 = vmatprep.subr.mxu0 0.0
    %369 = vmatpush1.msra.mxu0 %v66
    %370 = vmatprep.subr.mxu0 0.0
    %371 = vmatpush1.msra.mxu0 %v67
    %372 = vmatprep.subr.mxu0 0.0
    %373 = vmatpush1.msra.mxu0 %v68
    %374 = vmatprep.subr.mxu0 0.0
    %375 = vmatpush1.msra.mxu0 %v69
    %376 = vmatprep.subr.mxu0 0.0
    %377 = vmatpush1.msra.mxu0 %v70
    %378 = vmatprep.subr.mxu0 0.0
    %379 = vmatpush1.msra.mxu0 %v71
    %380 = vmatprep.subr.mxu0 0.0
    %381 = vmatpush1.msra.mxu0 0.0
    %382 = vmatprep.subr.mxu0 0.0
    %383 = vmatpush1.msra.mxu0 0.0
    %384 = vmatprep.subr.mxu0 0.0
    %385 = vmatpush1.msra.mxu0 0.0
    %386 = vmatprep.subr.mxu0 0.0
    %387 = vmatpush1.msra.mxu0 0.0
    %388 = vmatprep.subr.mxu0 0.0
    %389 = vmatpush1.msra.mxu0 0.0
    %390 = vmatprep.subr.mxu0 0.0
    %391 = vmatpush1.msra.mxu0 0.0
    %392 = vmatprep.subr.mxu0 0.0
    %393 = vmatpush1.msra.mxu0 0.0
    %394 = vmatprep.subr.mxu0 0.0
    %395 = vmatpush1.msra.mxu0 0.0
    %396 = vmatprep.subr.mxu0 0.0
    %397 = vmatpush1.msra.mxu0 0.0
    %398 = vmatprep.subr.mxu0 0.0
    %399 = vmatpush1.msra.mxu0 0.0
    %400 = vmatprep.subr.mxu0 0.0
    %401 = vmatpush1.msra.mxu0 0.0
    %402 = vmatprep.subr.mxu0 0.0
    %403 = vmatpush1.msra.mxu0 0.0
    %404 = vmatprep.mubr.f32.mxu0 %v305
    %405 = vmatmul.mubr.f32.gmra.mrb[0].mxu0 %v280
    %v406 = vpop.f32.mrb[0].mxu0
    %v407 = vadd.f32 0.0, %v406
    %v408 = vpop.f32.mrb[0].mxu0
    %409 = vmatprep.mubr.f32.mxu0 %v308
    %410 = vmatmul.mubr.f32.gmra.mrb[0].mxu0 %v282
    %v411 = vpop.f32.mrb[0].mxu0
    %v412 = vadd.f32 0.0, %v411
    %v413 = vpop.f32.mrb[0].mxu0
    %414 = vmatprep.mubr.f32.mxu0 %v311
    %415 = vmatmul.mubr.f32.gmra.mrb[0].mxu0 %v284
    %v416 = vpop.f32.mrb[0].mxu0
    %v417 = vadd.f32 0.0, %v416
    %v418 = vpop.f32.mrb[0].mxu0
    %419 = vmatprep.mubr.f32.mxu0 %v314
    %420 = vmatmul.mubr.f32.gmra.mrb[0].mxu0 %v286
    %v421 = vpop.f32.mrb[0].mxu0
    %v422 = vadd.f32 0.0, %v421
    %v423 = vpop.f32.mrb[0].mxu0
    %424 = vmatprep.mubr.f32.mxu0 %v317
    %425 = vmatmul.mubr.f32.gmra.mrb[0].mxu0 %v288
    %v426 = vpop.f32.mrb[0].mxu0
    %v427 = vadd.f32 0.0, %v426
    %v428 = vpop.f32.mrb[0].mxu0
    %429 = vmatprep.mubr.f32.mxu0 %v320
    %430 = vmatmul.mubr.f32.gmra.mrb[0].mxu0 %v290
    %v431 = vpop.f32.mrb[0].mxu0
    %v432 = vadd.f32 0.0, %v431
    %v433 = vpop.f32.mrb[0].mxu0
    %434 = vmatprep.mubr.f32.mxu0 %v323
    %435 = vmatmul.mubr.f32.gmra.mrb[0].mxu0 %v292
    %v436 = vpop.f32.mrb[0].mxu0
    %v437 = vadd.f32 0.0, %v436
    %v438 = vpop.f32.mrb[0].mxu0
    %439 = vmatprep.mubr.f32.mxu0 %v326
    %440 = vmatmul.mubr.f32.gmra.mrb[0].mxu0 %v294
    %v441 = vpop.f32.mrb[0].mxu0
    %v442 = vadd.f32 0.0, %v441
    %v443 = vpop.f32.mrb[0].mxu0
    %444 = vmatprep.mubr.f32.mxu0 %v329
    %445 = vmatmul.mubr.f32.gmra.mrb[0].mxu0 %v296
    %v446 = vpop.f32.mrb[0].mxu0
    %v447 = vadd.f32 0.0, %v446
    %v448 = vpop.f32.mrb[0].mxu0
    %449 = vmatprep.mubr.f32.mxu0 %v332
    %450 = vmatmul.mubr.f32.gmra.mrb[0].mxu0 %v298
    %v451 = vpop.f32.mrb[0].mxu0
    %v452 = vadd.f32 0.0, %v451
    %v453 = vpop.f32.mrb[0].mxu0
    %454 = vmatprep.mubr.f32.mxu0 %v335
    %455 = vmatmul.mubr.f32.gmra.mrb[0].mxu0 %v300
    %v456 = vpop.f32.mrb[0].mxu0
    %v457 = vadd.f32 0.0, %v456
    %v458 = vpop.f32.mrb[0].mxu0
    %459 = vmatprep.mubr.f32.mxu0 %v338
    %460 = vmatmul.mubr.f32.gmra.mrb[0].mxu0 %v302
    %v461 = vpop.f32.mrb[0].mxu0
    %v462 = vadd.f32 0.0, %v461
    %v463 = vpop.f32.mrb[0].mxu0
    %464 = vdwg.mxu0
    %v465 = vmax.f32 %v222, %v407
    %v466 = vmax.f32 %v227, %v412
    %v467 = vmax.f32 %v232, %v417
    %v468 = vmax.f32 %v237, %v422
    %v469 = vmax.f32 %v242, %v427
    %v470 = vmax.f32 %v247, %v432
    %v471 = vmax.f32 %v252, %v437
    %v472 = vmax.f32 %v257, %v442
    %v473 = vmax.f32 %v262, %v447
    %v474 = vmax.f32 %v267, %v452
    %v475 = vmax.f32 %v272, %v457
    %v476 = vmax.f32 %v277, %v462
    %477 = vmatprep.subr.mxu0 0.0
    %478 = vmatpush1.msra.mxu0 %v74
    %479 = vmatprep.subr.mxu0 0.0
    %480 = vmatpush1.msra.mxu0 %v75
    %481 = vmatprep.subr.mxu0 0.0
    %482 = vmatpush1.msra.mxu0 %v76
    %483 = vmatprep.subr.mxu0 0.0
    %484 = vmatpush1.msra.mxu0 %v77
    %485 = vmatprep.subr.mxu0 0.0
    %486 = vmatpush1.msra.mxu0 %v78
    %487 = vmatprep.subr.mxu0 0.0
    %488 = vmatpush1.msra.mxu0 %v79
    %489 = vmatprep.subr.mxu0 0.0
    %490 = vmatpush1.msra.mxu0 %v80
    %491 = vmatprep.subr.mxu0 0.0
    %492 = vmatpush1.msra.mxu0 %v81
    %493 = vmatprep.subr.mxu0 0.0
    %494 = vmatpush1.msra.mxu0 %v82
    %495 = vmatprep.subr.mxu0 0.0
    %496 = vmatpush1.msra.mxu0 %v83
    %497 = vmatprep.subr.mxu0 0.0
    %498 = vmatpush1.msra.mxu0 %v84
    %499 = vmatprep.subr.mxu0 0.0
    %500 = vmatpush1.msra.mxu0 %v85
    %501 = vmatprep.subr.mxu0 0.0
    %502 = vmatpush1.msra.mxu0 %v86
    %503 = vmatprep.subr.mxu0 0.0
    %504 = vmatpush1.msra.mxu0 %v87
    %505 = vmatprep.subr.mxu0 0.0
    %506 = vmatpush1.msra.mxu0 %v88
    %507 = vmatprep.subr.mxu0 0.0
    %508 = vmatpush1.msra.mxu0 %v89
    %509 = vmatprep.subr.mxu0 0.0
    %510 = vmatpush1.msra.mxu0 %v90
    %511 = vmatprep.subr.mxu0 0.0
    %512 = vmatpush1.msra.mxu0 %v91
    %513 = vmatprep.subr.mxu0 0.0
    %514 = vmatpush1.msra.mxu0 %v92
    %515 = vmatprep.subr.mxu0 0.0
    %516 = vmatpush1.msra.mxu0 %v93
    %517 = vmatprep.subr.mxu0 0.0
    %518 = vmatpush1.msra.mxu0 0.0
    %519 = vmatprep.subr.mxu0 0.0
    %520 = vmatpush1.msra.mxu0 0.0
    %521 = vmatprep.subr.mxu0 0.0
    %522 = vmatpush1.msra.mxu0 0.0
    %523 = vmatprep.subr.mxu0 0.0
    %524 = vmatpush1.msra.mxu0 0.0
    %525 = vmatprep.subr.mxu0 0.0
    %526 = vmatpush1.msra.mxu0 0.0
    %527 = vmatprep.subr.mxu0 0.0
    %528 = vmatpush1.msra.mxu0 0.0
    %529 = vmatprep.subr.mxu0 0.0
    %530 = vmatpush1.msra.mxu0 0.0
    %531 = vmatprep.subr.mxu0 0.0
    %532 = vmatpush1.msra.mxu0 0.0
    %533 = vmatprep.subr.mxu0 0.0
    %534 = vmatpush1.msra.mxu0 0.0
    %535 = vmatprep.subr.mxu0 0.0
    %536 = vmatpush1.msra.mxu0 0.0
    %537 = vmatprep.subr.mxu0 0.0
    %538 = vmatpush1.msra.mxu0 0.0
    %539 = vmatprep.subr.mxu0 0.0
    %540 = vmatpush1.msra.mxu0 0.0
    %541 = vmatprep.mubr.f32.mxu0 %v120
    %542 = vmatmul.mubr.f32.gmra.mrb[0].mxu0 %v94
    %v543 = vpop.f32.mrb[0].mxu0
    %v544 = vadd.f32 0.0, %v543
    %v545 = vpop.f32.mrb[0].mxu0
    %546 = vmatprep.mubr.f32.mxu0 %v123
    %547 = vmatmul.mubr.f32.gmra.mrb[0].mxu0 %v96
    %v548 = vpop.f32.mrb[0].mxu0
    %v549 = vadd.f32 0.0, %v548
    %v550 = vpop.f32.mrb[0].mxu0
    %551 = vmatprep.mubr.f32.mxu0 %v126
    %552 = vmatmul.mubr.f32.gmra.mrb[0].mxu0 %v98
    %v553 = vpop.f32.mrb[0].mxu0
    %v554 = vadd.f32 0.0, %v553
    %v555 = vpop.f32.mrb[0].mxu0
    %556 = vmatprep.mubr.f32.mxu0 %v129
    %557 = vmatmul.mubr.f32.gmra.mrb[0].mxu0 %v100
    %v558 = vpop.f32.mrb[0].mxu0
    %v559 = vadd.f32 0.0, %v558
    %v560 = vpop.f32.mrb[0].mxu0
    %561 = vmatprep.mubr.f32.mxu0 %v132
    %562 = vmatmul.mubr.f32.gmra.mrb[0].mxu0 %v102
    %v563 = vpop.f32.mrb[0].mxu0
    %v564 = vadd.f32 0.0, %v563
    %v565 = vpop.f32.mrb[0].mxu0
    %566 = vmatprep.mubr.f32.mxu0 %v135
    %567 = vmatmul.mubr.f32.gmra.mrb[0].mxu0 %v104
    %v568 = vpop.f32.mrb[0].mxu0
    %v569 = vadd.f32 0.0, %v568
    %v570 = vpop.f32.mrb[0].mxu0
    %571 = vmatprep.mubr.f32.mxu0 %v138
    %572 = vmatmul.mubr.f32.gmra.mrb[0].mxu0 %v106
    %v573 = vpop.f32.mrb[0].mxu0
    %v574 = vadd.f32 0.0, %v573
    %v575 = vpop.f32.mrb[0].mxu0
    %576 = vmatprep.mubr.f32.mxu0 %v141
    %577 = vmatmul.mubr.f32.gmra.mrb[0].mxu0 %v108
    %v578 = vpop.f32.mrb[0].mxu0
    %v579 = vadd.f32 0.0, %v578
    %v580 = vpop.f32.mrb[0].mxu0
    %581 = vmatprep.mubr.f32.mxu0 %v144
    %582 = vmatmul.mubr.f32.gmra.mrb[0].mxu0 %v110
    %v583 = vpop.f32.mrb[0].mxu0
    %v584 = vadd.f32 0.0, %v583
    %v585 = vpop.f32.mrb[0].mxu0
    %586 = vmatprep.mubr.f32.mxu0 %v147
    %587 = vmatmul.mubr.f32.gmra.mrb[0].mxu0 %v112
    %v588 = vpop.f32.mrb[0].mxu0
    %v589 = vadd.f32 0.0, %v588
    %v590 = vpop.f32.mrb[0].mxu0
    %591 = vmatprep.mubr.f32.mxu0 %v150
    %592 = vmatmul.mubr.f32.gmra.mrb[0].mxu0 %v114
    %v593 = vpop.f32.mrb[0].mxu0
    %v594 = vadd.f32 0.0, %v593
    %v595 = vpop.f32.mrb[0].mxu0
    %596 = vmatprep.mubr.f32.mxu0 %v153
    %597 = vmatmul.mubr.f32.gmra.mrb[0].mxu0 %v116
    %v598 = vpop.f32.mrb[0].mxu0
    %v599 = vadd.f32 0.0, %v598
    %v600 = vpop.f32.mrb[0].mxu0
    %601 = vdwg.mxu0
    %v602 = vmax.f32 %v465, %v544
    %v603 = vmax.f32 %v466, %v549
    %v604 = vmax.f32 %v467, %v554
    %v605 = vmax.f32 %v468, %v559
    %v606 = vmax.f32 %v469, %v564
    %v607 = vmax.f32 %v470, %v569
    %v608 = vmax.f32 %v471, %v574
    %v609 = vmax.f32 %v472, %v579
    %v610 = vmax.f32 %v473, %v584
    %v611 = vmax.f32 %v474, %v589
    %v612 = vmax.f32 %v475, %v594
    %v613 = vmax.f32 %v476, %v599
    %614 = vmatprep.subr.mxu0 0.0
    %615 = vmatpush1.msra.mxu0 %v74
    %616 = vmatprep.subr.mxu0 0.0
    %617 = vmatpush1.msra.mxu0 %v75
    %618 = vmatprep.subr.mxu0 0.0
    %619 = vmatpush1.msra.mxu0 %v76
    %620 = vmatprep.subr.mxu0 0.0
    %621 = vmatpush1.msra.mxu0 %v77
    %622 = vmatprep.subr.mxu0 0.0
    %623 = vmatpush1.msra.mxu0 %v78
    %624 = vmatprep.subr.mxu0 0.0
    %625 = vmatpush1.msra.mxu0 %v79
    %626 = vmatprep.subr.mxu0 0.0
    %627 = vmatpush1.msra.mxu0 %v80
    %628 = vmatprep.subr.mxu0 0.0
    %629 = vmatpush1.msra.mxu0 %v81
    %630 = vmatprep.subr.mxu0 0.0
    %631 = vmatpush1.msra.mxu0 %v82
    %632 = vmatprep.subr.mxu0 0.0
    %633 = vmatpush1.msra.mxu0 %v83
    %634 = vmatprep.subr.mxu0 0.0
    %635 = vmatpush1.msra.mxu0 %v84
    %636 = vmatprep.subr.mxu0 0.0
    %637 = vmatpush1.msra.mxu0 %v85
    %638 = vmatprep.subr.mxu0 0.0
    %639 = vmatpush1.msra.mxu0 %v86
    %640 = vmatprep.subr.mxu0 0.0
    %641 = vmatpush1.msra.mxu0 %v87
    %642 = vmatprep.subr.mxu0 0.0
    %643 = vmatpush1.msra.mxu0 %v88
    %644 = vmatprep.subr.mxu0 0.0
    %645 = vmatpush1.msra.mxu0 %v89
    %646 = vmatprep.subr.mxu0 0.0
    %647 = vmatpush1.msra.mxu0 %v90
    %648 = vmatprep.subr.mxu0 0.0
    %649 = vmatpush1.msra.mxu0 %v91
    %650 = vmatprep.subr.mxu0 0.0
    %651 = vmatpush1.msra.mxu0 %v92
    %652 = vmatprep.subr.mxu0 0.0
    %653 = vmatpush1.msra.mxu0 %v93
    %654 = vmatprep.subr.mxu0 0.0
    %655 = vmatpush1.msra.mxu0 0.0
    %656 = vmatprep.subr.mxu0 0.0
    %657 = vmatpush1.msra.mxu0 0.0
    %658 = vmatprep.subr.mxu0 0.0
    %659 = vmatpush1.msra.mxu0 0.0
    %660 = vmatprep.subr.mxu0 0.0
    %661 = vmatpush1.msra.mxu0 0.0
    %662 = vmatprep.subr.mxu0 0.0
    %663 = vmatpush1.msra.mxu0 0.0
    %664 = vmatprep.subr.mxu0 0.0
    %665 = vmatpush1.msra.mxu0 0.0
    %666 = vmatprep.subr.mxu0 0.0
    %667 = vmatpush1.msra.mxu0 0.0
    %668 = vmatprep.subr.mxu0 0.0
    %669 = vmatpush1.msra.mxu0 0.0
    %670 = vmatprep.subr.mxu0 0.0
    %671 = vmatpush1.msra.mxu0 0.0
    %672 = vmatprep.subr.mxu0 0.0
    %673 = vmatpush1.msra.mxu0 0.0
    %674 = vmatprep.subr.mxu0 0.0
    %675 = vmatpush1.msra.mxu0 0.0
    %676 = vmatprep.subr.mxu0 0.0
    %677 = vmatpush1.msra.mxu0 0.0
    %678 = vmatprep.mubr.f32.mxu0 %v305
    %679 = vmatmul.mubr.f32.gmra.mrb[0].mxu0 %v280
    %v680 = vpop.f32.mrb[0].mxu0
    %v681 = vadd.f32 0.0, %v680
    %v682 = vpop.f32.mrb[0].mxu0
    %683 = vmatprep.mubr.f32.mxu0 %v308
    %684 = vmatmul.mubr.f32.gmra.mrb[0].mxu0 %v282
    %v685 = vpop.f32.mrb[0].mxu0
    %v686 = vadd.f32 0.0, %v685
    %v687 = vpop.f32.mrb[0].mxu0
    %688 = vmatprep.mubr.f32.mxu0 %v311
    %689 = vmatmul.mubr.f32.gmra.mrb[0].mxu0 %v284
    %v690 = vpop.f32.mrb[0].mxu0
    %v691 = vadd.f32 0.0, %v690
    %v692 = vpop.f32.mrb[0].mxu0
    %693 = vmatprep.mubr.f32.mxu0 %v314
    %694 = vmatmul.mubr.f32.gmra.mrb[0].mxu0 %v286
    %v695 = vpop.f32.mrb[0].mxu0
    %v696 = vadd.f32 0.0, %v695
    %v697 = vpop.f32.mrb[0].mxu0
    %698 = vmatprep.mubr.f32.mxu0 %v317
    %699 = vmatmul.mubr.f32.gmra.mrb[0].mxu0 %v288
    %v700 = vpop.f32.mrb[0].mxu0
    %v701 = vadd.f32 0.0, %v700
    %v702 = vpop.f32.mrb[0].mxu0
    %703 = vmatprep.mubr.f32.mxu0 %v320
    %704 = vmatmul.mubr.f32.gmra.mrb[0].mxu0 %v290
    %v705 = vpop.f32.mrb[0].mxu0
    %v706 = vadd.f32 0.0, %v705
    %v707 = vpop.f32.mrb[0].mxu0
    %708 = vmatprep.mubr.f32.mxu0 %v323
    %709 = vmatmul.mubr.f32.gmra.mrb[0].mxu0 %v292
    %v710 = vpop.f32.mrb[0].mxu0
    %v711 = vadd.f32 0.0, %v710
    %v712 = vpop.f32.mrb[0].mxu0
    %713 = vmatprep.mubr.f32.mxu0 %v326
    %714 = vmatmul.mubr.f32.gmra.mrb[0].mxu0 %v294
    %v715 = vpop.f32.mrb[0].mxu0
    %v716 = vadd.f32 0.0, %v715
    %v717 = vpop.f32.mrb[0].mxu0
    %718 = vmatprep.mubr.f32.mxu0 %v329
    %719 = vmatmul.mubr.f32.gmra.mrb[0].mxu0 %v296
    %v720 = vpop.f32.mrb[0].mxu0
    %v721 = vadd.f32 0.0, %v720
    %v722 = vpop.f32.mrb[0].mxu0
    %723 = vmatprep.mubr.f32.mxu0 %v332
    %724 = vmatmul.mubr.f32.gmra.mrb[0].mxu0 %v298
    %v725 = vpop.f32.mrb[0].mxu0
    %v726 = vadd.f32 0.0, %v725
    %v727 = vpop.f32.mrb[0].mxu0
    %728 = vmatprep.mubr.f32.mxu0 %v335
    %729 = vmatmul.mubr.f32.gmra.mrb[0].mxu0 %v300
    %v730 = vpop.f32.mrb[0].mxu0
    %v731 = vadd.f32 0.0, %v730
    %v732 = vpop.f32.mrb[0].mxu0
    %733 = vmatprep.mubr.f32.mxu0 %v338
    %734 = vmatmul.mubr.f32.gmra.mrb[0].mxu0 %v302
    %v735 = vpop.f32.mrb[0].mxu0
    %v736 = vadd.f32 0.0, %v735
    %v737 = vpop.f32.mrb[0].mxu0
    %738 = vdwg.mxu0
    %v739 = vmax.f32 %v602, %v681
    %v740 = vmax.f32 %v603, %v686
    %v741 = vmax.f32 %v604, %v691
    %v742 = vmax.f32 %v605, %v696
    %v743 = vmax.f32 %v606, %v701
    %v744 = vmax.f32 %v607, %v706
    %v745 = vmax.f32 %v608, %v711
    %v746 = vmax.f32 %v609, %v716
    %v747 = vmax.f32 %v610, %v721
    %v748 = vmax.f32 %v611, %v726
    %v749 = vmax.f32 %v612, %v731
    %v750 = vmax.f32 %v613, %v736
    %v751 = vld [vmem:[%s3] sm:$0xff]
    %v752 = vld [vmem:[%s3 + $0x8] sm:$0xff]
    %v753 = vld [vmem:[%s3 + $0x10] sm:$0xff]
    %v754 = vld [vmem:[%s3 + $0x18] sm:$0xff]
    %v755 = vld [vmem:[%s3 + $0x20] sm:$0xff]
    %v756 = vld [vmem:[%s3 + $0x28] sm:$0xff]
    %v757 = vld [vmem:[%s3 + $0x30] sm:$0xff]
    %v758 = vld [vmem:[%s3 + $0x38] sm:$0xff]
    %v759 = vld [vmem:[%s3 + $0x40] sm:$0xff]
    %v760 = vld [vmem:[%s3 + $0x48] sm:$0xff]
    %v761 = vld [vmem:[%s3 + $0x50] sm:$0xff]
    %v762 = vld [vmem:[%s3 + $0x58] sm:$0xff]
    %764 = vset.pattern.permute.xlu0 0
    %765 = vperm.xlu0 %764, %v751
    %v766 = vpop.permute.xlu0 %765
    %769 = vset.pattern.permute.xlu0 0
    %770 = vperm.xlu0 %769, %v752
    %v771 = vpop.permute.xlu0 %770
    %774 = vset.pattern.permute.xlu0 0
    %775 = vperm.xlu0 %774, %v753
    %v776 = vpop.permute.xlu0 %775
    %779 = vset.pattern.permute.xlu0 0
    %780 = vperm.xlu0 %779, %v754
    %v781 = vpop.permute.xlu0 %780
    %784 = vset.pattern.permute.xlu0 0
    %785 = vperm.xlu0 %784, %v755
    %v786 = vpop.permute.xlu0 %785
    %789 = vset.pattern.permute.xlu0 0
    %790 = vperm.xlu0 %789, %v756
    %v791 = vpop.permute.xlu0 %790
    %794 = vset.pattern.permute.xlu0 0
    %795 = vperm.xlu0 %794, %v757
    %v796 = vpop.permute.xlu0 %795
    %799 = vset.pattern.permute.xlu0 0
    %800 = vperm.xlu0 %799, %v758
    %v801 = vpop.permute.xlu0 %800
    %804 = vset.pattern.permute.xlu0 0
    %805 = vperm.xlu0 %804, %v759
    %v806 = vpop.permute.xlu0 %805
    %809 = vset.pattern.permute.xlu0 0
    %810 = vperm.xlu0 %809, %v760
    %v811 = vpop.permute.xlu0 %810
    %814 = vset.pattern.permute.xlu0 0
    %815 = vperm.xlu0 %814, %v761
    %v816 = vpop.permute.xlu0 %815
    %819 = vset.pattern.permute.xlu0 0
    %820 = vperm.xlu0 %819, %v762
    %v821 = vpop.permute.xlu0 %820
    %v823 = vadd.f32 %v739, %v766
    %v824 = vadd.f32 %v740, %v771
    %v825 = vadd.f32 %v741, %v776
    %v826 = vadd.f32 %v742, %v781
    %v827 = vadd.f32 %v743, %v786
    %v828 = vadd.f32 %v744, %v791
    %v829 = vadd.f32 %v745, %v796
    %v830 = vadd.f32 %v746, %v801
    %v831 = vadd.f32 %v747, %v806
    %v832 = vadd.f32 %v748, %v811
    %v833 = vadd.f32 %v749, %v816
    %v834 = vadd.f32 %v750, %v821
    %v835 = vmax.f32 %v823, 0.0
    %v836 = vmax.f32 %v824, 0.0
    %v837 = vmax.f32 %v825, 0.0
    %v838 = vmax.f32 %v826, 0.0
    %v839 = vmax.f32 %v827, 0.0
    %v840 = vmax.f32 %v828, 0.0
    %v841 = vmax.f32 %v829, 0.0
    %v842 = vmax.f32 %v830, 0.0
    %v843 = vmax.f32 %v831, 0.0
    %v844 = vmax.f32 %v832, 0.0
    %v845 = vmax.f32 %v833, 0.0
    %v846 = vmax.f32 %v834, 0.0
    %s847 = smul.u32 %s45, 96
    %s848 = scalar_lea.vmem [#allocation2], %s847
    %vm849 = vcmask 15360
    %850 = vst.msk [vmem:[%s848] sm:$0xff] %vm849, %v835
    %851 = vst.msk [vmem:[%s848 + $0x8] sm:$0xff] %vm849, %v836
    %852 = vst.msk [vmem:[%s848 + $0x10] sm:$0xff] %vm849, %v837
    %853 = vst.msk [vmem:[%s848 + $0x18] sm:$0xff] %vm849, %v838
    %854 = vst.msk [vmem:[%s848 + $0x20] sm:$0xff] %vm849, %v839
    %855 = vst.msk [vmem:[%s848 + $0x28] sm:$0xff] %vm849, %v840
    %856 = vst.msk [vmem:[%s848 + $0x30] sm:$0xff] %vm849, %v841
    %857 = vst.msk [vmem:[%s848 + $0x38] sm:$0xff] %vm849, %v842
    %858 = vst.msk [vmem:[%s848 + $0x40] sm:$0xff] %vm849, %v843
    %859 = vst.msk [vmem:[%s848 + $0x48] sm:$0xff] %vm849, %v844
    %860 = vst.msk [vmem:[%s848 + $0x50] sm:$0xff] %vm849, %v845
    %861 = vst.msk [vmem:[%s848 + $0x58] sm:$0xff] %vm849, %v846
  $region58: #{cnn_forward.1} parent=0 // loop_footer
    %s49 = sadd.s32 1, %s45
  $region59: #{cnn_forward.1} parent=0 // loop_footer_branch
    %44 = sbr.rel target = $region55
  $region60: #{cnn_forward.1} parent=0 // loop_exit
    _
  loop: start=0, step=1, limit=5
  $region61: #{cnn_forward.1} parent=0 // loop_pre_header
    _
  $region62: #{cnn_forward.1} parent=0 // loop_header
    %s863 = sphi 0, %s867
    %p864 = scmp.ge.s32.totalorder %s863, 5
  $region63: #{cnn_forward.1} parent=0 // loop_header_branch
    %866 = sbr.rel (%p864) target = $region67
  $region64: #{cnn_forward.1} parent=0 // loop_body
    %s868 = smul.u32 %s863, 192
    %s869 = scalar_lea.vmem [#allocation2], %s868
    %v870 = vld [vmem:[%s869] sm:$0xff]
    %v871 = vld [vmem:[%s869 + $0x8] sm:$0xff]
    %v872 = vld [vmem:[%s869 + $0x10] sm:$0xff]
    %v873 = vld [vmem:[%s869 + $0x18] sm:$0xff]
    %v874 = vld [vmem:[%s869 + $0x20] sm:$0xff]
    %v875 = vld [vmem:[%s869 + $0x28] sm:$0xff]
    %v876 = vld [vmem:[%s869 + $0x30] sm:$0xff]
    %v877 = vld [vmem:[%s869 + $0x38] sm:$0xff]
    %v878 = vld [vmem:[%s869 + $0x40] sm:$0xff]
    %v879 = vld [vmem:[%s869 + $0x48] sm:$0xff]
    %v880 = vld [vmem:[%s869 + $0x50] sm:$0xff]
    %v881 = vld [vmem:[%s869 + $0x58] sm:$0xff]
    %v882 = vld [vmem:[%s869 + $0x60] sm:$0xff]
    %v883 = vld [vmem:[%s869 + $0x68] sm:$0xff]
    %v884 = vld [vmem:[%s869 + $0x70] sm:$0xff]
    %v885 = vld [vmem:[%s869 + $0x78] sm:$0xff]
    %v886 = vld [vmem:[%s869 + $0x80] sm:$0xff]
    %v887 = vld [vmem:[%s869 + $0x88] sm:$0xff]
    %v888 = vld [vmem:[%s869 + $0x90] sm:$0xff]
    %v889 = vld [vmem:[%s869 + $0x98] sm:$0xff]
    %v890 = vld [vmem:[%s869 + $0xa0] sm:$0xff]
    %v891 = vld [vmem:[%s869 + $0xa8] sm:$0xff]
    %v892 = vld [vmem:[%s869 + $0xb0] sm:$0xff]
    %v893 = vld [vmem:[%s869 + $0xb8] sm:$0xff]
    %v894 = vld [vmem:[%s869 + $0xc0] sm:$0xff]
    %v895 = vld [vmem:[%s869 + $0xc8] sm:$0xff]
    %v896 = vld [vmem:[%s869 + $0xd0] sm:$0xff]
    %v897 = vld [vmem:[%s869 + $0xd8] sm:$0xff]
    %v898 = vld [vmem:[%s869 + $0xe0] sm:$0xff]
    %v899 = vld [vmem:[%s869 + $0xe8] sm:$0xff]
    %v900 = vld [vmem:[%s869 + $0xf0] sm:$0xff]
    %v901 = vld [vmem:[%s869 + $0xf8] sm:$0xff]
    %v902 = vld [vmem:[%s869 + $0x100] sm:$0xff]
    %v903 = vld [vmem:[%s869 + $0x108] sm:$0xff]
    %v904 = vld [vmem:[%s869 + $0x110] sm:$0xff]
    %v905 = vld [vmem:[%s869 + $0x118] sm:$0xff]
    %v906 = vld [vmem:[%s869 + $0x120] sm:$0xff]
    %v907 = vld [vmem:[%s869 + $0x128] sm:$0xff]
    %v908 = vld [vmem:[%s869 + $0x130] sm:$0xff]
    %v909 = vld [vmem:[%s869 + $0x138] sm:$0xff]
    %v910 = vld [vmem:[%s869 + $0x140] sm:$0xff]
    %v911 = vld [vmem:[%s869 + $0x148] sm:$0xff]
    %v912 = vld [vmem:[%s869 + $0x150] sm:$0xff]
    %v913 = vld [vmem:[%s869 + $0x158] sm:$0xff]
    %v914 = vld [vmem:[%s869 + $0x160] sm:$0xff]
    %v915 = vld [vmem:[%s869 + $0x168] sm:$0xff]
    %v916 = vld [vmem:[%s869 + $0x170] sm:$0xff]
    %v917 = vld [vmem:[%s869 + $0x178] sm:$0xff]
    %v918 = vld [vmem:[%s869 + $0x180] sm:$0xff]
    %v919 = vld [vmem:[%s869 + $0x188] sm:$0xff]
    %v920 = vld [vmem:[%s869 + $0x190] sm:$0xff]
    %v921 = vld [vmem:[%s869 + $0x198] sm:$0xff]
    %v922 = vld [vmem:[%s869 + $0x1a0] sm:$0xff]
    %v923 = vld [vmem:[%s869 + $0x1a8] sm:$0xff]
    %v924 = vld [vmem:[%s869 + $0x1b0] sm:$0xff]
    %v925 = vld [vmem:[%s869 + $0x1b8] sm:$0xff]
    %v926 = vld [vmem:[%s869 + $0x1c0] sm:$0xff]
    %v927 = vld [vmem:[%s869 + $0x1c8] sm:$0xff]
    %v928 = vld [vmem:[%s869 + $0x1d0] sm:$0xff]
    %v929 = vld [vmem:[%s869 + $0x1d8] sm:$0xff]
    %s930 = sadd.s32 %s868, 96
    %s931 = scalar_lea.vmem [#allocation2], %s930
    %v932 = vld [vmem:[%s931] sm:$0xff]
    %v933 = vld [vmem:[%s931 + $0x8] sm:$0xff]
    %v934 = vld [vmem:[%s931 + $0x10] sm:$0xff]
    %v935 = vld [vmem:[%s931 + $0x18] sm:$0xff]
    %v936 = vld [vmem:[%s931 + $0x20] sm:$0xff]
    %v937 = vld [vmem:[%s931 + $0x28] sm:$0xff]
    %v938 = vld [vmem:[%s931 + $0x30] sm:$0xff]
    %v939 = vld [vmem:[%s931 + $0x38] sm:$0xff]
    %v940 = vld [vmem:[%s931 + $0x40] sm:$0xff]
    %v941 = vld [vmem:[%s931 + $0x48] sm:$0xff]
    %v942 = vld [vmem:[%s931 + $0x50] sm:$0xff]
    %v943 = vld [vmem:[%s931 + $0x58] sm:$0xff]
    %v944 = vld [vmem:[%s931 + $0x60] sm:$0xff]
    %v945 = vld [vmem:[%s931 + $0x68] sm:$0xff]
    %v946 = vld [vmem:[%s931 + $0x70] sm:$0xff]
    %v947 = vld [vmem:[%s931 + $0x78] sm:$0xff]
    %v948 = vld [vmem:[%s931 + $0x80] sm:$0xff]
    %v949 = vld [vmem:[%s931 + $0x88] sm:$0xff]
    %v950 = vld [vmem:[%s931 + $0x90] sm:$0xff]
    %v951 = vld [vmem:[%s931 + $0x98] sm:$0xff]
    %v952 = vld [vmem:[%s931 + $0xa0] sm:$0xff]
    %v953 = vld [vmem:[%s931 + $0xa8] sm:$0xff]
    %v954 = vld [vmem:[%s931 + $0xb0] sm:$0xff]
    %v955 = vld [vmem:[%s931 + $0xb8] sm:$0xff]
    %v956 = vld [vmem:[%s931 + $0xc0] sm:$0xff]
    %v957 = vld [vmem:[%s931 + $0xc8] sm:$0xff]
    %v958 = vld [vmem:[%s931 + $0xd0] sm:$0xff]
    %v959 = vld [vmem:[%s931 + $0xd8] sm:$0xff]
    %v960 = vld [vmem:[%s931 + $0xe0] sm:$0xff]
    %v961 = vld [vmem:[%s931 + $0xe8] sm:$0xff]
    %v962 = vld [vmem:[%s931 + $0xf0] sm:$0xff]
    %v963 = vld [vmem:[%s931 + $0xf8] sm:$0xff]
    %v964 = vld [vmem:[%s931 + $0x100] sm:$0xff]
    %v965 = vld [vmem:[%s931 + $0x108] sm:$0xff]
    %v966 = vld [vmem:[%s931 + $0x110] sm:$0xff]
    %v967 = vld [vmem:[%s931 + $0x118] sm:$0xff]
    %v968 = vld [vmem:[%s931 + $0x120] sm:$0xff]
    %v969 = vld [vmem:[%s931 + $0x128] sm:$0xff]
    %v970 = vld [vmem:[%s931 + $0x130] sm:$0xff]
    %v971 = vld [vmem:[%s931 + $0x138] sm:$0xff]
    %v972 = vld [vmem:[%s931 + $0x140] sm:$0xff]
    %v973 = vld [vmem:[%s931 + $0x148] sm:$0xff]
    %v974 = vld [vmem:[%s931 + $0x150] sm:$0xff]
    %v975 = vld [vmem:[%s931 + $0x158] sm:$0xff]
    %v976 = vld [vmem:[%s931 + $0x160] sm:$0xff]
    %v977 = vld [vmem:[%s931 + $0x168] sm:$0xff]
    %v978 = vld [vmem:[%s931 + $0x170] sm:$0xff]
    %v979 = vld [vmem:[%s931 + $0x178] sm:$0xff]
    %v980 = vld [vmem:[%s931 + $0x180] sm:$0xff]
    %v981 = vld [vmem:[%s931 + $0x188] sm:$0xff]
    %v982 = vld [vmem:[%s931 + $0x190] sm:$0xff]
    %v983 = vld [vmem:[%s931 + $0x198] sm:$0xff]
    %v984 = vld [vmem:[%s931 + $0x1a0] sm:$0xff]
    %v985 = vld [vmem:[%s931 + $0x1a8] sm:$0xff]
    %v986 = vld [vmem:[%s931 + $0x1b0] sm:$0xff]
    %v987 = vld [vmem:[%s931 + $0x1b8] sm:$0xff]
    %v988 = vld [vmem:[%s931 + $0x1c0] sm:$0xff]
    %v989 = vld [vmem:[%s931 + $0x1c8] sm:$0xff]
    %v990 = vld [vmem:[%s931 + $0x1d0] sm:$0xff]
    %v991 = vld [vmem:[%s931 + $0x1d8] sm:$0xff]
    %v992 = vld [vmem:[%s4] sm:$0xff]
    %v993 = vld [vmem:[%s4 + $0x8] sm:$0xff]
    %v994 = vld [vmem:[%s4 + $0x10] sm:$0xff]
    %v995 = vld [vmem:[%s4 + $0x18] sm:$0xff]
    %v996 = vld [vmem:[%s4 + $0x20] sm:$0xff]
    %v997 = vld [vmem:[%s4 + $0x28] sm:$0xff]
    %v998 = vld [vmem:[%s4 + $0x30] sm:$0xff]
    %v999 = vld [vmem:[%s4 + $0x38] sm:$0xff]
    %v1000 = vld [vmem:[%s4 + $0x40] sm:$0xff]
    %v1001 = vld [vmem:[%s4 + $0x48] sm:$0xff]
    %v1002 = vld [vmem:[%s4 + $0x50] sm:$0xff]
    %v1003 = vld [vmem:[%s4 + $0x58] sm:$0xff]
    %v1004 = vld [vmem:[%s4 + $0x60] sm:$0xff]
    %v1005 = vld [vmem:[%s4 + $0x68] sm:$0xff]
    %v1006 = vld [vmem:[%s4 + $0x70] sm:$0xff]
    %v1007 = vld [vmem:[%s4 + $0x78] sm:$0xff]
    %v1008 = vld [vmem:[%s4 + $0x80] sm:$0xff]
    %v1009 = vld [vmem:[%s4 + $0x88] sm:$0xff]
    %v1010 = vld [vmem:[%s4 + $0x90] sm:$0xff]
    %v1011 = vld [vmem:[%s4 + $0x98] sm:$0xff]
    %v1012 = vld [vmem:[%s4 + $0xa0] sm:$0xff]
    %v1013 = vld [vmem:[%s4 + $0xa8] sm:$0xff]
    %v1014 = vld [vmem:[%s4 + $0xb0] sm:$0xff]
    %v1015 = vld [vmem:[%s4 + $0xb8] sm:$0xff]
    %v1016 = vld [vmem:[%s4 + $0xc0] sm:$0xff]
    %v1017 = vld [vmem:[%s4 + $0xc8] sm:$0xff]
    %v1018 = vld [vmem:[%s4 + $0xd0] sm:$0xff]
    %v1019 = vld [vmem:[%s4 + $0xd8] sm:$0xff]
    %v1020 = vld [vmem:[%s4 + $0xe0] sm:$0xff]
    %v1021 = vld [vmem:[%s4 + $0xe8] sm:$0xff]
    %v1022 = vld [vmem:[%s4 + $0xf0] sm:$0xff]
    %v1023 = vld [vmem:[%s4 + $0xf8] sm:$0xff]
    %v1024 = vld [vmem:[%s4 + $0x100] sm:$0xff]
    %v1025 = vld [vmem:[%s4 + $0x108] sm:$0xff]
    %v1026 = vld [vmem:[%s4 + $0x110] sm:$0xff]
    %v1027 = vld [vmem:[%s4 + $0x118] sm:$0xff]
    %v1028 = vld [vmem:[%s4 + $0x120] sm:$0xff]
    %v1029 = vld [vmem:[%s4 + $0x128] sm:$0xff]
    %v1030 = vld [vmem:[%s4 + $0x130] sm:$0xff]
    %v1031 = vld [vmem:[%s4 + $0x138] sm:$0xff]
    %v1032 = vld [vmem:[%s4 + $0x140] sm:$0xff]
    %v1033 = vld [vmem:[%s4 + $0x148] sm:$0xff]
    %v1034 = vld [vmem:[%s4 + $0x150] sm:$0xff]
    %v1035 = vld [vmem:[%s4 + $0x158] sm:$0xff]
    %v1036 = vld [vmem:[%s4 + $0x160] sm:$0xff]
    %v1037 = vld [vmem:[%s4 + $0x168] sm:$0xff]
    %v1038 = vld [vmem:[%s4 + $0x170] sm:$0xff]
    %v1039 = vld [vmem:[%s4 + $0x178] sm:$0xff]
    %v1040 = vld [vmem:[%s4 + $0x180] sm:$0xff]
    %v1041 = vld [vmem:[%s4 + $0x188] sm:$0xff]
    %v1042 = vld [vmem:[%s4 + $0x190] sm:$0xff]
    %v1043 = vld [vmem:[%s4 + $0x198] sm:$0xff]
    %v1044 = vld [vmem:[%s4 + $0x1a0] sm:$0xff]
    %v1045 = vld [vmem:[%s4 + $0x1a8] sm:$0xff]
    %v1046 = vld [vmem:[%s4 + $0x1b0] sm:$0xff]
    %v1047 = vld [vmem:[%s4 + $0x1b8] sm:$0xff]
    %v1048 = vld [vmem:[%s4 + $0x1c0] sm:$0xff]
    %v1049 = vld [vmem:[%s4 + $0x1c8] sm:$0xff]
    %v1050 = vld [vmem:[%s4 + $0x1d0] sm:$0xff]
    %v1051 = vld [vmem:[%s4 + $0x1d8] sm:$0xff]
    %v1052 = vld [vmem:[%s4 + $0x1e0] sm:$0xff]
    %v1053 = vld [vmem:[%s4 + $0x1e8] sm:$0xff]
    %v1054 = vld [vmem:[%s4 + $0x1f0] sm:$0xff]
    %v1055 = vld [vmem:[%s4 + $0x1f8] sm:$0xff]
    %vm1056 = vcmask 785408
    %v1058 = vsel %vm1056, %v995, 0
    %v1061 = vsel %vm1056, %v999, 0
    %v1064 = vsel %vm1056, %v1003, 0
    %v1067 = vsel %vm1056, %v1007, 0
    %v1070 = vsel %vm1056, %v1011, 0
    %v1073 = vsel %vm1056, %v1015, 0
    %v1076 = vsel %vm1056, %v1019, 0
    %v1079 = vsel %vm1056, %v1023, 0
    %v1082 = vsel %vm1056, %v1027, 0
    %v1085 = vsel %vm1056, %v1031, 0
    %v1088 = vsel %vm1056, %v1035, 0
    %v1091 = vsel %vm1056, %v1039, 0
    %v1094 = vsel %vm1056, %v1043, 0
    %v1097 = vsel %vm1056, %v1047, 0
    %v1100 = vsel %vm1056, %v1051, 0
    %v1103 = vsel %vm1056, %v1055, 0
    %1105 = vmatprep.subr.mxu0 0.0
    %1106 = vmatpush1.msra.mxu0 %v870
    %1107 = vmatprep.subr.mxu0 0.0
    %1108 = vmatpush1.msra.mxu0 %v871
    %1109 = vmatprep.subr.mxu0 0.0
    %1110 = vmatpush1.msra.mxu0 %v872
    %1111 = vmatprep.subr.mxu0 0.0
    %1112 = vmatpush1.msra.mxu0 %v873
    %1113 = vmatprep.subr.mxu0 0.0
    %1114 = vmatpush1.msra.mxu0 %v874
    %1115 = vmatprep.subr.mxu0 0.0
    %1116 = vmatpush1.msra.mxu0 %v875
    %1117 = vmatprep.subr.mxu0 0.0
    %1118 = vmatpush1.msra.mxu0 %v876
    %1119 = vmatprep.subr.mxu0 0.0
    %1120 = vmatpush1.msra.mxu0 %v877
    %1121 = vmatprep.subr.mxu0 0.0
    %1122 = vmatpush1.msra.mxu0 %v878
    %1123 = vmatprep.subr.mxu0 0.0
    %1124 = vmatpush1.msra.mxu0 %v879
    %1125 = vmatprep.subr.mxu0 0.0
    %1126 = vmatpush1.msra.mxu0 %v880
    %1127 = vmatprep.subr.mxu0 0.0
    %1128 = vmatpush1.msra.mxu0 %v881
    %1129 = vmatprep.subr.mxu0 0.0
    %1130 = vmatpush1.msra.mxu0 %v882
    %1131 = vmatprep.subr.mxu0 0.0
    %1132 = vmatpush1.msra.mxu0 %v883
    %1133 = vmatprep.subr.mxu0 0.0
    %1134 = vmatpush1.msra.mxu0 %v884
    %1135 = vmatprep.subr.mxu0 0.0
    %1136 = vmatpush1.msra.mxu0 %v885
    %1137 = vmatprep.subr.mxu0 0.0
    %1138 = vmatpush1.msra.mxu0 %v886
    %1139 = vmatprep.subr.mxu0 0.0
    %1140 = vmatpush1.msra.mxu0 %v887
    %1141 = vmatprep.subr.mxu0 0.0
    %1142 = vmatpush1.msra.mxu0 %v888
    %1143 = vmatprep.subr.mxu0 0.0
    %1144 = vmatpush1.msra.mxu0 %v889
    %1145 = vmatprep.subr.mxu0 0.0
    %1146 = vmatpush1.msra.mxu0 %v890
    %1147 = vmatprep.subr.mxu0 0.0
    %1148 = vmatpush1.msra.mxu0 %v891
    %1149 = vmatprep.subr.mxu0 0.0
    %1150 = vmatpush1.msra.mxu0 %v892
    %1151 = vmatprep.subr.mxu0 0.0
    %1152 = vmatpush1.msra.mxu0 %v893
    %1153 = vmatprep.subr.mxu0 0.0
    %1154 = vmatpush1.msra.mxu0 %v894
    %1155 = vmatprep.subr.mxu0 0.0
    %1156 = vmatpush1.msra.mxu0 %v895
    %1157 = vmatprep.subr.mxu0 0.0
    %1158 = vmatpush1.msra.mxu0 %v896
    %1159 = vmatprep.subr.mxu0 0.0
    %1160 = vmatpush1.msra.mxu0 %v897
    %1161 = vmatprep.subr.mxu0 0.0
    %1162 = vmatpush1.msra.mxu0 %v898
    %1163 = vmatprep.subr.mxu0 0.0
    %1164 = vmatpush1.msra.mxu0 %v899
    %1165 = vmatprep.subr.mxu0 0.0
    %1166 = vmatpush1.msra.mxu0 %v900
    %1167 = vmatprep.subr.mxu0 0.0
    %1168 = vmatpush1.msra.mxu0 %v901
    %1169 = vmatprep.mubr.f32.mxu0 %v993
    %1170 = vmatmul.mubr.f32.gmra.mrb[0].mxu0 %v992
    %v1171 = vpop.f32.mrb[0].mxu0
    %v1172 = vadd.f32 0.0, %v1171
    %v1173 = vpop.f32.mrb[0].mxu0
    %1174 = vmatprep.mubr.f32.mxu0 %v997
    %1175 = vmatmul.mubr.f32.gmra.mrb[0].mxu0 %v996
    %v1176 = vpop.f32.mrb[0].mxu0
    %v1177 = vadd.f32 0.0, %v1176
    %v1178 = vpop.f32.mrb[0].mxu0
    %1179 = vmatprep.mubr.f32.mxu0 %v1001
    %1180 = vmatmul.mubr.f32.gmra.mrb[0].mxu0 %v1000
    %v1181 = vpop.f32.mrb[0].mxu0
    %v1182 = vadd.f32 0.0, %v1181
    %v1183 = vpop.f32.mrb[0].mxu0
    %1184 = vmatprep.mubr.f32.mxu0 %v1005
    %1185 = vmatmul.mubr.f32.gmra.mrb[0].mxu0 %v1004
    %v1186 = vpop.f32.mrb[0].mxu0
    %v1187 = vadd.f32 0.0, %v1186
    %v1188 = vpop.f32.mrb[0].mxu0
    %1189 = vmatprep.mubr.f32.mxu0 %v1009
    %1190 = vmatmul.mubr.f32.gmra.mrb[0].mxu0 %v1008
    %v1191 = vpop.f32.mrb[0].mxu0
    %v1192 = vadd.f32 0.0, %v1191
    %v1193 = vpop.f32.mrb[0].mxu0
    %1194 = vmatprep.mubr.f32.mxu0 %v1013
    %1195 = vmatmul.mubr.f32.gmra.mrb[0].mxu0 %v1012
    %v1196 = vpop.f32.mrb[0].mxu0
    %v1197 = vadd.f32 0.0, %v1196
    %v1198 = vpop.f32.mrb[0].mxu0
    %1199 = vmatprep.mubr.f32.mxu0 %v1017
    %1200 = vmatmul.mubr.f32.gmra.mrb[0].mxu0 %v1016
    %v1201 = vpop.f32.mrb[0].mxu0
    %v1202 = vadd.f32 0.0, %v1201
    %v1203 = vpop.f32.mrb[0].mxu0
    %1204 = vmatprep.mubr.f32.mxu0 %v1021
    %1205 = vmatmul.mubr.f32.gmra.mrb[0].mxu0 %v1020
    %v1206 = vpop.f32.mrb[0].mxu0
    %v1207 = vadd.f32 0.0, %v1206
    %v1208 = vpop.f32.mrb[0].mxu0
    %1209 = vmatprep.mubr.f32.mxu0 %v1025
    %1210 = vmatmul.mubr.f32.gmra.mrb[0].mxu0 %v1024
    %v1211 = vpop.f32.mrb[0].mxu0
    %v1212 = vadd.f32 0.0, %v1211
    %v1213 = vpop.f32.mrb[0].mxu0
    %1214 = vmatprep.mubr.f32.mxu0 %v1029
    %1215 = vmatmul.mubr.f32.gmra.mrb[0].mxu0 %v1028
    %v1216 = vpop.f32.mrb[0].mxu0
    %v1217 = vadd.f32 0.0, %v1216
    %v1218 = vpop.f32.mrb[0].mxu0
    %1219 = vmatprep.mubr.f32.mxu0 %v1033
    %1220 = vmatmul.mubr.f32.gmra.mrb[0].mxu0 %v1032
    %v1221 = vpop.f32.mrb[0].mxu0
    %v1222 = vadd.f32 0.0, %v1221
    %v1223 = vpop.f32.mrb[0].mxu0
    %1224 = vmatprep.mubr.f32.mxu0 %v1037
    %1225 = vmatmul.mubr.f32.gmra.mrb[0].mxu0 %v1036
    %v1226 = vpop.f32.mrb[0].mxu0
    %v1227 = vadd.f32 0.0, %v1226
    %v1228 = vpop.f32.mrb[0].mxu0
    %1229 = vmatprep.mubr.f32.mxu0 %v1041
    %1230 = vmatmul.mubr.f32.gmra.mrb[0].mxu0 %v1040
    %v1231 = vpop.f32.mrb[0].mxu0
    %v1232 = vadd.f32 0.0, %v1231
    %v1233 = vpop.f32.mrb[0].mxu0
    %1234 = vmatprep.mubr.f32.mxu0 %v1045
    %1235 = vmatmul.mubr.f32.gmra.mrb[0].mxu0 %v1044
    %v1236 = vpop.f32.mrb[0].mxu0
    %v1237 = vadd.f32 0.0, %v1236
    %v1238 = vpop.f32.mrb[0].mxu0
    %1239 = vmatprep.mubr.f32.mxu0 %v1049
    %1240 = vmatmul.mubr.f32.gmra.mrb[0].mxu0 %v1048
    %v1241 = vpop.f32.mrb[0].mxu0
    %v1242 = vadd.f32 0.0, %v1241
    %v1243 = vpop.f32.mrb[0].mxu0
    %1244 = vmatprep.mubr.f32.mxu0 %v1053
    %1245 = vmatmul.mubr.f32.gmra.mrb[0].mxu0 %v1052
    %v1246 = vpop.f32.mrb[0].mxu0
    %v1247 = vadd.f32 0.0, %v1246
    %v1248 = vpop.f32.mrb[0].mxu0
    %1249 = vdwg.mxu0
    %1250 = vmatprep.subr.mxu0 0.0
    %1251 = vmatpush1.msra.mxu0 %v902
    %1252 = vmatprep.subr.mxu0 0.0
    %1253 = vmatpush1.msra.mxu0 %v903
    %1254 = vmatprep.subr.mxu0 0.0
    %1255 = vmatpush1.msra.mxu0 %v904
    %1256 = vmatprep.subr.mxu0 0.0
    %1257 = vmatpush1.msra.mxu0 %v905
    %1258 = vmatprep.subr.mxu0 0.0
    %1259 = vmatpush1.msra.mxu0 %v906
    %1260 = vmatprep.subr.mxu0 0.0
    %1261 = vmatpush1.msra.mxu0 %v907
    %1262 = vmatprep.subr.mxu0 0.0
    %1263 = vmatpush1.msra.mxu0 %v908
    %1264 = vmatprep.subr.mxu0 0.0
    %1265 = vmatpush1.msra.mxu0 %v909
    %1266 = vmatprep.subr.mxu0 0.0
    %1267 = vmatpush1.msra.mxu0 %v910
    %1268 = vmatprep.subr.mxu0 0.0
    %1269 = vmatpush1.msra.mxu0 %v911
    %1270 = vmatprep.subr.mxu0 0.0
    %1271 = vmatpush1.msra.mxu0 %v912
    %1272 = vmatprep.subr.mxu0 0.0
    %1273 = vmatpush1.msra.mxu0 %v913
    %1274 = vmatprep.subr.mxu0 0.0
    %1275 = vmatpush1.msra.mxu0 %v914
    %1276 = vmatprep.subr.mxu0 0.0
    %1277 = vmatpush1.msra.mxu0 %v915
    %1278 = vmatprep.subr.mxu0 0.0
    %1279 = vmatpush1.msra.mxu0 %v916
    %1280 = vmatprep.subr.mxu0 0.0
    %1281 = vmatpush1.msra.mxu0 %v917
    %1282 = vmatprep.subr.mxu0 0.0
    %1283 = vmatpush1.msra.mxu0 %v918
    %1284 = vmatprep.subr.mxu0 0.0
    %1285 = vmatpush1.msra.mxu0 %v919
    %1286 = vmatprep.subr.mxu0 0.0
    %1287 = vmatpush1.msra.mxu0 %v920
    %1288 = vmatprep.subr.mxu0 0.0
    %1289 = vmatpush1.msra.mxu0 %v921
    %1290 = vmatprep.subr.mxu0 0.0
    %1291 = vmatpush1.msra.mxu0 %v922
    %1292 = vmatprep.subr.mxu0 0.0
    %1293 = vmatpush1.msra.mxu0 %v923
    %1294 = vmatprep.subr.mxu0 0.0
    %1295 = vmatpush1.msra.mxu0 %v924
    %1296 = vmatprep.subr.mxu0 0.0
    %1297 = vmatpush1.msra.mxu0 %v925
    %1298 = vmatprep.subr.mxu0 0.0
    %1299 = vmatpush1.msra.mxu0 %v926
    %1300 = vmatprep.subr.mxu0 0.0
    %1301 = vmatpush1.msra.mxu0 %v927
    %1302 = vmatprep.subr.mxu0 0.0
    %1303 = vmatpush1.msra.mxu0 %v928
    %1304 = vmatprep.subr.mxu0 0.0
    %1305 = vmatpush1.msra.mxu0 %v929
    %1306 = vmatprep.subr.mxu0 0.0
    %1307 = vmatpush1.msra.mxu0 0.0
    %1308 = vmatprep.subr.mxu0 0.0
    %1309 = vmatpush1.msra.mxu0 0.0
    %1310 = vmatprep.subr.mxu0 0.0
    %1311 = vmatpush1.msra.mxu0 0.0
    %1312 = vmatprep.subr.mxu0 0.0
    %1313 = vmatpush1.msra.mxu0 0.0
    %1314 = vmatprep.mubr.f32.mxu0 %v1058
    %1315 = vmatmul.mubr.f32.gmra.mrb[0].mxu0 %v994
    %v1316 = vpop.f32.mrb[0].mxu0
    %v1317 = vadd.f32 %v1172, %v1316
    %v1318 = vpop.f32.mrb[0].mxu0
    %1319 = vmatprep.mubr.f32.mxu0 %v1061
    %1320 = vmatmul.mubr.f32.gmra.mrb[0].mxu0 %v998
    %v1321 = vpop.f32.mrb[0].mxu0
    %v1322 = vadd.f32 %v1177, %v1321
    %v1323 = vpop.f32.mrb[0].mxu0
    %1324 = vmatprep.mubr.f32.mxu0 %v1064
    %1325 = vmatmul.mubr.f32.gmra.mrb[0].mxu0 %v1002
    %v1326 = vpop.f32.mrb[0].mxu0
    %v1327 = vadd.f32 %v1182, %v1326
    %v1328 = vpop.f32.mrb[0].mxu0
    %1329 = vmatprep.mubr.f32.mxu0 %v1067
    %1330 = vmatmul.mubr.f32.gmra.mrb[0].mxu0 %v1006
    %v1331 = vpop.f32.mrb[0].mxu0
    %v1332 = vadd.f32 %v1187, %v1331
    %v1333 = vpop.f32.mrb[0].mxu0
    %1334 = vmatprep.mubr.f32.mxu0 %v1070
    %1335 = vmatmul.mubr.f32.gmra.mrb[0].mxu0 %v1010
    %v1336 = vpop.f32.mrb[0].mxu0
    %v1337 = vadd.f32 %v1192, %v1336
    %v1338 = vpop.f32.mrb[0].mxu0
    %1339 = vmatprep.mubr.f32.mxu0 %v1073
    %1340 = vmatmul.mubr.f32.gmra.mrb[0].mxu0 %v1014
    %v1341 = vpop.f32.mrb[0].mxu0
    %v1342 = vadd.f32 %v1197, %v1341
    %v1343 = vpop.f32.mrb[0].mxu0
    %1344 = vmatprep.mubr.f32.mxu0 %v1076
    %1345 = vmatmul.mubr.f32.gmra.mrb[0].mxu0 %v1018
    %v1346 = vpop.f32.mrb[0].mxu0
    %v1347 = vadd.f32 %v1202, %v1346
    %v1348 = vpop.f32.mrb[0].mxu0
    %1349 = vmatprep.mubr.f32.mxu0 %v1079
    %1350 = vmatmul.mubr.f32.gmra.mrb[0].mxu0 %v1022
    %v1351 = vpop.f32.mrb[0].mxu0
    %v1352 = vadd.f32 %v1207, %v1351
    %v1353 = vpop.f32.mrb[0].mxu0
    %1354 = vmatprep.mubr.f32.mxu0 %v1082
    %1355 = vmatmul.mubr.f32.gmra.mrb[0].mxu0 %v1026
    %v1356 = vpop.f32.mrb[0].mxu0
    %v1357 = vadd.f32 %v1212, %v1356
    %v1358 = vpop.f32.mrb[0].mxu0
    %1359 = vmatprep.mubr.f32.mxu0 %v1085
    %1360 = vmatmul.mubr.f32.gmra.mrb[0].mxu0 %v1030
    %v1361 = vpop.f32.mrb[0].mxu0
    %v1362 = vadd.f32 %v1217, %v1361
    %v1363 = vpop.f32.mrb[0].mxu0
    %1364 = vmatprep.mubr.f32.mxu0 %v1088
    %1365 = vmatmul.mubr.f32.gmra.mrb[0].mxu0 %v1034
    %v1366 = vpop.f32.mrb[0].mxu0
    %v1367 = vadd.f32 %v1222, %v1366
    %v1368 = vpop.f32.mrb[0].mxu0
    %1369 = vmatprep.mubr.f32.mxu0 %v1091
    %1370 = vmatmul.mubr.f32.gmra.mrb[0].mxu0 %v1038
    %v1371 = vpop.f32.mrb[0].mxu0
    %v1372 = vadd.f32 %v1227, %v1371
    %v1373 = vpop.f32.mrb[0].mxu0
    %1374 = vmatprep.mubr.f32.mxu0 %v1094
    %1375 = vmatmul.mubr.f32.gmra.mrb[0].mxu0 %v1042
    %v1376 = vpop.f32.mrb[0].mxu0
    %v1377 = vadd.f32 %v1232, %v1376
    %v1378 = vpop.f32.mrb[0].mxu0
    %1379 = vmatprep.mubr.f32.mxu0 %v1097
    %1380 = vmatmul.mubr.f32.gmra.mrb[0].mxu0 %v1046
    %v1381 = vpop.f32.mrb[0].mxu0
    %v1382 = vadd.f32 %v1237, %v1381
    %v1383 = vpop.f32.mrb[0].mxu0
    %1384 = vmatprep.mubr.f32.mxu0 %v1100
    %1385 = vmatmul.mubr.f32.gmra.mrb[0].mxu0 %v1050
    %v1386 = vpop.f32.mrb[0].mxu0
    %v1387 = vadd.f32 %v1242, %v1386
    %v1388 = vpop.f32.mrb[0].mxu0
    %1389 = vmatprep.mubr.f32.mxu0 %v1103
    %1390 = vmatmul.mubr.f32.gmra.mrb[0].mxu0 %v1054
    %v1391 = vpop.f32.mrb[0].mxu0
    %v1392 = vadd.f32 %v1247, %v1391
    %v1393 = vpop.f32.mrb[0].mxu0
    %1394 = vdwg.mxu0
    %v1395 = vld [vmem:[%s5] sm:$0xff]
    %v1396 = vld [vmem:[%s5 + $0x8] sm:$0xff]
    %v1397 = vld [vmem:[%s5 + $0x10] sm:$0xff]
    %v1398 = vld [vmem:[%s5 + $0x18] sm:$0xff]
    %v1399 = vld [vmem:[%s5 + $0x20] sm:$0xff]
    %v1400 = vld [vmem:[%s5 + $0x28] sm:$0xff]
    %v1401 = vld [vmem:[%s5 + $0x30] sm:$0xff]
    %v1402 = vld [vmem:[%s5 + $0x38] sm:$0xff]
    %v1403 = vld [vmem:[%s5 + $0x40] sm:$0xff]
    %v1404 = vld [vmem:[%s5 + $0x48] sm:$0xff]
    %v1405 = vld [vmem:[%s5 + $0x50] sm:$0xff]
    %v1406 = vld [vmem:[%s5 + $0x58] sm:$0xff]
    %v1407 = vld [vmem:[%s5 + $0x60] sm:$0xff]
    %v1408 = vld [vmem:[%s5 + $0x68] sm:$0xff]
    %v1409 = vld [vmem:[%s5 + $0x70] sm:$0xff]
    %v1410 = vld [vmem:[%s5 + $0x78] sm:$0xff]
    %v1411 = vld [vmem:[%s5 + $0x80] sm:$0xff]
    %v1412 = vld [vmem:[%s5 + $0x88] sm:$0xff]
    %v1413 = vld [vmem:[%s5 + $0x90] sm:$0xff]
    %v1414 = vld [vmem:[%s5 + $0x98] sm:$0xff]
    %v1415 = vld [vmem:[%s5 + $0xa0] sm:$0xff]
    %v1416 = vld [vmem:[%s5 + $0xa8] sm:$0xff]
    %v1417 = vld [vmem:[%s5 + $0xb0] sm:$0xff]
    %v1418 = vld [vmem:[%s5 + $0xb8] sm:$0xff]
    %v1419 = vld [vmem:[%s5 + $0xc0] sm:$0xff]
    %v1420 = vld [vmem:[%s5 + $0xc8] sm:$0xff]
    %v1421 = vld [vmem:[%s5 + $0xd0] sm:$0xff]
    %v1422 = vld [vmem:[%s5 + $0xd8] sm:$0xff]
    %v1423 = vld [vmem:[%s5 + $0xe0] sm:$0xff]
    %v1424 = vld [vmem:[%s5 + $0xe8] sm:$0xff]
    %v1425 = vld [vmem:[%s5 + $0xf0] sm:$0xff]
    %v1426 = vld [vmem:[%s5 + $0xf8] sm:$0xff]
    %v1427 = vld [vmem:[%s5 + $0x100] sm:$0xff]
    %v1428 = vld [vmem:[%s5 + $0x108] sm:$0xff]
    %v1429 = vld [vmem:[%s5 + $0x110] sm:$0xff]
    %v1430 = vld [vmem:[%s5 + $0x118] sm:$0xff]
    %v1431 = vld [vmem:[%s5 + $0x120] sm:$0xff]
    %v1432 = vld [vmem:[%s5 + $0x128] sm:$0xff]
    %v1433 = vld [vmem:[%s5 + $0x130] sm:$0xff]
    %v1434 = vld [vmem:[%s5 + $0x138] sm:$0xff]
    %v1435 = vld [vmem:[%s5 + $0x140] sm:$0xff]
    %v1436 = vld [vmem:[%s5 + $0x148] sm:$0xff]
    %v1437 = vld [vmem:[%s5 + $0x150] sm:$0xff]
    %v1438 = vld [vmem:[%s5 + $0x158] sm:$0xff]
    %v1439 = vld [vmem:[%s5 + $0x160] sm:$0xff]
    %v1440 = vld [vmem:[%s5 + $0x168] sm:$0xff]
    %v1441 = vld [vmem:[%s5 + $0x170] sm:$0xff]
    %v1442 = vld [vmem:[%s5 + $0x178] sm:$0xff]
    %v1443 = vld [vmem:[%s5 + $0x180] sm:$0xff]
    %v1444 = vld [vmem:[%s5 + $0x188] sm:$0xff]
    %v1445 = vld [vmem:[%s5 + $0x190] sm:$0xff]
    %v1446 = vld [vmem:[%s5 + $0x198] sm:$0xff]
    %v1447 = vld [vmem:[%s5 + $0x1a0] sm:$0xff]
    %v1448 = vld [vmem:[%s5 + $0x1a8] sm:$0xff]
    %v1449 = vld [vmem:[%s5 + $0x1b0] sm:$0xff]
    %v1450 = vld [vmem:[%s5 + $0x1b8] sm:$0xff]
    %v1451 = vld [vmem:[%s5 + $0x1c0] sm:$0xff]
    %v1452 = vld [vmem:[%s5 + $0x1c8] sm:$0xff]
    %v1453 = vld [vmem:[%s5 + $0x1d0] sm:$0xff]
    %v1454 = vld [vmem:[%s5 + $0x1d8] sm:$0xff]
    %v1455 = vld [vmem:[%s5 + $0x1e0] sm:$0xff]
    %v1456 = vld [vmem:[%s5 + $0x1e8] sm:$0xff]
    %v1457 = vld [vmem:[%s5 + $0x1f0] sm:$0xff]
    %v1458 = vld [vmem:[%s5 + $0x1f8] sm:$0xff]
    %v1460 = vsel %vm1056, %v1398, 0
    %v1463 = vsel %vm1056, %v1402, 0
    %v1466 = vsel %vm1056, %v1406, 0
    %v1469 = vsel %vm1056, %v1410, 0
    %v1472 = vsel %vm1056, %v1414, 0
    %v1475 = vsel %vm1056, %v1418, 0
    %v1478 = vsel %vm1056, %v1422, 0
    %v1481 = vsel %vm1056, %v1426, 0
    %v1484 = vsel %vm1056, %v1430, 0
    %v1487 = vsel %vm1056, %v1434, 0
    %v1490 = vsel %vm1056, %v1438, 0
    %v1493 = vsel %vm1056, %v1442, 0
    %v1496 = vsel %vm1056, %v1446, 0
    %v1499 = vsel %vm1056, %v1450, 0
    %v1502 = vsel %vm1056, %v1454, 0
    %v1505 = vsel %vm1056, %v1458, 0
    %1507 = vmatprep.subr.mxu0 0.0
    %1508 = vmatpush1.msra.mxu0 %v870
    %1509 = vmatprep.subr.mxu0 0.0
    %1510 = vmatpush1.msra.mxu0 %v871
    %1511 = vmatprep.subr.mxu0 0.0
    %1512 = vmatpush1.msra.mxu0 %v872
    %1513 = vmatprep.subr.mxu0 0.0
    %1514 = vmatpush1.msra.mxu0 %v873
    %1515 = vmatprep.subr.mxu0 0.0
    %1516 = vmatpush1.msra.mxu0 %v874
    %1517 = vmatprep.subr.mxu0 0.0
    %1518 = vmatpush1.msra.mxu0 %v875
    %1519 = vmatprep.subr.mxu0 0.0
    %1520 = vmatpush1.msra.mxu0 %v876
    %1521 = vmatprep.subr.mxu0 0.0
    %1522 = vmatpush1.msra.mxu0 %v877
    %1523 = vmatprep.subr.mxu0 0.0
    %1524 = vmatpush1.msra.mxu0 %v878
    %1525 = vmatprep.subr.mxu0 0.0
    %1526 = vmatpush1.msra.mxu0 %v879
    %1527 = vmatprep.subr.mxu0 0.0
    %1528 = vmatpush1.msra.mxu0 %v880
    %1529 = vmatprep.subr.mxu0 0.0
    %1530 = vmatpush1.msra.mxu0 %v881
    %1531 = vmatprep.subr.mxu0 0.0
    %1532 = vmatpush1.msra.mxu0 %v882
    %1533 = vmatprep.subr.mxu0 0.0
    %1534 = vmatpush1.msra.mxu0 %v883
    %1535 = vmatprep.subr.mxu0 0.0
    %1536 = vmatpush1.msra.mxu0 %v884
    %1537 = vmatprep.subr.mxu0 0.0
    %1538 = vmatpush1.msra.mxu0 %v885
    %1539 = vmatprep.subr.mxu0 0.0
    %1540 = vmatpush1.msra.mxu0 %v886
    %1541 = vmatprep.subr.mxu0 0.0
    %1542 = vmatpush1.msra.mxu0 %v887
    %1543 = vmatprep.subr.mxu0 0.0
    %1544 = vmatpush1.msra.mxu0 %v888
    %1545 = vmatprep.subr.mxu0 0.0
    %1546 = vmatpush1.msra.mxu0 %v889
    %1547 = vmatprep.subr.mxu0 0.0
    %1548 = vmatpush1.msra.mxu0 %v890
    %1549 = vmatprep.subr.mxu0 0.0
    %1550 = vmatpush1.msra.mxu0 %v891
    %1551 = vmatprep.subr.mxu0 0.0
    %1552 = vmatpush1.msra.mxu0 %v892
    %1553 = vmatprep.subr.mxu0 0.0
    %1554 = vmatpush1.msra.mxu0 %v893
    %1555 = vmatprep.subr.mxu0 0.0
    %1556 = vmatpush1.msra.mxu0 %v894
    %1557 = vmatprep.subr.mxu0 0.0
    %1558 = vmatpush1.msra.mxu0 %v895
    %1559 = vmatprep.subr.mxu0 0.0
    %1560 = vmatpush1.msra.mxu0 %v896
    %1561 = vmatprep.subr.mxu0 0.0
    %1562 = vmatpush1.msra.mxu0 %v897
    %1563 = vmatprep.subr.mxu0 0.0
    %1564 = vmatpush1.msra.mxu0 %v898
    %1565 = vmatprep.subr.mxu0 0.0
    %1566 = vmatpush1.msra.mxu0 %v899
    %1567 = vmatprep.subr.mxu0 0.0
    %1568 = vmatpush1.msra.mxu0 %v900
    %1569 = vmatprep.subr.mxu0 0.0
    %1570 = vmatpush1.msra.mxu0 %v901
    %1571 = vmatprep.mubr.f32.mxu0 %v1396
    %1572 = vmatmul.mubr.f32.gmra.mrb[0].mxu0 %v1395
    %v1573 = vpop.f32.mrb[0].mxu0
    %v1574 = vadd.f32 0.0, %v1573
    %v1575 = vpop.f32.mrb[0].mxu0
    %1576 = vmatprep.mubr.f32.mxu0 %v1400
    %1577 = vmatmul.mubr.f32.gmra.mrb[0].mxu0 %v1399
    %v1578 = vpop.f32.mrb[0].mxu0
    %v1579 = vadd.f32 0.0, %v1578
    %v1580 = vpop.f32.mrb[0].mxu0
    %1581 = vmatprep.mubr.f32.mxu0 %v1404
    %1582 = vmatmul.mubr.f32.gmra.mrb[0].mxu0 %v1403
    %v1583 = vpop.f32.mrb[0].mxu0
    %v1584 = vadd.f32 0.0, %v1583
    %v1585 = vpop.f32.mrb[0].mxu0
    %1586 = vmatprep.mubr.f32.mxu0 %v1408
    %1587 = vmatmul.mubr.f32.gmra.mrb[0].mxu0 %v1407
    %v1588 = vpop.f32.mrb[0].mxu0
    %v1589 = vadd.f32 0.0, %v1588
    %v1590 = vpop.f32.mrb[0].mxu0
    %1591 = vmatprep.mubr.f32.mxu0 %v1412
    %1592 = vmatmul.mubr.f32.gmra.mrb[0].mxu0 %v1411
    %v1593 = vpop.f32.mrb[0].mxu0
    %v1594 = vadd.f32 0.0, %v1593
    %v1595 = vpop.f32.mrb[0].mxu0
    %1596 = vmatprep.mubr.f32.mxu0 %v1416
    %1597 = vmatmul.mubr.f32.gmra.mrb[0].mxu0 %v1415
    %v1598 = vpop.f32.mrb[0].mxu0
    %v1599 = vadd.f32 0.0, %v1598
    %v1600 = vpop.f32.mrb[0].mxu0
    %1601 = vmatprep.mubr.f32.mxu0 %v1420
    %1602 = vmatmul.mubr.f32.gmra.mrb[0].mxu0 %v1419
    %v1603 = vpop.f32.mrb[0].mxu0
    %v1604 = vadd.f32 0.0, %v1603
    %v1605 = vpop.f32.mrb[0].mxu0
    %1606 = vmatprep.mubr.f32.mxu0 %v1424
    %1607 = vmatmul.mubr.f32.gmra.mrb[0].mxu0 %v1423
    %v1608 = vpop.f32.mrb[0].mxu0
    %v1609 = vadd.f32 0.0, %v1608
    %v1610 = vpop.f32.mrb[0].mxu0
    %1611 = vmatprep.mubr.f32.mxu0 %v1428
    %1612 = vmatmul.mubr.f32.gmra.mrb[0].mxu0 %v1427
    %v1613 = vpop.f32.mrb[0].mxu0
    %v1614 = vadd.f32 0.0, %v1613
    %v1615 = vpop.f32.mrb[0].mxu0
    %1616 = vmatprep.mubr.f32.mxu0 %v1432
    %1617 = vmatmul.mubr.f32.gmra.mrb[0].mxu0 %v1431
    %v1618 = vpop.f32.mrb[0].mxu0
    %v1619 = vadd.f32 0.0, %v1618
    %v1620 = vpop.f32.mrb[0].mxu0
    %1621 = vmatprep.mubr.f32.mxu0 %v1436
    %1622 = vmatmul.mubr.f32.gmra.mrb[0].mxu0 %v1435
    %v1623 = vpop.f32.mrb[0].mxu0
    %v1624 = vadd.f32 0.0, %v1623
    %v1625 = vpop.f32.mrb[0].mxu0
    %1626 = vmatprep.mubr.f32.mxu0 %v1440
    %1627 = vmatmul.mubr.f32.gmra.mrb[0].mxu0 %v1439
    %v1628 = vpop.f32.mrb[0].mxu0
    %v1629 = vadd.f32 0.0, %v1628
    %v1630 = vpop.f32.mrb[0].mxu0
    %1631 = vmatprep.mubr.f32.mxu0 %v1444
    %1632 = vmatmul.mubr.f32.gmra.mrb[0].mxu0 %v1443
    %v1633 = vpop.f32.mrb[0].mxu0
    %v1634 = vadd.f32 0.0, %v1633
    %v1635 = vpop.f32.mrb[0].mxu0
    %1636 = vmatprep.mubr.f32.mxu0 %v1448
    %1637 = vmatmul.mubr.f32.gmra.mrb[0].mxu0 %v1447
    %v1638 = vpop.f32.mrb[0].mxu0
    %v1639 = vadd.f32 0.0, %v1638
    %v1640 = vpop.f32.mrb[0].mxu0
    %1641 = vmatprep.mubr.f32.mxu0 %v1452
    %1642 = vmatmul.mubr.f32.gmra.mrb[0].mxu0 %v1451
    %v1643 = vpop.f32.mrb[0].mxu0
    %v1644 = vadd.f32 0.0, %v1643
    %v1645 = vpop.f32.mrb[0].mxu0
    %1646 = vmatprep.mubr.f32.mxu0 %v1456
    %1647 = vmatmul.mubr.f32.gmra.mrb[0].mxu0 %v1455
    %v1648 = vpop.f32.mrb[0].mxu0
    %v1649 = vadd.f32 0.0, %v1648
    %v1650 = vpop.f32.mrb[0].mxu0
    %1651 = vdwg.mxu0
    %1652 = vmatprep.subr.mxu0 0.0
    %1653 = vmatpush1.msra.mxu0 %v902
    %1654 = vmatprep.subr.mxu0 0.0
    %1655 = vmatpush1.msra.mxu0 %v903
    %1656 = vmatprep.subr.mxu0 0.0
    %1657 = vmatpush1.msra.mxu0 %v904
    %1658 = vmatprep.subr.mxu0 0.0
    %1659 = vmatpush1.msra.mxu0 %v905
    %1660 = vmatprep.subr.mxu0 0.0
    %1661 = vmatpush1.msra.mxu0 %v906
    %1662 = vmatprep.subr.mxu0 0.0
    %1663 = vmatpush1.msra.mxu0 %v907
    %1664 = vmatprep.subr.mxu0 0.0
    %1665 = vmatpush1.msra.mxu0 %v908
    %1666 = vmatprep.subr.mxu0 0.0
    %1667 = vmatpush1.msra.mxu0 %v909
    %1668 = vmatprep.subr.mxu0 0.0
    %1669 = vmatpush1.msra.mxu0 %v910
    %1670 = vmatprep.subr.mxu0 0.0
    %1671 = vmatpush1.msra.mxu0 %v911
    %1672 = vmatprep.subr.mxu0 0.0
    %1673 = vmatpush1.msra.mxu0 %v912
    %1674 = vmatprep.subr.mxu0 0.0
    %1675 = vmatpush1.msra.mxu0 %v913
    %1676 = vmatprep.subr.mxu0 0.0
    %1677 = vmatpush1.msra.mxu0 %v914
    %1678 = vmatprep.subr.mxu0 0.0
    %1679 = vmatpush1.msra.mxu0 %v915
    %1680 = vmatprep.subr.mxu0 0.0
    %1681 = vmatpush1.msra.mxu0 %v916
    %1682 = vmatprep.subr.mxu0 0.0
    %1683 = vmatpush1.msra.mxu0 %v917
    %1684 = vmatprep.subr.mxu0 0.0
    %1685 = vmatpush1.msra.mxu0 %v918
    %1686 = vmatprep.subr.mxu0 0.0
    %1687 = vmatpush1.msra.mxu0 %v919
    %1688 = vmatprep.subr.mxu0 0.0
    %1689 = vmatpush1.msra.mxu0 %v920
    %1690 = vmatprep.subr.mxu0 0.0
    %1691 = vmatpush1.msra.mxu0 %v921
    %1692 = vmatprep.subr.mxu0 0.0
    %1693 = vmatpush1.msra.mxu0 %v922
    %1694 = vmatprep.subr.mxu0 0.0
    %1695 = vmatpush1.msra.mxu0 %v923
    %1696 = vmatprep.subr.mxu0 0.0
    %1697 = vmatpush1.msra.mxu0 %v924
    %1698 = vmatprep.subr.mxu0 0.0
    %1699 = vmatpush1.msra.mxu0 %v925
    %1700 = vmatprep.subr.mxu0 0.0
    %1701 = vmatpush1.msra.mxu0 %v926
    %1702 = vmatprep.subr.mxu0 0.0
    %1703 = vmatpush1.msra.mxu0 %v927
    %1704 = vmatprep.subr.mxu0 0.0
    %1705 = vmatpush1.msra.mxu0 %v928
    %1706 = vmatprep.subr.mxu0 0.0
    %1707 = vmatpush1.msra.mxu0 %v929
    %1708 = vmatprep.subr.mxu0 0.0
    %1709 = vmatpush1.msra.mxu0 0.0
    %1710 = vmatprep.subr.mxu0 0.0
    %1711 = vmatpush1.msra.mxu0 0.0
    %1712 = vmatprep.subr.mxu0 0.0
    %1713 = vmatpush1.msra.mxu0 0.0
    %1714 = vmatprep.subr.mxu0 0.0
    %1715 = vmatpush1.msra.mxu0 0.0
    %1716 = vmatprep.mubr.f32.mxu0 %v1460
    %1717 = vmatmul.mubr.f32.gmra.mrb[0].mxu0 %v1397
    %v1718 = vpop.f32.mrb[0].mxu0
    %v1719 = vadd.f32 %v1574, %v1718
    %v1720 = vpop.f32.mrb[0].mxu0
    %1721 = vmatprep.mubr.f32.mxu0 %v1463
    %1722 = vmatmul.mubr.f32.gmra.mrb[0].mxu0 %v1401
    %v1723 = vpop.f32.mrb[0].mxu0
    %v1724 = vadd.f32 %v1579, %v1723
    %v1725 = vpop.f32.mrb[0].mxu0
    %1726 = vmatprep.mubr.f32.mxu0 %v1466
    %1727 = vmatmul.mubr.f32.gmra.mrb[0].mxu0 %v1405
    %v1728 = vpop.f32.mrb[0].mxu0
    %v1729 = vadd.f32 %v1584, %v1728
    %v1730 = vpop.f32.mrb[0].mxu0
    %1731 = vmatprep.mubr.f32.mxu0 %v1469
    %1732 = vmatmul.mubr.f32.gmra.mrb[0].mxu0 %v1409
    %v1733 = vpop.f32.mrb[0].mxu0
    %v1734 = vadd.f32 %v1589, %v1733
    %v1735 = vpop.f32.mrb[0].mxu0
    %1736 = vmatprep.mubr.f32.mxu0 %v1472
    %1737 = vmatmul.mubr.f32.gmra.mrb[0].mxu0 %v1413
    %v1738 = vpop.f32.mrb[0].mxu0
    %v1739 = vadd.f32 %v1594, %v1738
    %v1740 = vpop.f32.mrb[0].mxu0
    %1741 = vmatprep.mubr.f32.mxu0 %v1475
    %1742 = vmatmul.mubr.f32.gmra.mrb[0].mxu0 %v1417
    %v1743 = vpop.f32.mrb[0].mxu0
    %v1744 = vadd.f32 %v1599, %v1743
    %v1745 = vpop.f32.mrb[0].mxu0
    %1746 = vmatprep.mubr.f32.mxu0 %v1478
    %1747 = vmatmul.mubr.f32.gmra.mrb[0].mxu0 %v1421
    %v1748 = vpop.f32.mrb[0].mxu0
    %v1749 = vadd.f32 %v1604, %v1748
    %v1750 = vpop.f32.mrb[0].mxu0
    %1751 = vmatprep.mubr.f32.mxu0 %v1481
    %1752 = vmatmul.mubr.f32.gmra.mrb[0].mxu0 %v1425
    %v1753 = vpop.f32.mrb[0].mxu0
    %v1754 = vadd.f32 %v1609, %v1753
    %v1755 = vpop.f32.mrb[0].mxu0
    %1756 = vmatprep.mubr.f32.mxu0 %v1484
    %1757 = vmatmul.mubr.f32.gmra.mrb[0].mxu0 %v1429
    %v1758 = vpop.f32.mrb[0].mxu0
    %v1759 = vadd.f32 %v1614, %v1758
    %v1760 = vpop.f32.mrb[0].mxu0
    %1761 = vmatprep.mubr.f32.mxu0 %v1487
    %1762 = vmatmul.mubr.f32.gmra.mrb[0].mxu0 %v1433
    %v1763 = vpop.f32.mrb[0].mxu0
    %v1764 = vadd.f32 %v1619, %v1763
    %v1765 = vpop.f32.mrb[0].mxu0
    %1766 = vmatprep.mubr.f32.mxu0 %v1490
    %1767 = vmatmul.mubr.f32.gmra.mrb[0].mxu0 %v1437
    %v1768 = vpop.f32.mrb[0].mxu0
    %v1769 = vadd.f32 %v1624, %v1768
    %v1770 = vpop.f32.mrb[0].mxu0
    %1771 = vmatprep.mubr.f32.mxu0 %v1493
    %1772 = vmatmul.mubr.f32.gmra.mrb[0].mxu0 %v1441
    %v1773 = vpop.f32.mrb[0].mxu0
    %v1774 = vadd.f32 %v1629, %v1773
    %v1775 = vpop.f32.mrb[0].mxu0
    %1776 = vmatprep.mubr.f32.mxu0 %v1496
    %1777 = vmatmul.mubr.f32.gmra.mrb[0].mxu0 %v1445
    %v1778 = vpop.f32.mrb[0].mxu0
    %v1779 = vadd.f32 %v1634, %v1778
    %v1780 = vpop.f32.mrb[0].mxu0
    %1781 = vmatprep.mubr.f32.mxu0 %v1499
    %1782 = vmatmul.mubr.f32.gmra.mrb[0].mxu0 %v1449
    %v1783 = vpop.f32.mrb[0].mxu0
    %v1784 = vadd.f32 %v1639, %v1783
    %v1785 = vpop.f32.mrb[0].mxu0
    %1786 = vmatprep.mubr.f32.mxu0 %v1502
    %1787 = vmatmul.mubr.f32.gmra.mrb[0].mxu0 %v1453
    %v1788 = vpop.f32.mrb[0].mxu0
    %v1789 = vadd.f32 %v1644, %v1788
    %v1790 = vpop.f32.mrb[0].mxu0
    %1791 = vmatprep.mubr.f32.mxu0 %v1505
    %1792 = vmatmul.mubr.f32.gmra.mrb[0].mxu0 %v1457
    %v1793 = vpop.f32.mrb[0].mxu0
    %v1794 = vadd.f32 %v1649, %v1793
    %v1795 = vpop.f32.mrb[0].mxu0
    %1796 = vdwg.mxu0
    %v1797 = vmax.f32 %v1317, %v1719
    %v1798 = vmax.f32 %v1322, %v1724
    %v1799 = vmax.f32 %v1327, %v1729
    %v1800 = vmax.f32 %v1332, %v1734
    %v1801 = vmax.f32 %v1337, %v1739
    %v1802 = vmax.f32 %v1342, %v1744
    %v1803 = vmax.f32 %v1347, %v1749
    %v1804 = vmax.f32 %v1352, %v1754
    %v1805 = vmax.f32 %v1357, %v1759
    %v1806 = vmax.f32 %v1362, %v1764
    %v1807 = vmax.f32 %v1367, %v1769
    %v1808 = vmax.f32 %v1372, %v1774
    %v1809 = vmax.f32 %v1377, %v1779
    %v1810 = vmax.f32 %v1382, %v1784
    %v1811 = vmax.f32 %v1387, %v1789
    %v1812 = vmax.f32 %v1392, %v1794
    %1813 = vmatprep.subr.mxu0 0.0
    %1814 = vmatpush1.msra.mxu0 %v932
    %1815 = vmatprep.subr.mxu0 0.0
    %1816 = vmatpush1.msra.mxu0 %v933
    %1817 = vmatprep.subr.mxu0 0.0
    %1818 = vmatpush1.msra.mxu0 %v934
    %1819 = vmatprep.subr.mxu0 0.0
    %1820 = vmatpush1.msra.mxu0 %v935
    %1821 = vmatprep.subr.mxu0 0.0
    %1822 = vmatpush1.msra.mxu0 %v936
    %1823 = vmatprep.subr.mxu0 0.0
    %1824 = vmatpush1.msra.mxu0 %v937
    %1825 = vmatprep.subr.mxu0 0.0
    %1826 = vmatpush1.msra.mxu0 %v938
    %1827 = vmatprep.subr.mxu0 0.0
    %1828 = vmatpush1.msra.mxu0 %v939
    %1829 = vmatprep.subr.mxu0 0.0
    %1830 = vmatpush1.msra.mxu0 %v940
    %1831 = vmatprep.subr.mxu0 0.0
    %1832 = vmatpush1.msra.mxu0 %v941
    %1833 = vmatprep.subr.mxu0 0.0
    %1834 = vmatpush1.msra.mxu0 %v942
    %1835 = vmatprep.subr.mxu0 0.0
    %1836 = vmatpush1.msra.mxu0 %v943
    %1837 = vmatprep.subr.mxu0 0.0
    %1838 = vmatpush1.msra.mxu0 %v944
    %1839 = vmatprep.subr.mxu0 0.0
    %1840 = vmatpush1.msra.mxu0 %v945
    %1841 = vmatprep.subr.mxu0 0.0
    %1842 = vmatpush1.msra.mxu0 %v946
    %1843 = vmatprep.subr.mxu0 0.0
    %1844 = vmatpush1.msra.mxu0 %v947
    %1845 = vmatprep.subr.mxu0 0.0
    %1846 = vmatpush1.msra.mxu0 %v948
    %1847 = vmatprep.subr.mxu0 0.0
    %1848 = vmatpush1.msra.mxu0 %v949
    %1849 = vmatprep.subr.mxu0 0.0
    %1850 = vmatpush1.msra.mxu0 %v950
    %1851 = vmatprep.subr.mxu0 0.0
    %1852 = vmatpush1.msra.mxu0 %v951
    %1853 = vmatprep.subr.mxu0 0.0
    %1854 = vmatpush1.msra.mxu0 %v952
    %1855 = vmatprep.subr.mxu0 0.0
    %1856 = vmatpush1.msra.mxu0 %v953
    %1857 = vmatprep.subr.mxu0 0.0
    %1858 = vmatpush1.msra.mxu0 %v954
    %1859 = vmatprep.subr.mxu0 0.0
    %1860 = vmatpush1.msra.mxu0 %v955
    %1861 = vmatprep.subr.mxu0 0.0
    %1862 = vmatpush1.msra.mxu0 %v956
    %1863 = vmatprep.subr.mxu0 0.0
    %1864 = vmatpush1.msra.mxu0 %v957
    %1865 = vmatprep.subr.mxu0 0.0
    %1866 = vmatpush1.msra.mxu0 %v958
    %1867 = vmatprep.subr.mxu0 0.0
    %1868 = vmatpush1.msra.mxu0 %v959
    %1869 = vmatprep.subr.mxu0 0.0
    %1870 = vmatpush1.msra.mxu0 %v960
    %1871 = vmatprep.subr.mxu0 0.0
    %1872 = vmatpush1.msra.mxu0 %v961
    %1873 = vmatprep.subr.mxu0 0.0
    %1874 = vmatpush1.msra.mxu0 %v962
    %1875 = vmatprep.subr.mxu0 0.0
    %1876 = vmatpush1.msra.mxu0 %v963
    %1877 = vmatprep.mubr.f32.mxu0 %v993
    %1878 = vmatmul.mubr.f32.gmra.mrb[0].mxu0 %v992
    %v1879 = vpop.f32.mrb[0].mxu0
    %v1880 = vadd.f32 0.0, %v1879
    %v1881 = vpop.f32.mrb[0].mxu0
    %1882 = vmatprep.mubr.f32.mxu0 %v997
    %1883 = vmatmul.mubr.f32.gmra.mrb[0].mxu0 %v996
    %v1884 = vpop.f32.mrb[0].mxu0
    %v1885 = vadd.f32 0.0, %v1884
    %v1886 = vpop.f32.mrb[0].mxu0
    %1887 = vmatprep.mubr.f32.mxu0 %v1001
    %1888 = vmatmul.mubr.f32.gmra.mrb[0].mxu0 %v1000
    %v1889 = vpop.f32.mrb[0].mxu0
    %v1890 = vadd.f32 0.0, %v1889
    %v1891 = vpop.f32.mrb[0].mxu0
    %1892 = vmatprep.mubr.f32.mxu0 %v1005
    %1893 = vmatmul.mubr.f32.gmra.mrb[0].mxu0 %v1004
    %v1894 = vpop.f32.mrb[0].mxu0
    %v1895 = vadd.f32 0.0, %v1894
    %v1896 = vpop.f32.mrb[0].mxu0
    %1897 = vmatprep.mubr.f32.mxu0 %v1009
    %1898 = vmatmul.mubr.f32.gmra.mrb[0].mxu0 %v1008
    %v1899 = vpop.f32.mrb[0].mxu0
    %v1900 = vadd.f32 0.0, %v1899
    %v1901 = vpop.f32.mrb[0].mxu0
    %1902 = vmatprep.mubr.f32.mxu0 %v1013
    %1903 = vmatmul.mubr.f32.gmra.mrb[0].mxu0 %v1012
    %v1904 = vpop.f32.mrb[0].mxu0
    %v1905 = vadd.f32 0.0, %v1904
    %v1906 = vpop.f32.mrb[0].mxu0
    %1907 = vmatprep.mubr.f32.mxu0 %v1017
    %1908 = vmatmul.mubr.f32.gmra.mrb[0].mxu0 %v1016
    %v1909 = vpop.f32.mrb[0].mxu0
    %v1910 = vadd.f32 0.0, %v1909
    %v1911 = vpop.f32.mrb[0].mxu0
    %1912 = vmatprep.mubr.f32.mxu0 %v1021
    %1913 = vmatmul.mubr.f32.gmra.mrb[0].mxu0 %v1020
    %v1914 = vpop.f32.mrb[0].mxu0
    %v1915 = vadd.f32 0.0, %v1914
    %v1916 = vpop.f32.mrb[0].mxu0
    %1917 = vmatprep.mubr.f32.mxu0 %v1025
    %1918 = vmatmul.mubr.f32.gmra.mrb[0].mxu0 %v1024
    %v1919 = vpop.f32.mrb[0].mxu0
    %v1920 = vadd.f32 0.0, %v1919
    %v1921 = vpop.f32.mrb[0].mxu0
    %1922 = vmatprep.mubr.f32.mxu0 %v1029
    %1923 = vmatmul.mubr.f32.gmra.mrb[0].mxu0 %v1028
    %v1924 = vpop.f32.mrb[0].mxu0
    %v1925 = vadd.f32 0.0, %v1924
    %v1926 = vpop.f32.mrb[0].mxu0
    %1927 = vmatprep.mubr.f32.mxu0 %v1033
    %1928 = vmatmul.mubr.f32.gmra.mrb[0].mxu0 %v1032
    %v1929 = vpop.f32.mrb[0].mxu0
    %v1930 = vadd.f32 0.0, %v1929
    %v1931 = vpop.f32.mrb[0].mxu0
    %1932 = vmatprep.mubr.f32.mxu0 %v1037
    %1933 = vmatmul.mubr.f32.gmra.mrb[0].mxu0 %v1036
    %v1934 = vpop.f32.mrb[0].mxu0
    %v1935 = vadd.f32 0.0, %v1934
    %v1936 = vpop.f32.mrb[0].mxu0
    %1937 = vmatprep.mubr.f32.mxu0 %v1041
    %1938 = vmatmul.mubr.f32.gmra.mrb[0].mxu0 %v1040
    %v1939 = vpop.f32.mrb[0].mxu0
    %v1940 = vadd.f32 0.0, %v1939
    %v1941 = vpop.f32.mrb[0].mxu0
    %1942 = vmatprep.mubr.f32.mxu0 %v1045
    %1943 = vmatmul.mubr.f32.gmra.mrb[0].mxu0 %v1044
    %v1944 = vpop.f32.mrb[0].mxu0
    %v1945 = vadd.f32 0.0, %v1944
    %v1946 = vpop.f32.mrb[0].mxu0
    %1947 = vmatprep.mubr.f32.mxu0 %v1049
    %1948 = vmatmul.mubr.f32.gmra.mrb[0].mxu0 %v1048
    %v1949 = vpop.f32.mrb[0].mxu0
    %v1950 = vadd.f32 0.0, %v1949
    %v1951 = vpop.f32.mrb[0].mxu0
    %1952 = vmatprep.mubr.f32.mxu0 %v1053
    %1953 = vmatmul.mubr.f32.gmra.mrb[0].mxu0 %v1052
    %v1954 = vpop.f32.mrb[0].mxu0
    %v1955 = vadd.f32 0.0, %v1954
    %v1956 = vpop.f32.mrb[0].mxu0
    %1957 = vdwg.mxu0
    %1958 = vmatprep.subr.mxu0 0.0
    %1959 = vmatpush1.msra.mxu0 %v964
    %1960 = vmatprep.subr.mxu0 0.0
    %1961 = vmatpush1.msra.mxu0 %v965
    %1962 = vmatprep.subr.mxu0 0.0
    %1963 = vmatpush1.msra.mxu0 %v966
    %1964 = vmatprep.subr.mxu0 0.0
    %1965 = vmatpush1.msra.mxu0 %v967
    %1966 = vmatprep.subr.mxu0 0.0
    %1967 = vmatpush1.msra.mxu0 %v968
    %1968 = vmatprep.subr.mxu0 0.0
    %1969 = vmatpush1.msra.mxu0 %v969
    %1970 = vmatprep.subr.mxu0 0.0
    %1971 = vmatpush1.msra.mxu0 %v970
    %1972 = vmatprep.subr.mxu0 0.0
    %1973 = vmatpush1.msra.mxu0 %v971
    %1974 = vmatprep.subr.mxu0 0.0
    %1975 = vmatpush1.msra.mxu0 %v972
    %1976 = vmatprep.subr.mxu0 0.0
    %1977 = vmatpush1.msra.mxu0 %v973
    %1978 = vmatprep.subr.mxu0 0.0
    %1979 = vmatpush1.msra.mxu0 %v974
    %1980 = vmatprep.subr.mxu0 0.0
    %1981 = vmatpush1.msra.mxu0 %v975
    %1982 = vmatprep.subr.mxu0 0.0
    %1983 = vmatpush1.msra.mxu0 %v976
    %1984 = vmatprep.subr.mxu0 0.0
    %1985 = vmatpush1.msra.mxu0 %v977
    %1986 = vmatprep.subr.mxu0 0.0
    %1987 = vmatpush1.msra.mxu0 %v978
    %1988 = vmatprep.subr.mxu0 0.0
    %1989 = vmatpush1.msra.mxu0 %v979
    %1990 = vmatprep.subr.mxu0 0.0
    %1991 = vmatpush1.msra.mxu0 %v980
    %1992 = vmatprep.subr.mxu0 0.0
    %1993 = vmatpush1.msra.mxu0 %v981
    %1994 = vmatprep.subr.mxu0 0.0
    %1995 = vmatpush1.msra.mxu0 %v982
    %1996 = vmatprep.subr.mxu0 0.0
    %1997 = vmatpush1.msra.mxu0 %v983
    %1998 = vmatprep.subr.mxu0 0.0
    %1999 = vmatpush1.msra.mxu0 %v984
    %2000 = vmatprep.subr.mxu0 0.0
    %2001 = vmatpush1.msra.mxu0 %v985
    %2002 = vmatprep.subr.mxu0 0.0
    %2003 = vmatpush1.msra.mxu0 %v986
    %2004 = vmatprep.subr.mxu0 0.0
    %2005 = vmatpush1.msra.mxu0 %v987
    %2006 = vmatprep.subr.mxu0 0.0
    %2007 = vmatpush1.msra.mxu0 %v988
    %2008 = vmatprep.subr.mxu0 0.0
    %2009 = vmatpush1.msra.mxu0 %v989
    %2010 = vmatprep.subr.mxu0 0.0
    %2011 = vmatpush1.msra.mxu0 %v990
    %2012 = vmatprep.subr.mxu0 0.0
    %2013 = vmatpush1.msra.mxu0 %v991
    %2014 = vmatprep.subr.mxu0 0.0
    %2015 = vmatpush1.msra.mxu0 0.0
    %2016 = vmatprep.subr.mxu0 0.0
    %2017 = vmatpush1.msra.mxu0 0.0
    %2018 = vmatprep.subr.mxu0 0.0
    %2019 = vmatpush1.msra.mxu0 0.0
    %2020 = vmatprep.subr.mxu0 0.0
    %2021 = vmatpush1.msra.mxu0 0.0
    %2022 = vmatprep.mubr.f32.mxu0 %v1058
    %2023 = vmatmul.mubr.f32.gmra.mrb[0].mxu0 %v994
    %v2024 = vpop.f32.mrb[0].mxu0
    %v2025 = vadd.f32 %v1880, %v2024
    %v2026 = vpop.f32.mrb[0].mxu0
    %2027 = vmatprep.mubr.f32.mxu0 %v1061
    %2028 = vmatmul.mubr.f32.gmra.mrb[0].mxu0 %v998
    %v2029 = vpop.f32.mrb[0].mxu0
    %v2030 = vadd.f32 %v1885, %v2029
    %v2031 = vpop.f32.mrb[0].mxu0
    %2032 = vmatprep.mubr.f32.mxu0 %v1064
    %2033 = vmatmul.mubr.f32.gmra.mrb[0].mxu0 %v1002
    %v2034 = vpop.f32.mrb[0].mxu0
    %v2035 = vadd.f32 %v1890, %v2034
    %v2036 = vpop.f32.mrb[0].mxu0
    %2037 = vmatprep.mubr.f32.mxu0 %v1067
    %2038 = vmatmul.mubr.f32.gmra.mrb[0].mxu0 %v1006
    %v2039 = vpop.f32.mrb[0].mxu0
    %v2040 = vadd.f32 %v1895, %v2039
    %v2041 = vpop.f32.mrb[0].mxu0
    %2042 = vmatprep.mubr.f32.mxu0 %v1070
    %2043 = vmatmul.mubr.f32.gmra.mrb[0].mxu0 %v1010
    %v2044 = vpop.f32.mrb[0].mxu0
    %v2045 = vadd.f32 %v1900, %v2044
    %v2046 = vpop.f32.mrb[0].mxu0
    %2047 = vmatprep.mubr.f32.mxu0 %v1073
    %2048 = vmatmul.mubr.f32.gmra.mrb[0].mxu0 %v1014
    %v2049 = vpop.f32.mrb[0].mxu0
    %v2050 = vadd.f32 %v1905, %v2049
    %v2051 = vpop.f32.mrb[0].mxu0
    %2052 = vmatprep.mubr.f32.mxu0 %v1076
    %2053 = vmatmul.mubr.f32.gmra.mrb[0].mxu0 %v1018
    %v2054 = vpop.f32.mrb[0].mxu0
    %v2055 = vadd.f32 %v1910, %v2054
    %v2056 = vpop.f32.mrb[0].mxu0
    %2057 = vmatprep.mubr.f32.mxu0 %v1079
    %2058 = vmatmul.mubr.f32.gmra.mrb[0].mxu0 %v1022
    %v2059 = vpop.f32.mrb[0].mxu0
    %v2060 = vadd.f32 %v1915, %v2059
    %v2061 = vpop.f32.mrb[0].mxu0
    %2062 = vmatprep.mubr.f32.mxu0 %v1082
    %2063 = vmatmul.mubr.f32.gmra.mrb[0].mxu0 %v1026
    %v2064 = vpop.f32.mrb[0].mxu0
    %v2065 = vadd.f32 %v1920, %v2064
    %v2066 = vpop.f32.mrb[0].mxu0
    %2067 = vmatprep.mubr.f32.mxu0 %v1085
    %2068 = vmatmul.mubr.f32.gmra.mrb[0].mxu0 %v1030
    %v2069 = vpop.f32.mrb[0].mxu0
    %v2070 = vadd.f32 %v1925, %v2069
    %v2071 = vpop.f32.mrb[0].mxu0
    %2072 = vmatprep.mubr.f32.mxu0 %v1088
    %2073 = vmatmul.mubr.f32.gmra.mrb[0].mxu0 %v1034
    %v2074 = vpop.f32.mrb[0].mxu0
    %v2075 = vadd.f32 %v1930, %v2074
    %v2076 = vpop.f32.mrb[0].mxu0
    %2077 = vmatprep.mubr.f32.mxu0 %v1091
    %2078 = vmatmul.mubr.f32.gmra.mrb[0].mxu0 %v1038
    %v2079 = vpop.f32.mrb[0].mxu0
    %v2080 = vadd.f32 %v1935, %v2079
    %v2081 = vpop.f32.mrb[0].mxu0
    %2082 = vmatprep.mubr.f32.mxu0 %v1094
    %2083 = vmatmul.mubr.f32.gmra.mrb[0].mxu0 %v1042
    %v2084 = vpop.f32.mrb[0].mxu0
    %v2085 = vadd.f32 %v1940, %v2084
    %v2086 = vpop.f32.mrb[0].mxu0
    %2087 = vmatprep.mubr.f32.mxu0 %v1097
    %2088 = vmatmul.mubr.f32.gmra.mrb[0].mxu0 %v1046
    %v2089 = vpop.f32.mrb[0].mxu0
    %v2090 = vadd.f32 %v1945, %v2089
    %v2091 = vpop.f32.mrb[0].mxu0
    %2092 = vmatprep.mubr.f32.mxu0 %v1100
    %2093 = vmatmul.mubr.f32.gmra.mrb[0].mxu0 %v1050
    %v2094 = vpop.f32.mrb[0].mxu0
    %v2095 = vadd.f32 %v1950, %v2094
    %v2096 = vpop.f32.mrb[0].mxu0
    %2097 = vmatprep.mubr.f32.mxu0 %v1103
    %2098 = vmatmul.mubr.f32.gmra.mrb[0].mxu0 %v1054
    %v2099 = vpop.f32.mrb[0].mxu0
    %v2100 = vadd.f32 %v1955, %v2099
    %v2101 = vpop.f32.mrb[0].mxu0
    %2102 = vdwg.mxu0
    %v2103 = vmax.f32 %v1797, %v2025
    %v2104 = vmax.f32 %v1798, %v2030
    %v2105 = vmax.f32 %v1799, %v2035
    %v2106 = vmax.f32 %v1800, %v2040
    %v2107 = vmax.f32 %v1801, %v2045
    %v2108 = vmax.f32 %v1802, %v2050
    %v2109 = vmax.f32 %v1803, %v2055
    %v2110 = vmax.f32 %v1804, %v2060
    %v2111 = vmax.f32 %v1805, %v2065
    %v2112 = vmax.f32 %v1806, %v2070
    %v2113 = vmax.f32 %v1807, %v2075
    %v2114 = vmax.f32 %v1808, %v2080
    %v2115 = vmax.f32 %v1809, %v2085
    %v2116 = vmax.f32 %v1810, %v2090
    %v2117 = vmax.f32 %v1811, %v2095
    %v2118 = vmax.f32 %v1812, %v2100
    %2119 = vmatprep.subr.mxu0 0.0
    %2120 = vmatpush1.msra.mxu0 %v932
    %2121 = vmatprep.subr.mxu0 0.0
    %2122 = vmatpush1.msra.mxu0 %v933
    %2123 = vmatprep.subr.mxu0 0.0
    %2124 = vmatpush1.msra.mxu0 %v934
    %2125 = vmatprep.subr.mxu0 0.0
    %2126 = vmatpush1.msra.mxu0 %v935
    %2127 = vmatprep.subr.mxu0 0.0
    %2128 = vmatpush1.msra.mxu0 %v936
    %2129 = vmatprep.subr.mxu0 0.0
    %2130 = vmatpush1.msra.mxu0 %v937
    %2131 = vmatprep.subr.mxu0 0.0
    %2132 = vmatpush1.msra.mxu0 %v938
    %2133 = vmatprep.subr.mxu0 0.0
    %2134 = vmatpush1.msra.mxu0 %v939
    %2135 = vmatprep.subr.mxu0 0.0
    %2136 = vmatpush1.msra.mxu0 %v940
    %2137 = vmatprep.subr.mxu0 0.0
    %2138 = vmatpush1.msra.mxu0 %v941
    %2139 = vmatprep.subr.mxu0 0.0
    %2140 = vmatpush1.msra.mxu0 %v942
    %2141 = vmatprep.subr.mxu0 0.0
    %2142 = vmatpush1.msra.mxu0 %v943
    %2143 = vmatprep.subr.mxu0 0.0
    %2144 = vmatpush1.msra.mxu0 %v944
    %2145 = vmatprep.subr.mxu0 0.0
    %2146 = vmatpush1.msra.mxu0 %v945
    %2147 = vmatprep.subr.mxu0 0.0
    %2148 = vmatpush1.msra.mxu0 %v946
    %2149 = vmatprep.subr.mxu0 0.0
    %2150 = vmatpush1.msra.mxu0 %v947
    %2151 = vmatprep.subr.mxu0 0.0
    %2152 = vmatpush1.msra.mxu0 %v948
    %2153 = vmatprep.subr.mxu0 0.0
    %2154 = vmatpush1.msra.mxu0 %v949
    %2155 = vmatprep.subr.mxu0 0.0
    %2156 = vmatpush1.msra.mxu0 %v950
    %2157 = vmatprep.subr.mxu0 0.0
    %2158 = vmatpush1.msra.mxu0 %v951
    %2159 = vmatprep.subr.mxu0 0.0
    %2160 = vmatpush1.msra.mxu0 %v952
    %2161 = vmatprep.subr.mxu0 0.0
    %2162 = vmatpush1.msra.mxu0 %v953
    %2163 = vmatprep.subr.mxu0 0.0
    %2164 = vmatpush1.msra.mxu0 %v954
    %2165 = vmatprep.subr.mxu0 0.0
    %2166 = vmatpush1.msra.mxu0 %v955
    %2167 = vmatprep.subr.mxu0 0.0
    %2168 = vmatpush1.msra.mxu0 %v956
    %2169 = vmatprep.subr.mxu0 0.0
    %2170 = vmatpush1.msra.mxu0 %v957
    %2171 = vmatprep.subr.mxu0 0.0
    %2172 = vmatpush1.msra.mxu0 %v958
    %2173 = vmatprep.subr.mxu0 0.0
    %2174 = vmatpush1.msra.mxu0 %v959
    %2175 = vmatprep.subr.mxu0 0.0
    %2176 = vmatpush1.msra.mxu0 %v960
    %2177 = vmatprep.subr.mxu0 0.0
    %2178 = vmatpush1.msra.mxu0 %v961
    %2179 = vmatprep.subr.mxu0 0.0
    %2180 = vmatpush1.msra.mxu0 %v962
    %2181 = vmatprep.subr.mxu0 0.0
    %2182 = vmatpush1.msra.mxu0 %v963
    %2183 = vmatprep.mubr.f32.mxu0 %v1396
    %2184 = vmatmul.mubr.f32.gmra.mrb[0].mxu0 %v1395
    %v2185 = vpop.f32.mrb[0].mxu0
    %v2186 = vadd.f32 0.0, %v2185
    %v2187 = vpop.f32.mrb[0].mxu0
    %2188 = vmatprep.mubr.f32.mxu0 %v1400
    %2189 = vmatmul.mubr.f32.gmra.mrb[0].mxu0 %v1399
    %v2190 = vpop.f32.mrb[0].mxu0
    %v2191 = vadd.f32 0.0, %v2190
    %v2192 = vpop.f32.mrb[0].mxu0
    %2193 = vmatprep.mubr.f32.mxu0 %v1404
    %2194 = vmatmul.mubr.f32.gmra.mrb[0].mxu0 %v1403
    %v2195 = vpop.f32.mrb[0].mxu0
    %v2196 = vadd.f32 0.0, %v2195
    %v2197 = vpop.f32.mrb[0].mxu0
    %2198 = vmatprep.mubr.f32.mxu0 %v1408
    %2199 = vmatmul.mubr.f32.gmra.mrb[0].mxu0 %v1407
    %v2200 = vpop.f32.mrb[0].mxu0
    %v2201 = vadd.f32 0.0, %v2200
    %v2202 = vpop.f32.mrb[0].mxu0
    %2203 = vmatprep.mubr.f32.mxu0 %v1412
    %2204 = vmatmul.mubr.f32.gmra.mrb[0].mxu0 %v1411
    %v2205 = vpop.f32.mrb[0].mxu0
    %v2206 = vadd.f32 0.0, %v2205
    %v2207 = vpop.f32.mrb[0].mxu0
    %2208 = vmatprep.mubr.f32.mxu0 %v1416
    %2209 = vmatmul.mubr.f32.gmra.mrb[0].mxu0 %v1415
    %v2210 = vpop.f32.mrb[0].mxu0
    %v2211 = vadd.f32 0.0, %v2210
    %v2212 = vpop.f32.mrb[0].mxu0
    %2213 = vmatprep.mubr.f32.mxu0 %v1420
    %2214 = vmatmul.mubr.f32.gmra.mrb[0].mxu0 %v1419
    %v2215 = vpop.f32.mrb[0].mxu0
    %v2216 = vadd.f32 0.0, %v2215
    %v2217 = vpop.f32.mrb[0].mxu0
    %2218 = vmatprep.mubr.f32.mxu0 %v1424
    %2219 = vmatmul.mubr.f32.gmra.mrb[0].mxu0 %v1423
    %v2220 = vpop.f32.mrb[0].mxu0
    %v2221 = vadd.f32 0.0, %v2220
    %v2222 = vpop.f32.mrb[0].mxu0
    %2223 = vmatprep.mubr.f32.mxu0 %v1428
    %2224 = vmatmul.mubr.f32.gmra.mrb[0].mxu0 %v1427
    %v2225 = vpop.f32.mrb[0].mxu0
    %v2226 = vadd.f32 0.0, %v2225
    %v2227 = vpop.f32.mrb[0].mxu0
    %2228 = vmatprep.mubr.f32.mxu0 %v1432
    %2229 = vmatmul.mubr.f32.gmra.mrb[0].mxu0 %v1431
    %v2230 = vpop.f32.mrb[0].mxu0
    %v2231 = vadd.f32 0.0, %v2230
    %v2232 = vpop.f32.mrb[0].mxu0
    %2233 = vmatprep.mubr.f32.mxu0 %v1436
    %2234 = vmatmul.mubr.f32.gmra.mrb[0].mxu0 %v1435
    %v2235 = vpop.f32.mrb[0].mxu0
    %v2236 = vadd.f32 0.0, %v2235
    %v2237 = vpop.f32.mrb[0].mxu0
    %2238 = vmatprep.mubr.f32.mxu0 %v1440
    %2239 = vmatmul.mubr.f32.gmra.mrb[0].mxu0 %v1439
    %v2240 = vpop.f32.mrb[0].mxu0
    %v2241 = vadd.f32 0.0, %v2240
    %v2242 = vpop.f32.mrb[0].mxu0
    %2243 = vmatprep.mubr.f32.mxu0 %v1444
    %2244 = vmatmul.mubr.f32.gmra.mrb[0].mxu0 %v1443
    %v2245 = vpop.f32.mrb[0].mxu0
    %v2246 = vadd.f32 0.0, %v2245
    %v2247 = vpop.f32.mrb[0].mxu0
    %2248 = vmatprep.mubr.f32.mxu0 %v1448
    %2249 = vmatmul.mubr.f32.gmra.mrb[0].mxu0 %v1447
    %v2250 = vpop.f32.mrb[0].mxu0
    %v2251 = vadd.f32 0.0, %v2250
    %v2252 = vpop.f32.mrb[0].mxu0
    %2253 = vmatprep.mubr.f32.mxu0 %v1452
    %2254 = vmatmul.mubr.f32.gmra.mrb[0].mxu0 %v1451
    %v2255 = vpop.f32.mrb[0].mxu0
    %v2256 = vadd.f32 0.0, %v2255
    %v2257 = vpop.f32.mrb[0].mxu0
    %2258 = vmatprep.mubr.f32.mxu0 %v1456
    %2259 = vmatmul.mubr.f32.gmra.mrb[0].mxu0 %v1455
    %v2260 = vpop.f32.mrb[0].mxu0
    %v2261 = vadd.f32 0.0, %v2260
    %v2262 = vpop.f32.mrb[0].mxu0
    %2263 = vdwg.mxu0
    %2264 = vmatprep.subr.mxu0 0.0
    %2265 = vmatpush1.msra.mxu0 %v964
    %2266 = vmatprep.subr.mxu0 0.0
    %2267 = vmatpush1.msra.mxu0 %v965
    %2268 = vmatprep.subr.mxu0 0.0
    %2269 = vmatpush1.msra.mxu0 %v966
    %2270 = vmatprep.subr.mxu0 0.0
    %2271 = vmatpush1.msra.mxu0 %v967
    %2272 = vmatprep.subr.mxu0 0.0
    %2273 = vmatpush1.msra.mxu0 %v968
    %2274 = vmatprep.subr.mxu0 0.0
    %2275 = vmatpush1.msra.mxu0 %v969
    %2276 = vmatprep.subr.mxu0 0.0
    %2277 = vmatpush1.msra.mxu0 %v970
    %2278 = vmatprep.subr.mxu0 0.0
    %2279 = vmatpush1.msra.mxu0 %v971
    %2280 = vmatprep.subr.mxu0 0.0
    %2281 = vmatpush1.msra.mxu0 %v972
    %2282 = vmatprep.subr.mxu0 0.0
    %2283 = vmatpush1.msra.mxu0 %v973
    %2284 = vmatprep.subr.mxu0 0.0
    %2285 = vmatpush1.msra.mxu0 %v974
    %2286 = vmatprep.subr.mxu0 0.0
    %2287 = vmatpush1.msra.mxu0 %v975
    %2288 = vmatprep.subr.mxu0 0.0
    %2289 = vmatpush1.msra.mxu0 %v976
    %2290 = vmatprep.subr.mxu0 0.0
    %2291 = vmatpush1.msra.mxu0 %v977
    %2292 = vmatprep.subr.mxu0 0.0
    %2293 = vmatpush1.msra.mxu0 %v978
    %2294 = vmatprep.subr.mxu0 0.0
    %2295 = vmatpush1.msra.mxu0 %v979
    %2296 = vmatprep.subr.mxu0 0.0
    %2297 = vmatpush1.msra.mxu0 %v980
    %2298 = vmatprep.subr.mxu0 0.0
    %2299 = vmatpush1.msra.mxu0 %v981
    %2300 = vmatprep.subr.mxu0 0.0
    %2301 = vmatpush1.msra.mxu0 %v982
    %2302 = vmatprep.subr.mxu0 0.0
    %2303 = vmatpush1.msra.mxu0 %v983
    %2304 = vmatprep.subr.mxu0 0.0
    %2305 = vmatpush1.msra.mxu0 %v984
    %2306 = vmatprep.subr.mxu0 0.0
    %2307 = vmatpush1.msra.mxu0 %v985
    %2308 = vmatprep.subr.mxu0 0.0
    %2309 = vmatpush1.msra.mxu0 %v986
    %2310 = vmatprep.subr.mxu0 0.0
    %2311 = vmatpush1.msra.mxu0 %v987
    %2312 = vmatprep.subr.mxu0 0.0
    %2313 = vmatpush1.msra.mxu0 %v988
    %2314 = vmatprep.subr.mxu0 0.0
    %2315 = vmatpush1.msra.mxu0 %v989
    %2316 = vmatprep.subr.mxu0 0.0
    %2317 = vmatpush1.msra.mxu0 %v990
    %2318 = vmatprep.subr.mxu0 0.0
    %2319 = vmatpush1.msra.mxu0 %v991
    %2320 = vmatprep.subr.mxu0 0.0
    %2321 = vmatpush1.msra.mxu0 0.0
    %2322 = vmatprep.subr.mxu0 0.0
    %2323 = vmatpush1.msra.mxu0 0.0
    %2324 = vmatprep.subr.mxu0 0.0
    %2325 = vmatpush1.msra.mxu0 0.0
    %2326 = vmatprep.subr.mxu0 0.0
    %2327 = vmatpush1.msra.mxu0 0.0
    %2328 = vmatprep.mubr.f32.mxu0 %v1460
    %2329 = vmatmul.mubr.f32.gmra.mrb[0].mxu0 %v1397
    %v2330 = vpop.f32.mrb[0].mxu0
    %v2331 = vadd.f32 %v2186, %v2330
    %v2332 = vpop.f32.mrb[0].mxu0
    %2333 = vmatprep.mubr.f32.mxu0 %v1463
    %2334 = vmatmul.mubr.f32.gmra.mrb[0].mxu0 %v1401
    %v2335 = vpop.f32.mrb[0].mxu0
    %v2336 = vadd.f32 %v2191, %v2335
    %v2337 = vpop.f32.mrb[0].mxu0
    %2338 = vmatprep.mubr.f32.mxu0 %v1466
    %2339 = vmatmul.mubr.f32.gmra.mrb[0].mxu0 %v1405
    %v2340 = vpop.f32.mrb[0].mxu0
    %v2341 = vadd.f32 %v2196, %v2340
    %v2342 = vpop.f32.mrb[0].mxu0
    %2343 = vmatprep.mubr.f32.mxu0 %v1469
    %2344 = vmatmul.mubr.f32.gmra.mrb[0].mxu0 %v1409
    %v2345 = vpop.f32.mrb[0].mxu0
    %v2346 = vadd.f32 %v2201, %v2345
    %v2347 = vpop.f32.mrb[0].mxu0
    %2348 = vmatprep.mubr.f32.mxu0 %v1472
    %2349 = vmatmul.mubr.f32.gmra.mrb[0].mxu0 %v1413
    %v2350 = vpop.f32.mrb[0].mxu0
    %v2351 = vadd.f32 %v2206, %v2350
    %v2352 = vpop.f32.mrb[0].mxu0
    %2353 = vmatprep.mubr.f32.mxu0 %v1475
    %2354 = vmatmul.mubr.f32.gmra.mrb[0].mxu0 %v1417
    %v2355 = vpop.f32.mrb[0].mxu0
    %v2356 = vadd.f32 %v2211, %v2355
    %v2357 = vpop.f32.mrb[0].mxu0
    %2358 = vmatprep.mubr.f32.mxu0 %v1478
    %2359 = vmatmul.mubr.f32.gmra.mrb[0].mxu0 %v1421
    %v2360 = vpop.f32.mrb[0].mxu0
    %v2361 = vadd.f32 %v2216, %v2360
    %v2362 = vpop.f32.mrb[0].mxu0
    %2363 = vmatprep.mubr.f32.mxu0 %v1481
    %2364 = vmatmul.mubr.f32.gmra.mrb[0].mxu0 %v1425
    %v2365 = vpop.f32.mrb[0].mxu0
    %v2366 = vadd.f32 %v2221, %v2365
    %v2367 = vpop.f32.mrb[0].mxu0
    %2368 = vmatprep.mubr.f32.mxu0 %v1484
    %2369 = vmatmul.mubr.f32.gmra.mrb[0].mxu0 %v1429
    %v2370 = vpop.f32.mrb[0].mxu0
    %v2371 = vadd.f32 %v2226, %v2370
    %v2372 = vpop.f32.mrb[0].mxu0
    %2373 = vmatprep.mubr.f32.mxu0 %v1487
    %2374 = vmatmul.mubr.f32.gmra.mrb[0].mxu0 %v1433
    %v2375 = vpop.f32.mrb[0].mxu0
    %v2376 = vadd.f32 %v2231, %v2375
    %v2377 = vpop.f32.mrb[0].mxu0
    %2378 = vmatprep.mubr.f32.mxu0 %v1490
    %2379 = vmatmul.mubr.f32.gmra.mrb[0].mxu0 %v1437
    %v2380 = vpop.f32.mrb[0].mxu0
    %v2381 = vadd.f32 %v2236, %v2380
    %v2382 = vpop.f32.mrb[0].mxu0
    %2383 = vmatprep.mubr.f32.mxu0 %v1493
    %2384 = vmatmul.mubr.f32.gmra.mrb[0].mxu0 %v1441
    %v2385 = vpop.f32.mrb[0].mxu0
    %v2386 = vadd.f32 %v2241, %v2385
    %v2387 = vpop.f32.mrb[0].mxu0
    %2388 = vmatprep.mubr.f32.mxu0 %v1496
    %2389 = vmatmul.mubr.f32.gmra.mrb[0].mxu0 %v1445
    %v2390 = vpop.f32.mrb[0].mxu0
    %v2391 = vadd.f32 %v2246, %v2390
    %v2392 = vpop.f32.mrb[0].mxu0
    %2393 = vmatprep.mubr.f32.mxu0 %v1499
    %2394 = vmatmul.mubr.f32.gmra.mrb[0].mxu0 %v1449
    %v2395 = vpop.f32.mrb[0].mxu0
    %v2396 = vadd.f32 %v2251, %v2395
    %v2397 = vpop.f32.mrb[0].mxu0
    %2398 = vmatprep.mubr.f32.mxu0 %v1502
    %2399 = vmatmul.mubr.f32.gmra.mrb[0].mxu0 %v1453
    %v2400 = vpop.f32.mrb[0].mxu0
    %v2401 = vadd.f32 %v2256, %v2400
    %v2402 = vpop.f32.mrb[0].mxu0
    %2403 = vmatprep.mubr.f32.mxu0 %v1505
    %2404 = vmatmul.mubr.f32.gmra.mrb[0].mxu0 %v1457
    %v2405 = vpop.f32.mrb[0].mxu0
    %v2406 = vadd.f32 %v2261, %v2405
    %v2407 = vpop.f32.mrb[0].mxu0
    %2408 = vdwg.mxu0
    %v2409 = vmax.f32 %v2103, %v2331
    %v2410 = vmax.f32 %v2104, %v2336
    %v2411 = vmax.f32 %v2105, %v2341
    %v2412 = vmax.f32 %v2106, %v2346
    %v2413 = vmax.f32 %v2107, %v2351
    %v2414 = vmax.f32 %v2108, %v2356
    %v2415 = vmax.f32 %v2109, %v2361
    %v2416 = vmax.f32 %v2110, %v2366
    %v2417 = vmax.f32 %v2111, %v2371
    %v2418 = vmax.f32 %v2112, %v2376
    %v2419 = vmax.f32 %v2113, %v2381
    %v2420 = vmax.f32 %v2114, %v2386
    %v2421 = vmax.f32 %v2115, %v2391
    %v2422 = vmax.f32 %v2116, %v2396
    %v2423 = vmax.f32 %v2117, %v2401
    %v2424 = vmax.f32 %v2118, %v2406
    %v2425 = vld [vmem:[%s6] sm:$0xff]
    %v2426 = vld [vmem:[%s6 + $0x8] sm:$0xff]
    %v2427 = vld [vmem:[%s6 + $0x10] sm:$0xff]
    %v2428 = vld [vmem:[%s6 + $0x18] sm:$0xff]
    %v2429 = vld [vmem:[%s6 + $0x20] sm:$0xff]
    %v2430 = vld [vmem:[%s6 + $0x28] sm:$0xff]
    %v2431 = vld [vmem:[%s6 + $0x30] sm:$0xff]
    %v2432 = vld [vmem:[%s6 + $0x38] sm:$0xff]
    %v2433 = vld [vmem:[%s6 + $0x40] sm:$0xff]
    %v2434 = vld [vmem:[%s6 + $0x48] sm:$0xff]
    %v2435 = vld [vmem:[%s6 + $0x50] sm:$0xff]
    %v2436 = vld [vmem:[%s6 + $0x58] sm:$0xff]
    %v2437 = vld [vmem:[%s6 + $0x60] sm:$0xff]
    %v2438 = vld [vmem:[%s6 + $0x68] sm:$0xff]
    %v2439 = vld [vmem:[%s6 + $0x70] sm:$0xff]
    %v2440 = vld [vmem:[%s6 + $0x78] sm:$0xff]
    %2442 = vset.pattern.permute.xlu0 0
    %2443 = vperm.xlu0 %2442, %v2425
    %v2444 = vpop.permute.xlu0 %2443
    %2447 = vset.pattern.permute.xlu0 0
    %2448 = vperm.xlu0 %2447, %v2426
    %v2449 = vpop.permute.xlu0 %2448
    %2452 = vset.pattern.permute.xlu0 0
    %2453 = vperm.xlu0 %2452, %v2427
    %v2454 = vpop.permute.xlu0 %2453
    %2457 = vset.pattern.permute.xlu0 0
    %2458 = vperm.xlu0 %2457, %v2428
    %v2459 = vpop.permute.xlu0 %2458
    %2462 = vset.pattern.permute.xlu0 0
    %2463 = vperm.xlu0 %2462, %v2429
    %v2464 = vpop.permute.xlu0 %2463
    %2467 = vset.pattern.permute.xlu0 0
    %2468 = vperm.xlu0 %2467, %v2430
    %v2469 = vpop.permute.xlu0 %2468
    %2472 = vset.pattern.permute.xlu0 0
    %2473 = vperm.xlu0 %2472, %v2431
    %v2474 = vpop.permute.xlu0 %2473
    %2477 = vset.pattern.permute.xlu0 0
    %2478 = vperm.xlu0 %2477, %v2432
    %v2479 = vpop.permute.xlu0 %2478
    %2482 = vset.pattern.permute.xlu0 0
    %2483 = vperm.xlu0 %2482, %v2433
    %v2484 = vpop.permute.xlu0 %2483
    %2487 = vset.pattern.permute.xlu0 0
    %2488 = vperm.xlu0 %2487, %v2434
    %v2489 = vpop.permute.xlu0 %2488
    %2492 = vset.pattern.permute.xlu0 0
    %2493 = vperm.xlu0 %2492, %v2435
    %v2494 = vpop.permute.xlu0 %2493
    %2497 = vset.pattern.permute.xlu0 0
    %2498 = vperm.xlu0 %2497, %v2436
    %v2499 = vpop.permute.xlu0 %2498
    %2502 = vset.pattern.permute.xlu0 0
    %2503 = vperm.xlu0 %2502, %v2437
    %v2504 = vpop.permute.xlu0 %2503
    %2507 = vset.pattern.permute.xlu0 0
    %2508 = vperm.xlu0 %2507, %v2438
    %v2509 = vpop.permute.xlu0 %2508
    %2512 = vset.pattern.permute.xlu0 0
    %2513 = vperm.xlu0 %2512, %v2439
    %v2514 = vpop.permute.xlu0 %2513
    %2517 = vset.pattern.permute.xlu0 0
    %2518 = vperm.xlu0 %2517, %v2440
    %v2519 = vpop.permute.xlu0 %2518
    %v2521 = vadd.f32 %v2409, %v2444
    %v2522 = vadd.f32 %v2410, %v2449
    %v2523 = vadd.f32 %v2411, %v2454
    %v2524 = vadd.f32 %v2412, %v2459
    %v2525 = vadd.f32 %v2413, %v2464
    %v2526 = vadd.f32 %v2414, %v2469
    %v2527 = vadd.f32 %v2415, %v2474
    %v2528 = vadd.f32 %v2416, %v2479
    %v2529 = vadd.f32 %v2417, %v2484
    %v2530 = vadd.f32 %v2418, %v2489
    %v2531 = vadd.f32 %v2419, %v2494
    %v2532 = vadd.f32 %v2420, %v2499
    %v2533 = vadd.f32 %v2421, %v2504
    %v2534 = vadd.f32 %v2422, %v2509
    %v2535 = vadd.f32 %v2423, %v2514
    %v2536 = vadd.f32 %v2424, %v2519
    %v2537 = vmax.f32 %v2521, 0.0
    %v2538 = vmax.f32 %v2522, 0.0
    %v2539 = vmax.f32 %v2523, 0.0
    %v2540 = vmax.f32 %v2524, 0.0
    %v2541 = vmax.f32 %v2525, 0.0
    %v2542 = vmax.f32 %v2526, 0.0
    %v2543 = vmax.f32 %v2527, 0.0
    %v2544 = vmax.f32 %v2528, 0.0
    %v2545 = vmax.f32 %v2529, 0.0
    %v2546 = vmax.f32 %v2530, 0.0
    %v2547 = vmax.f32 %v2531, 0.0
    %v2548 = vmax.f32 %v2532, 0.0
    %v2549 = vmax.f32 %v2533, 0.0
    %v2550 = vmax.f32 %v2534, 0.0
    %v2551 = vmax.f32 %v2535, 0.0
    %v2552 = vmax.f32 %v2536, 0.0
    %s2553 = smul.u32 %s863, 128
    %s2554 = scalar_lea.vmem [#allocation3], %s2553
    %vm2555 = vcmask 15360
    %2556 = vst.msk [vmem:[%s2554] sm:$0xff] %vm2555, %v2537
    %2557 = vst.msk [vmem:[%s2554 + $0x8] sm:$0xff] %vm2555, %v2538
    %2558 = vst.msk [vmem:[%s2554 + $0x10] sm:$0xff] %vm2555, %v2539
    %2559 = vst.msk [vmem:[%s2554 + $0x18] sm:$0xff] %vm2555, %v2540
    %2560 = vst.msk [vmem:[%s2554 + $0x20] sm:$0xff] %vm2555, %v2541
    %2561 = vst.msk [vmem:[%s2554 + $0x28] sm:$0xff] %vm2555, %v2542
    %2562 = vst.msk [vmem:[%s2554 + $0x30] sm:$0xff] %vm2555, %v2543
    %2563 = vst.msk [vmem:[%s2554 + $0x38] sm:$0xff] %vm2555, %v2544
    %2564 = vst.msk [vmem:[%s2554 + $0x40] sm:$0xff] %vm2555, %v2545
    %2565 = vst.msk [vmem:[%s2554 + $0x48] sm:$0xff] %vm2555, %v2546
    %2566 = vst.msk [vmem:[%s2554 + $0x50] sm:$0xff] %vm2555, %v2547
    %2567 = vst.msk [vmem:[%s2554 + $0x58] sm:$0xff] %vm2555, %v2548
    %2568 = vst.msk [vmem:[%s2554 + $0x60] sm:$0xff] %vm2555, %v2549
    %2569 = vst.msk [vmem:[%s2554 + $0x68] sm:$0xff] %vm2555, %v2550
    %2570 = vst.msk [vmem:[%s2554 + $0x70] sm:$0xff] %vm2555, %v2551
    %2571 = vst.msk [vmem:[%s2554 + $0x78] sm:$0xff] %vm2555, %v2552
  $region65: #{cnn_forward.1} parent=0 // loop_footer
    %s867 = sadd.s32 1, %s863
  $region66: #{cnn_forward.1} parent=0 // loop_footer_branch
    %862 = sbr.rel target = $region62
  $region67: #{cnn_forward.1} parent=0 // loop_exit
    _
  %v2572 = vld [vmem:[#allocation3] sm:$0xff]
  %v2573 = vld [vmem:[#allocation3 + $0x8] sm:$0xff]
  %v2574 = vld [vmem:[#allocation3 + $0x10] sm:$0xff]
  %v2575 = vld [vmem:[#allocation3 + $0x18] sm:$0xff]
  %v2576 = vld [vmem:[#allocation3 + $0x20] sm:$0xff]
  %v2577 = vld [vmem:[#allocation3 + $0x28] sm:$0xff]
  %v2578 = vld [vmem:[#allocation3 + $0x30] sm:$0xff]
  %v2579 = vld [vmem:[#allocation3 + $0x38] sm:$0xff]
  %v2580 = vld [vmem:[#allocation3 + $0x40] sm:$0xff]
  %v2581 = vld [vmem:[#allocation3 + $0x48] sm:$0xff]
  %v2582 = vld [vmem:[#allocation3 + $0x50] sm:$0xff]
  %v2583 = vld [vmem:[#allocation3 + $0x58] sm:$0xff]
  %v2584 = vld [vmem:[#allocation3 + $0x60] sm:$0xff]
  %v2585 = vld [vmem:[#allocation3 + $0x68] sm:$0xff]
  %v2586 = vld [vmem:[#allocation3 + $0x70] sm:$0xff]
  %v2587 = vld [vmem:[#allocation3 + $0x78] sm:$0xff]
  %v2588 = vld [vmem:[#allocation3 + $0x80] sm:$0xff]
  %v2589 = vld [vmem:[#allocation3 + $0x88] sm:$0xff]
  %v2590 = vld [vmem:[#allocation3 + $0x90] sm:$0xff]
  %v2591 = vld [vmem:[#allocation3 + $0x98] sm:$0xff]
  %v2592 = vld [vmem:[#allocation3 + $0xa0] sm:$0xff]
  %v2593 = vld [vmem:[#allocation3 + $0xa8] sm:$0xff]
  %v2594 = vld [vmem:[#allocation3 + $0xb0] sm:$0xff]
  %v2595 = vld [vmem:[#allocation3 + $0xb8] sm:$0xff]
  %v2596 = vld [vmem:[#allocation3 + $0xc0] sm:$0xff]
  %v2597 = vld [vmem:[#allocation3 + $0xc8] sm:$0xff]
  %v2598 = vld [vmem:[#allocation3 + $0xd0] sm:$0xff]
  %v2599 = vld [vmem:[#allocation3 + $0xd8] sm:$0xff]
  %v2600 = vld [vmem:[#allocation3 + $0xe0] sm:$0xff]
  %v2601 = vld [vmem:[#allocation3 + $0xe8] sm:$0xff]
  %v2602 = vld [vmem:[#allocation3 + $0xf0] sm:$0xff]
  %v2603 = vld [vmem:[#allocation3 + $0xf8] sm:$0xff]
  %v2604 = vld [vmem:[#allocation3 + $0x100] sm:$0xff]
  %v2605 = vld [vmem:[#allocation3 + $0x108] sm:$0xff]
  %v2606 = vld [vmem:[#allocation3 + $0x110] sm:$0xff]
  %v2607 = vld [vmem:[#allocation3 + $0x118] sm:$0xff]
  %v2608 = vld [vmem:[#allocation3 + $0x120] sm:$0xff]
  %v2609 = vld [vmem:[#allocation3 + $0x128] sm:$0xff]
  %v2610 = vld [vmem:[#allocation3 + $0x130] sm:$0xff]
  %v2611 = vld [vmem:[#allocation3 + $0x138] sm:$0xff]
  %v2612 = vld [vmem:[#allocation3 + $0x140] sm:$0xff]
  %v2613 = vld [vmem:[#allocation3 + $0x148] sm:$0xff]
  %v2614 = vld [vmem:[#allocation3 + $0x150] sm:$0xff]
  %v2615 = vld [vmem:[#allocation3 + $0x158] sm:$0xff]
  %v2616 = vld [vmem:[#allocation3 + $0x160] sm:$0xff]
  %v2617 = vld [vmem:[#allocation3 + $0x168] sm:$0xff]
  %v2618 = vld [vmem:[#allocation3 + $0x170] sm:$0xff]
  %v2619 = vld [vmem:[#allocation3 + $0x178] sm:$0xff]
  %v2620 = vld [vmem:[#allocation3 + $0x180] sm:$0xff]
  %v2621 = vld [vmem:[#allocation3 + $0x188] sm:$0xff]
  %v2622 = vld [vmem:[#allocation3 + $0x190] sm:$0xff]
  %v2623 = vld [vmem:[#allocation3 + $0x198] sm:$0xff]
  %v2624 = vld [vmem:[#allocation3 + $0x1a0] sm:$0xff]
  %v2625 = vld [vmem:[#allocation3 + $0x1a8] sm:$0xff]
  %v2626 = vld [vmem:[#allocation3 + $0x1b0] sm:$0xff]
  %v2627 = vld [vmem:[#allocation3 + $0x1b8] sm:$0xff]
  %v2628 = vld [vmem:[#allocation3 + $0x1c0] sm:$0xff]
  %v2629 = vld [vmem:[#allocation3 + $0x1c8] sm:$0xff]
  %v2630 = vld [vmem:[#allocation3 + $0x1d0] sm:$0xff]
  %v2631 = vld [vmem:[#allocation3 + $0x1d8] sm:$0xff]
  %v2632 = vld [vmem:[#allocation3 + $0x1e0] sm:$0xff]
  %v2633 = vld [vmem:[#allocation3 + $0x1e8] sm:$0xff]
  %v2634 = vld [vmem:[#allocation3 + $0x1f0] sm:$0xff]
  %v2635 = vld [vmem:[#allocation3 + $0x1f8] sm:$0xff]
  %v2636 = vld [vmem:[#allocation3 + $0x200] sm:$0xff]
  %v2637 = vld [vmem:[#allocation3 + $0x208] sm:$0xff]
  %v2638 = vld [vmem:[#allocation3 + $0x210] sm:$0xff]
  %v2639 = vld [vmem:[#allocation3 + $0x218] sm:$0xff]
  %v2640 = vld [vmem:[#allocation3 + $0x220] sm:$0xff]
  %v2641 = vld [vmem:[#allocation3 + $0x228] sm:$0xff]
  %v2642 = vld [vmem:[#allocation3 + $0x230] sm:$0xff]
  %v2643 = vld [vmem:[#allocation3 + $0x238] sm:$0xff]
  %v2644 = vld [vmem:[#allocation3 + $0x240] sm:$0xff]
  %v2645 = vld [vmem:[#allocation3 + $0x248] sm:$0xff]
  %v2646 = vld [vmem:[#allocation3 + $0x250] sm:$0xff]
  %v2647 = vld [vmem:[#allocation3 + $0x258] sm:$0xff]
  %v2648 = vld [vmem:[#allocation3 + $0x260] sm:$0xff]
  %v2649 = vld [vmem:[#allocation3 + $0x268] sm:$0xff]
  %v2650 = vld [vmem:[#allocation3 + $0x270] sm:$0xff]
  %v2651 = vld [vmem:[#allocation3 + $0x278] sm:$0xff]
  %v2652 = vld [vmem:[%s7] sm:$0xff]
  %v2653 = vld [vmem:[%s7 + $0x8] sm:$0xff]
  %v2654 = vld [vmem:[%s7 + $0x10] sm:$0xff]
  %v2655 = vld [vmem:[%s7 + $0x18] sm:$0xff]
  %v2656 = vld [vmem:[%s7 + $0x20] sm:$0xff]
  %v2657 = vld [vmem:[%s7 + $0x28] sm:$0xff]
  %v2658 = vld [vmem:[%s7 + $0x30] sm:$0xff]
  %v2659 = vld [vmem:[%s7 + $0x38] sm:$0xff]
  %v2660 = vld [vmem:[%s7 + $0x40] sm:$0xff]
  %v2661 = vld [vmem:[%s7 + $0x48] sm:$0xff]
  %v2662 = vld [vmem:[%s7 + $0x50] sm:$0xff]
  %v2663 = vld [vmem:[%s7 + $0x58] sm:$0xff]
  %v2664 = vld [vmem:[%s7 + $0x60] sm:$0xff]
  %v2665 = vld [vmem:[%s7 + $0x68] sm:$0xff]
  %v2666 = vld [vmem:[%s7 + $0x70] sm:$0xff]
  %v2667 = vld [vmem:[%s7 + $0x78] sm:$0xff]
  %v2668 = vld [vmem:[%s7 + $0x80] sm:$0xff]
  %v2669 = vld [vmem:[%s7 + $0x88] sm:$0xff]
  %v2670 = vld [vmem:[%s7 + $0x90] sm:$0xff]
  %v2671 = vld [vmem:[%s7 + $0x98] sm:$0xff]
  %v2672 = vld [vmem:[%s7 + $0xa0] sm:$0xff]
  %v2673 = vld [vmem:[%s7 + $0xa8] sm:$0xff]
  %v2674 = vld [vmem:[%s7 + $0xb0] sm:$0xff]
  %v2675 = vld [vmem:[%s7 + $0xb8] sm:$0xff]
  %v2676 = vld [vmem:[%s7 + $0xc0] sm:$0xff]
  %v2677 = vld [vmem:[%s7 + $0xc8] sm:$0xff]
  %v2678 = vld [vmem:[%s7 + $0xd0] sm:$0xff]
  %v2679 = vld [vmem:[%s7 + $0xd8] sm:$0xff]
  %v2680 = vld [vmem:[%s7 + $0xe0] sm:$0xff]
  %v2681 = vld [vmem:[%s7 + $0xe8] sm:$0xff]
  %v2682 = vld [vmem:[%s7 + $0xf0] sm:$0xff]
  %v2683 = vld [vmem:[%s7 + $0xf8] sm:$0xff]
  %v2684 = vld [vmem:[%s7 + $0x100] sm:$0xff]
  %v2685 = vld [vmem:[%s7 + $0x108] sm:$0xff]
  %v2686 = vld [vmem:[%s7 + $0x110] sm:$0xff]
  %v2687 = vld [vmem:[%s7 + $0x118] sm:$0xff]
  %v2688 = vld [vmem:[%s7 + $0x120] sm:$0xff]
  %v2689 = vld [vmem:[%s7 + $0x128] sm:$0xff]
  %v2690 = vld [vmem:[%s7 + $0x130] sm:$0xff]
  %v2691 = vld [vmem:[%s7 + $0x138] sm:$0xff]
  %v2692 = vld [vmem:[%s7 + $0x140] sm:$0xff]
  %v2693 = vld [vmem:[%s7 + $0x148] sm:$0xff]
  %v2694 = vld [vmem:[%s7 + $0x150] sm:$0xff]
  %v2695 = vld [vmem:[%s7 + $0x158] sm:$0xff]
  %v2696 = vld [vmem:[%s7 + $0x160] sm:$0xff]
  %v2697 = vld [vmem:[%s7 + $0x168] sm:$0xff]
  %v2698 = vld [vmem:[%s7 + $0x170] sm:$0xff]
  %v2699 = vld [vmem:[%s7 + $0x178] sm:$0xff]
  %v2700 = vld [vmem:[%s7 + $0x180] sm:$0xff]
  %v2701 = vld [vmem:[%s7 + $0x188] sm:$0xff]
  %v2702 = vld [vmem:[%s7 + $0x190] sm:$0xff]
  %v2703 = vld [vmem:[%s7 + $0x198] sm:$0xff]
  %v2704 = vld [vmem:[%s7 + $0x1a0] sm:$0xff]
  %v2705 = vld [vmem:[%s7 + $0x1a8] sm:$0xff]
  %v2706 = vld [vmem:[%s7 + $0x1b0] sm:$0xff]
  %v2707 = vld [vmem:[%s7 + $0x1b8] sm:$0xff]
  %v2708 = vld [vmem:[%s7 + $0x1c0] sm:$0xff]
  %v2709 = vld [vmem:[%s7 + $0x1c8] sm:$0xff]
  %v2710 = vld [vmem:[%s7 + $0x1d0] sm:$0xff]
  %v2711 = vld [vmem:[%s7 + $0x1d8] sm:$0xff]
  %v2712 = vld [vmem:[%s7 + $0x1e0] sm:$0xff]
  %v2713 = vld [vmem:[%s7 + $0x1e8] sm:$0xff]
  %v2714 = vld [vmem:[%s7 + $0x1f0] sm:$0xff]
  %v2715 = vld [vmem:[%s7 + $0x1f8] sm:$0xff]
  %v2716 = vld [vmem:[%s7 + $0x200] sm:$0xff]
  %v2717 = vld [vmem:[%s7 + $0x208] sm:$0xff]
  %v2718 = vld [vmem:[%s7 + $0x210] sm:$0xff]
  %v2719 = vld [vmem:[%s7 + $0x218] sm:$0xff]
  %v2720 = vld [vmem:[%s7 + $0x220] sm:$0xff]
  %v2721 = vld [vmem:[%s7 + $0x228] sm:$0xff]
  %v2722 = vld [vmem:[%s7 + $0x230] sm:$0xff]
  %v2723 = vld [vmem:[%s7 + $0x238] sm:$0xff]
  %v2724 = vld [vmem:[%s7 + $0x240] sm:$0xff]
  %v2725 = vld [vmem:[%s7 + $0x248] sm:$0xff]
  %v2726 = vld [vmem:[%s7 + $0x250] sm:$0xff]
  %v2727 = vld [vmem:[%s8] sm:$0xff]
  %v2728 = vld [vmem:[%s8 + $0x8] sm:$0xff]
  %v2729 = vld [vmem:[%s8 + $0x10] sm:$0xff]
  %v2730 = vld [vmem:[%s8 + $0x18] sm:$0xff]
  %v2731 = vld [vmem:[%s8 + $0x20] sm:$0xff]
  %v2732 = vld [vmem:[%s8 + $0x28] sm:$0xff]
  %v2733 = vld [vmem:[%s8 + $0x30] sm:$0xff]
  %v2734 = vld [vmem:[%s8 + $0x38] sm:$0xff]
  %v2735 = vld [vmem:[%s8 + $0x40] sm:$0xff]
  %v2736 = vld [vmem:[%s8 + $0x48] sm:$0xff]
  %v2737 = vld [vmem:[%s8 + $0x50] sm:$0xff]
  %v2738 = vld [vmem:[%s8 + $0x58] sm:$0xff]
  %v2739 = vld [vmem:[%s8 + $0x60] sm:$0xff]
  %v2740 = vld [vmem:[%s8 + $0x68] sm:$0xff]
  %v2741 = vld [vmem:[%s8 + $0x70] sm:$0xff]
  %2743 = vset.pattern.permute.xlu0 0
  %2744 = vperm.xlu0 %2743, %v2727
  %v2745 = vpop.permute.xlu0 %2744
  %2748 = vset.pattern.permute.xlu0 0
  %2749 = vperm.xlu0 %2748, %v2728
  %v2750 = vpop.permute.xlu0 %2749
  %2753 = vset.pattern.permute.xlu0 0
  %2754 = vperm.xlu0 %2753, %v2729
  %v2755 = vpop.permute.xlu0 %2754
  %2758 = vset.pattern.permute.xlu0 0
  %2759 = vperm.xlu0 %2758, %v2730
  %v2760 = vpop.permute.xlu0 %2759
  %2763 = vset.pattern.permute.xlu0 0
  %2764 = vperm.xlu0 %2763, %v2731
  %v2765 = vpop.permute.xlu0 %2764
  %2768 = vset.pattern.permute.xlu0 0
  %2769 = vperm.xlu0 %2768, %v2732
  %v2770 = vpop.permute.xlu0 %2769
  %2773 = vset.pattern.permute.xlu0 0
  %2774 = vperm.xlu0 %2773, %v2733
  %v2775 = vpop.permute.xlu0 %2774
  %2778 = vset.pattern.permute.xlu0 0
  %2779 = vperm.xlu0 %2778, %v2734
  %v2780 = vpop.permute.xlu0 %2779
  %2783 = vset.pattern.permute.xlu0 0
  %2784 = vperm.xlu0 %2783, %v2735
  %v2785 = vpop.permute.xlu0 %2784
  %2788 = vset.pattern.permute.xlu0 0
  %2789 = vperm.xlu0 %2788, %v2736
  %v2790 = vpop.permute.xlu0 %2789
  %2793 = vset.pattern.permute.xlu0 0
  %2794 = vperm.xlu0 %2793, %v2737
  %v2795 = vpop.permute.xlu0 %2794
  %2798 = vset.pattern.permute.xlu0 0
  %2799 = vperm.xlu0 %2798, %v2738
  %v2800 = vpop.permute.xlu0 %2799
  %2803 = vset.pattern.permute.xlu0 0
  %2804 = vperm.xlu0 %2803, %v2739
  %v2805 = vpop.permute.xlu0 %2804
  %2808 = vset.pattern.permute.xlu0 0
  %2809 = vperm.xlu0 %2808, %v2740
  %v2810 = vpop.permute.xlu0 %2809
  %2813 = vset.pattern.permute.xlu0 0
  %2814 = vperm.xlu0 %2813, %v2741
  %v2815 = vpop.permute.xlu0 %2814
  %2817 = vmatprep.subr.mxu0 0.0
  %2818 = vmatpush1.msra.mxu0 %v2572
  %2819 = vmatprep.subr.mxu0 0.0
  %2820 = vmatpush1.msra.mxu0 %v2573
  %2821 = vmatprep.subr.mxu0 0.0
  %2822 = vmatpush1.msra.mxu0 %v2574
  %2823 = vmatprep.subr.mxu0 0.0
  %2824 = vmatpush1.msra.mxu0 %v2575
  %2825 = vmatprep.subr.mxu0 0.0
  %2826 = vmatpush1.msra.mxu0 %v2576
  %2827 = vmatprep.subr.mxu0 0.0
  %2828 = vmatpush1.msra.mxu0 %v2577
  %2829 = vmatprep.subr.mxu0 0.0
  %2830 = vmatpush1.msra.mxu0 %v2578
  %2831 = vmatprep.subr.mxu0 0.0
  %2832 = vmatpush1.msra.mxu0 %v2579
  %2833 = vmatprep.subr.mxu0 0.0
  %2834 = vmatpush1.msra.mxu0 %v2580
  %2835 = vmatprep.subr.mxu0 0.0
  %2836 = vmatpush1.msra.mxu0 %v2581
  %2837 = vmatprep.subr.mxu0 0.0
  %2838 = vmatpush1.msra.mxu0 %v2582
  %2839 = vmatprep.subr.mxu0 0.0
  %2840 = vmatpush1.msra.mxu0 %v2583
  %2841 = vmatprep.subr.mxu0 0.0
  %2842 = vmatpush1.msra.mxu0 %v2584
  %2843 = vmatprep.subr.mxu0 0.0
  %2844 = vmatpush1.msra.mxu0 %v2585
  %2845 = vmatprep.subr.mxu0 0.0
  %2846 = vmatpush1.msra.mxu0 %v2586
  %2847 = vmatprep.subr.mxu0 0.0
  %2848 = vmatpush1.msra.mxu0 %v2587
  %2849 = vmatprep.subr.mxu0 0.0
  %2850 = vmatpush1.msra.mxu0 %v2588
  %2851 = vmatprep.subr.mxu0 0.0
  %2852 = vmatpush1.msra.mxu0 %v2589
  %2853 = vmatprep.subr.mxu0 0.0
  %2854 = vmatpush1.msra.mxu0 %v2590
  %2855 = vmatprep.subr.mxu0 0.0
  %2856 = vmatpush1.msra.mxu0 %v2591
  %2857 = vmatprep.subr.mxu0 0.0
  %2858 = vmatpush1.msra.mxu0 %v2592
  %2859 = vmatprep.subr.mxu0 0.0
  %2860 = vmatpush1.msra.mxu0 %v2593
  %2861 = vmatprep.subr.mxu0 0.0
  %2862 = vmatpush1.msra.mxu0 %v2594
  %2863 = vmatprep.subr.mxu0 0.0
  %2864 = vmatpush1.msra.mxu0 %v2595
  %2865 = vmatprep.subr.mxu0 0.0
  %2866 = vmatpush1.msra.mxu0 %v2596
  %2867 = vmatprep.subr.mxu0 0.0
  %2868 = vmatpush1.msra.mxu0 %v2597
  %2869 = vmatprep.subr.mxu0 0.0
  %2870 = vmatpush1.msra.mxu0 %v2598
  %2871 = vmatprep.subr.mxu0 0.0
  %2872 = vmatpush1.msra.mxu0 %v2599
  %2873 = vmatprep.subr.mxu0 0.0
  %2874 = vmatpush1.msra.mxu0 %v2600
  %2875 = vmatprep.subr.mxu0 0.0
  %2876 = vmatpush1.msra.mxu0 %v2601
  %2877 = vmatprep.subr.mxu0 0.0
  %2878 = vmatpush1.msra.mxu0 %v2602
  %2879 = vmatprep.subr.mxu0 0.0
  %2880 = vmatpush1.msra.mxu0 %v2603
  %2881 = vmatprep.mubr.f32.mxu0 %v2653
  %2882 = vmatmul.mubr.f32.gmra.mrb[0].mxu0 %v2652
  %v2883 = vpop.f32.mrb[0].mxu0
  %v2884 = vadd.f32 %v2745, %v2883
  %v2885 = vpop.f32.mrb[0].mxu0
  %2886 = vmatprep.mubr.f32.mxu0 %v2658
  %2887 = vmatmul.mubr.f32.gmra.mrb[0].mxu0 %v2657
  %v2888 = vpop.f32.mrb[0].mxu0
  %v2889 = vadd.f32 %v2750, %v2888
  %v2890 = vpop.f32.mrb[0].mxu0
  %2891 = vmatprep.mubr.f32.mxu0 %v2663
  %2892 = vmatmul.mubr.f32.gmra.mrb[0].mxu0 %v2662
  %v2893 = vpop.f32.mrb[0].mxu0
  %v2894 = vadd.f32 %v2755, %v2893
  %v2895 = vpop.f32.mrb[0].mxu0
  %2896 = vmatprep.mubr.f32.mxu0 %v2668
  %2897 = vmatmul.mubr.f32.gmra.mrb[0].mxu0 %v2667
  %v2898 = vpop.f32.mrb[0].mxu0
  %v2899 = vadd.f32 %v2760, %v2898
  %v2900 = vpop.f32.mrb[0].mxu0
  %2901 = vmatprep.mubr.f32.mxu0 %v2673
  %2902 = vmatmul.mubr.f32.gmra.mrb[0].mxu0 %v2672
  %v2903 = vpop.f32.mrb[0].mxu0
  %v2904 = vadd.f32 %v2765, %v2903
  %v2905 = vpop.f32.mrb[0].mxu0
  %2906 = vmatprep.mubr.f32.mxu0 %v2678
  %2907 = vmatmul.mubr.f32.gmra.mrb[0].mxu0 %v2677
  %v2908 = vpop.f32.mrb[0].mxu0
  %v2909 = vadd.f32 %v2770, %v2908
  %v2910 = vpop.f32.mrb[0].mxu0
  %2911 = vmatprep.mubr.f32.mxu0 %v2683
  %2912 = vmatmul.mubr.f32.gmra.mrb[0].mxu0 %v2682
  %v2913 = vpop.f32.mrb[0].mxu0
  %v2914 = vadd.f32 %v2775, %v2913
  %v2915 = vpop.f32.mrb[0].mxu0
  %2916 = vmatprep.mubr.f32.mxu0 %v2688
  %2917 = vmatmul.mubr.f32.gmra.mrb[0].mxu0 %v2687
  %v2918 = vpop.f32.mrb[0].mxu0
  %v2919 = vadd.f32 %v2780, %v2918
  %v2920 = vpop.f32.mrb[0].mxu0
  %2921 = vmatprep.mubr.f32.mxu0 %v2693
  %2922 = vmatmul.mubr.f32.gmra.mrb[0].mxu0 %v2692
  %v2923 = vpop.f32.mrb[0].mxu0
  %v2924 = vadd.f32 %v2785, %v2923
  %v2925 = vpop.f32.mrb[0].mxu0
  %2926 = vmatprep.mubr.f32.mxu0 %v2698
  %2927 = vmatmul.mubr.f32.gmra.mrb[0].mxu0 %v2697
  %v2928 = vpop.f32.mrb[0].mxu0
  %v2929 = vadd.f32 %v2790, %v2928
  %v2930 = vpop.f32.mrb[0].mxu0
  %2931 = vmatprep.mubr.f32.mxu0 %v2703
  %2932 = vmatmul.mubr.f32.gmra.mrb[0].mxu0 %v2702
  %v2933 = vpop.f32.mrb[0].mxu0
  %v2934 = vadd.f32 %v2795, %v2933
  %v2935 = vpop.f32.mrb[0].mxu0
  %2936 = vmatprep.mubr.f32.mxu0 %v2708
  %2937 = vmatmul.mubr.f32.gmra.mrb[0].mxu0 %v2707
  %v2938 = vpop.f32.mrb[0].mxu0
  %v2939 = vadd.f32 %v2800, %v2938
  %v2940 = vpop.f32.mrb[0].mxu0
  %2941 = vmatprep.mubr.f32.mxu0 %v2713
  %2942 = vmatmul.mubr.f32.gmra.mrb[0].mxu0 %v2712
  %v2943 = vpop.f32.mrb[0].mxu0
  %v2944 = vadd.f32 %v2805, %v2943
  %v2945 = vpop.f32.mrb[0].mxu0
  %2946 = vmatprep.mubr.f32.mxu0 %v2718
  %2947 = vmatmul.mubr.f32.gmra.mrb[0].mxu0 %v2717
  %v2948 = vpop.f32.mrb[0].mxu0
  %v2949 = vadd.f32 %v2810, %v2948
  %v2950 = vpop.f32.mrb[0].mxu0
  %2951 = vmatprep.mubr.f32.mxu0 %v2723
  %2952 = vmatmul.mubr.f32.gmra.mrb[0].mxu0 %v2722
  %v2953 = vpop.f32.mrb[0].mxu0
  %v2954 = vadd.f32 %v2815, %v2953
  %v2955 = vpop.f32.mrb[0].mxu0
  %2956 = vdwg.mxu0
  %2957 = vmatprep.subr.mxu0 0.0
  %2958 = vmatpush1.msra.mxu0 %v2604
  %2959 = vmatprep.subr.mxu0 0.0
  %2960 = vmatpush1.msra.mxu0 %v2605
  %2961 = vmatprep.subr.mxu0 0.0
  %2962 = vmatpush1.msra.mxu0 %v2606
  %2963 = vmatprep.subr.mxu0 0.0
  %2964 = vmatpush1.msra.mxu0 %v2607
  %2965 = vmatprep.subr.mxu0 0.0
  %2966 = vmatpush1.msra.mxu0 %v2608
  %2967 = vmatprep.subr.mxu0 0.0
  %2968 = vmatpush1.msra.mxu0 %v2609
  %2969 = vmatprep.subr.mxu0 0.0
  %2970 = vmatpush1.msra.mxu0 %v2610
  %2971 = vmatprep.subr.mxu0 0.0
  %2972 = vmatpush1.msra.mxu0 %v2611
  %2973 = vmatprep.subr.mxu0 0.0
  %2974 = vmatpush1.msra.mxu0 %v2612
  %2975 = vmatprep.subr.mxu0 0.0
  %2976 = vmatpush1.msra.mxu0 %v2613
  %2977 = vmatprep.subr.mxu0 0.0
  %2978 = vmatpush1.msra.mxu0 %v2614
  %2979 = vmatprep.subr.mxu0 0.0
  %2980 = vmatpush1.msra.mxu0 %v2615
  %2981 = vmatprep.subr.mxu0 0.0
  %2982 = vmatpush1.msra.mxu0 %v2616
  %2983 = vmatprep.subr.mxu0 0.0
  %2984 = vmatpush1.msra.mxu0 %v2617
  %2985 = vmatprep.subr.mxu0 0.0
  %2986 = vmatpush1.msra.mxu0 %v2618
  %2987 = vmatprep.subr.mxu0 0.0
  %2988 = vmatpush1.msra.mxu0 %v2619
  %2989 = vmatprep.subr.mxu0 0.0
  %2990 = vmatpush1.msra.mxu0 %v2620
  %2991 = vmatprep.subr.mxu0 0.0
  %2992 = vmatpush1.msra.mxu0 %v2621
  %2993 = vmatprep.subr.mxu0 0.0
  %2994 = vmatpush1.msra.mxu0 %v2622
  %2995 = vmatprep.subr.mxu0 0.0
  %2996 = vmatpush1.msra.mxu0 %v2623
  %2997 = vmatprep.subr.mxu0 0.0
  %2998 = vmatpush1.msra.mxu0 %v2624
  %2999 = vmatprep.subr.mxu0 0.0
  %3000 = vmatpush1.msra.mxu0 %v2625
  %3001 = vmatprep.subr.mxu0 0.0
  %3002 = vmatpush1.msra.mxu0 %v2626
  %3003 = vmatprep.subr.mxu0 0.0
  %3004 = vmatpush1.msra.mxu0 %v2627
  %3005 = vmatprep.subr.mxu0 0.0
  %3006 = vmatpush1.msra.mxu0 %v2628
  %3007 = vmatprep.subr.mxu0 0.0
  %3008 = vmatpush1.msra.mxu0 %v2629
  %3009 = vmatprep.subr.mxu0 0.0
  %3010 = vmatpush1.msra.mxu0 %v2630
  %3011 = vmatprep.subr.mxu0 0.0
  %3012 = vmatpush1.msra.mxu0 %v2631
  %3013 = vmatprep.subr.mxu0 0.0
  %3014 = vmatpush1.msra.mxu0 %v2632
  %3015 = vmatprep.subr.mxu0 0.0
  %3016 = vmatpush1.msra.mxu0 %v2633
  %3017 = vmatprep.subr.mxu0 0.0
  %3018 = vmatpush1.msra.mxu0 %v2634
  %3019 = vmatprep.subr.mxu0 0.0
  %3020 = vmatpush1.msra.mxu0 %v2635
  %3021 = vmatprep.mubr.f32.mxu0 %v2655
  %3022 = vmatmul.mubr.f32.gmra.mrb[0].mxu0 %v2654
  %v3023 = vpop.f32.mrb[0].mxu0
  %v3024 = vadd.f32 %v2884, %v3023
  %v3025 = vpop.f32.mrb[0].mxu0
  %3026 = vmatprep.mubr.f32.mxu0 %v2660
  %3027 = vmatmul.mubr.f32.gmra.mrb[0].mxu0 %v2659
  %v3028 = vpop.f32.mrb[0].mxu0
  %v3029 = vadd.f32 %v2889, %v3028
  %v3030 = vpop.f32.mrb[0].mxu0
  %3031 = vmatprep.mubr.f32.mxu0 %v2665
  %3032 = vmatmul.mubr.f32.gmra.mrb[0].mxu0 %v2664
  %v3033 = vpop.f32.mrb[0].mxu0
  %v3034 = vadd.f32 %v2894, %v3033
  %v3035 = vpop.f32.mrb[0].mxu0
  %3036 = vmatprep.mubr.f32.mxu0 %v2670
  %3037 = vmatmul.mubr.f32.gmra.mrb[0].mxu0 %v2669
  %v3038 = vpop.f32.mrb[0].mxu0
  %v3039 = vadd.f32 %v2899, %v3038
  %v3040 = vpop.f32.mrb[0].mxu0
  %3041 = vmatprep.mubr.f32.mxu0 %v2675
  %3042 = vmatmul.mubr.f32.gmra.mrb[0].mxu0 %v2674
  %v3043 = vpop.f32.mrb[0].mxu0
  %v3044 = vadd.f32 %v2904, %v3043
  %v3045 = vpop.f32.mrb[0].mxu0
  %3046 = vmatprep.mubr.f32.mxu0 %v2680
  %3047 = vmatmul.mubr.f32.gmra.mrb[0].mxu0 %v2679
  %v3048 = vpop.f32.mrb[0].mxu0
  %v3049 = vadd.f32 %v2909, %v3048
  %v3050 = vpop.f32.mrb[0].mxu0
  %3051 = vmatprep.mubr.f32.mxu0 %v2685
  %3052 = vmatmul.mubr.f32.gmra.mrb[0].mxu0 %v2684
  %v3053 = vpop.f32.mrb[0].mxu0
  %v3054 = vadd.f32 %v2914, %v3053
  %v3055 = vpop.f32.mrb[0].mxu0
  %3056 = vmatprep.mubr.f32.mxu0 %v2690
  %3057 = vmatmul.mubr.f32.gmra.mrb[0].mxu0 %v2689
  %v3058 = vpop.f32.mrb[0].mxu0
  %v3059 = vadd.f32 %v2919, %v3058
  %v3060 = vpop.f32.mrb[0].mxu0
  %3061 = vmatprep.mubr.f32.mxu0 %v2695
  %3062 = vmatmul.mubr.f32.gmra.mrb[0].mxu0 %v2694
  %v3063 = vpop.f32.mrb[0].mxu0
  %v3064 = vadd.f32 %v2924, %v3063
  %v3065 = vpop.f32.mrb[0].mxu0
  %3066 = vmatprep.mubr.f32.mxu0 %v2700
  %3067 = vmatmul.mubr.f32.gmra.mrb[0].mxu0 %v2699
  %v3068 = vpop.f32.mrb[0].mxu0
  %v3069 = vadd.f32 %v2929, %v3068
  %v3070 = vpop.f32.mrb[0].mxu0
  %3071 = vmatprep.mubr.f32.mxu0 %v2705
  %3072 = vmatmul.mubr.f32.gmra.mrb[0].mxu0 %v2704
  %v3073 = vpop.f32.mrb[0].mxu0
  %v3074 = vadd.f32 %v2934, %v3073
  %v3075 = vpop.f32.mrb[0].mxu0
  %3076 = vmatprep.mubr.f32.mxu0 %v2710
  %3077 = vmatmul.mubr.f32.gmra.mrb[0].mxu0 %v2709
  %v3078 = vpop.f32.mrb[0].mxu0
  %v3079 = vadd.f32 %v2939, %v3078
  %v3080 = vpop.f32.mrb[0].mxu0
  %3081 = vmatprep.mubr.f32.mxu0 %v2715
  %3082 = vmatmul.mubr.f32.gmra.mrb[0].mxu0 %v2714
  %v3083 = vpop.f32.mrb[0].mxu0
  %v3084 = vadd.f32 %v2944, %v3083
  %v3085 = vpop.f32.mrb[0].mxu0
  %3086 = vmatprep.mubr.f32.mxu0 %v2720
  %3087 = vmatmul.mubr.f32.gmra.mrb[0].mxu0 %v2719
  %v3088 = vpop.f32.mrb[0].mxu0
  %v3089 = vadd.f32 %v2949, %v3088
  %v3090 = vpop.f32.mrb[0].mxu0
  %3091 = vmatprep.mubr.f32.mxu0 %v2725
  %3092 = vmatmul.mubr.f32.gmra.mrb[0].mxu0 %v2724
  %v3093 = vpop.f32.mrb[0].mxu0
  %v3094 = vadd.f32 %v2954, %v3093
  %v3095 = vpop.f32.mrb[0].mxu0
  %3096 = vdwg.mxu0
  %3097 = vmatprep.subr.mxu0 0.0
  %3098 = vmatpush1.msra.mxu0 %v2636
  %3099 = vmatprep.subr.mxu0 0.0
  %3100 = vmatpush1.msra.mxu0 %v2637
  %3101 = vmatprep.subr.mxu0 0.0
  %3102 = vmatpush1.msra.mxu0 %v2638
  %3103 = vmatprep.subr.mxu0 0.0
  %3104 = vmatpush1.msra.mxu0 %v2639
  %3105 = vmatprep.subr.mxu0 0.0
  %3106 = vmatpush1.msra.mxu0 %v2640
  %3107 = vmatprep.subr.mxu0 0.0
  %3108 = vmatpush1.msra.mxu0 %v2641
  %3109 = vmatprep.subr.mxu0 0.0
  %3110 = vmatpush1.msra.mxu0 %v2642
  %3111 = vmatprep.subr.mxu0 0.0
  %3112 = vmatpush1.msra.mxu0 %v2643
  %3113 = vmatprep.subr.mxu0 0.0
  %3114 = vmatpush1.msra.mxu0 %v2644
  %3115 = vmatprep.subr.mxu0 0.0
  %3116 = vmatpush1.msra.mxu0 %v2645
  %3117 = vmatprep.subr.mxu0 0.0
  %3118 = vmatpush1.msra.mxu0 %v2646
  %3119 = vmatprep.subr.mxu0 0.0
  %3120 = vmatpush1.msra.mxu0 %v2647
  %3121 = vmatprep.subr.mxu0 0.0
  %3122 = vmatpush1.msra.mxu0 %v2648
  %3123 = vmatprep.subr.mxu0 0.0
  %3124 = vmatpush1.msra.mxu0 %v2649
  %3125 = vmatprep.subr.mxu0 0.0
  %3126 = vmatpush1.msra.mxu0 %v2650
  %3127 = vmatprep.subr.mxu0 0.0
  %3128 = vmatpush1.msra.mxu0 %v2651
  %3129 = vmatprep.subr.mxu0 0.0
  %3130 = vmatpush1.msra.mxu0 0.0
  %3131 = vmatprep.subr.mxu0 0.0
  %3132 = vmatpush1.msra.mxu0 0.0
  %3133 = vmatprep.subr.mxu0 0.0
  %3134 = vmatpush1.msra.mxu0 0.0
  %3135 = vmatprep.subr.mxu0 0.0
  %3136 = vmatpush1.msra.mxu0 0.0
  %3137 = vmatprep.subr.mxu0 0.0
  %3138 = vmatpush1.msra.mxu0 0.0
  %3139 = vmatprep.subr.mxu0 0.0
  %3140 = vmatpush1.msra.mxu0 0.0
  %3141 = vmatprep.subr.mxu0 0.0
  %3142 = vmatpush1.msra.mxu0 0.0
  %3143 = vmatprep.subr.mxu0 0.0
  %3144 = vmatpush1.msra.mxu0 0.0
  %3145 = vmatprep.subr.mxu0 0.0
  %3146 = vmatpush1.msra.mxu0 0.0
  %3147 = vmatprep.subr.mxu0 0.0
  %3148 = vmatpush1.msra.mxu0 0.0
  %3149 = vmatprep.subr.mxu0 0.0
  %3150 = vmatpush1.msra.mxu0 0.0
  %3151 = vmatprep.subr.mxu0 0.0
  %3152 = vmatpush1.msra.mxu0 0.0
  %3153 = vmatprep.subr.mxu0 0.0
  %3154 = vmatpush1.msra.mxu0 0.0
  %3155 = vmatprep.subr.mxu0 0.0
  %3156 = vmatpush1.msra.mxu0 0.0
  %3157 = vmatprep.subr.mxu0 0.0
  %3158 = vmatpush1.msra.mxu0 0.0
  %3159 = vmatprep.subr.mxu0 0.0
  %3160 = vmatpush1.msra.mxu0 0.0
  %3161 = vmatprep.mubr.f32.mxu0 0.0
  %3162 = vmatmul.mubr.f32.gmra.mrb[0].mxu0 %v2656
  %v3163 = vpop.f32.mrb[0].mxu0
  %v3164 = vadd.f32 %v3024, %v3163
  %v3165 = vpop.f32.mrb[0].mxu0
  %3166 = vmatprep.mubr.f32.mxu0 0.0
  %3167 = vmatmul.mubr.f32.gmra.mrb[0].mxu0 %v2661
  %v3168 = vpop.f32.mrb[0].mxu0
  %v3169 = vadd.f32 %v3029, %v3168
  %v3170 = vpop.f32.mrb[0].mxu0
  %3171 = vmatprep.mubr.f32.mxu0 0.0
  %3172 = vmatmul.mubr.f32.gmra.mrb[0].mxu0 %v2666
  %v3173 = vpop.f32.mrb[0].mxu0
  %v3174 = vadd.f32 %v3034, %v3173
  %v3175 = vpop.f32.mrb[0].mxu0
  %3176 = vmatprep.mubr.f32.mxu0 0.0
  %3177 = vmatmul.mubr.f32.gmra.mrb[0].mxu0 %v2671
  %v3178 = vpop.f32.mrb[0].mxu0
  %v3179 = vadd.f32 %v3039, %v3178
  %v3180 = vpop.f32.mrb[0].mxu0
  %3181 = vmatprep.mubr.f32.mxu0 0.0
  %3182 = vmatmul.mubr.f32.gmra.mrb[0].mxu0 %v2676
  %v3183 = vpop.f32.mrb[0].mxu0
  %v3184 = vadd.f32 %v3044, %v3183
  %v3185 = vpop.f32.mrb[0].mxu0
  %3186 = vmatprep.mubr.f32.mxu0 0.0
  %3187 = vmatmul.mubr.f32.gmra.mrb[0].mxu0 %v2681
  %v3188 = vpop.f32.mrb[0].mxu0
  %v3189 = vadd.f32 %v3049, %v3188
  %v3190 = vpop.f32.mrb[0].mxu0
  %3191 = vmatprep.mubr.f32.mxu0 0.0
  %3192 = vmatmul.mubr.f32.gmra.mrb[0].mxu0 %v2686
  %v3193 = vpop.f32.mrb[0].mxu0
  %v3194 = vadd.f32 %v3054, %v3193
  %v3195 = vpop.f32.mrb[0].mxu0
  %3196 = vmatprep.mubr.f32.mxu0 0.0
  %3197 = vmatmul.mubr.f32.gmra.mrb[0].mxu0 %v2691
  %v3198 = vpop.f32.mrb[0].mxu0
  %v3199 = vadd.f32 %v3059, %v3198
  %v3200 = vpop.f32.mrb[0].mxu0
  %3201 = vmatprep.mubr.f32.mxu0 0.0
  %3202 = vmatmul.mubr.f32.gmra.mrb[0].mxu0 %v2696
  %v3203 = vpop.f32.mrb[0].mxu0
  %v3204 = vadd.f32 %v3064, %v3203
  %v3205 = vpop.f32.mrb[0].mxu0
  %3206 = vmatprep.mubr.f32.mxu0 0.0
  %3207 = vmatmul.mubr.f32.gmra.mrb[0].mxu0 %v2701
  %v3208 = vpop.f32.mrb[0].mxu0
  %v3209 = vadd.f32 %v3069, %v3208
  %v3210 = vpop.f32.mrb[0].mxu0
  %3211 = vmatprep.mubr.f32.mxu0 0.0
  %3212 = vmatmul.mubr.f32.gmra.mrb[0].mxu0 %v2706
  %v3213 = vpop.f32.mrb[0].mxu0
  %v3214 = vadd.f32 %v3074, %v3213
  %v3215 = vpop.f32.mrb[0].mxu0
  %3216 = vmatprep.mubr.f32.mxu0 0.0
  %3217 = vmatmul.mubr.f32.gmra.mrb[0].mxu0 %v2711
  %v3218 = vpop.f32.mrb[0].mxu0
  %v3219 = vadd.f32 %v3079, %v3218
  %v3220 = vpop.f32.mrb[0].mxu0
  %3221 = vmatprep.mubr.f32.mxu0 0.0
  %3222 = vmatmul.mubr.f32.gmra.mrb[0].mxu0 %v2716
  %v3223 = vpop.f32.mrb[0].mxu0
  %v3224 = vadd.f32 %v3084, %v3223
  %v3225 = vpop.f32.mrb[0].mxu0
  %3226 = vmatprep.mubr.f32.mxu0 0.0
  %3227 = vmatmul.mubr.f32.gmra.mrb[0].mxu0 %v2721
  %v3228 = vpop.f32.mrb[0].mxu0
  %v3229 = vadd.f32 %v3089, %v3228
  %v3230 = vpop.f32.mrb[0].mxu0
  %3231 = vmatprep.mubr.f32.mxu0 0.0
  %3232 = vmatmul.mubr.f32.gmra.mrb[0].mxu0 %v2726
  %v3233 = vpop.f32.mrb[0].mxu0
  %v3234 = vadd.f32 %v3094, %v3233
  %v3235 = vpop.f32.mrb[0].mxu0
  %3236 = vdwg.mxu0
  %v3237 = vmax.f32 %v3164, 0.0
  %v3238 = vmax.f32 %v3169, 0.0
  %v3239 = vmax.f32 %v3174, 0.0
  %v3240 = vmax.f32 %v3179, 0.0
  %v3241 = vmax.f32 %v3184, 0.0
  %v3242 = vmax.f32 %v3189, 0.0
  %v3243 = vmax.f32 %v3194, 0.0
  %v3244 = vmax.f32 %v3199, 0.0
  %v3245 = vmax.f32 %v3204, 0.0
  %v3246 = vmax.f32 %v3209, 0.0
  %v3247 = vmax.f32 %v3214, 0.0
  %v3248 = vmax.f32 %v3219, 0.0
  %v3249 = vmax.f32 %v3224, 0.0
  %v3250 = vmax.f32 %v3229, 0.0
  %v3251 = vmax.f32 %v3234, 0.0
  %v3252 = vld [vmem:[%s9] sm:$0xff]
  %v3253 = vld [vmem:[%s9 + $0x8] sm:$0xff]
  %v3254 = vld [vmem:[%s9 + $0x10] sm:$0xff]
  %v3255 = vld [vmem:[%s9 + $0x18] sm:$0xff]
  %v3256 = vld [vmem:[%s9 + $0x20] sm:$0xff]
  %v3257 = vld [vmem:[%s9 + $0x28] sm:$0xff]
  %v3258 = vld [vmem:[%s9 + $0x30] sm:$0xff]
  %v3259 = vld [vmem:[%s9 + $0x38] sm:$0xff]
  %v3260 = vld [vmem:[%s9 + $0x40] sm:$0xff]
  %v3261 = vld [vmem:[%s9 + $0x48] sm:$0xff]
  %v3262 = vld [vmem:[%s9 + $0x50] sm:$0xf]
  %v3263 = vld [vmem:[%s10] sm:$0xff]
  %v3264 = vld [vmem:[%s10 + $0x8] sm:$0xff]
  %v3265 = vld [vmem:[%s10 + $0x10] sm:$0xff]
  %v3266 = vld [vmem:[%s10 + $0x18] sm:$0xff]
  %v3267 = vld [vmem:[%s10 + $0x20] sm:$0xff]
  %v3268 = vld [vmem:[%s10 + $0x28] sm:$0xff]
  %v3269 = vld [vmem:[%s10 + $0x30] sm:$0xff]
  %v3270 = vld [vmem:[%s10 + $0x38] sm:$0xff]
  %v3271 = vld [vmem:[%s10 + $0x40] sm:$0xff]
  %v3272 = vld [vmem:[%s10 + $0x48] sm:$0xff]
  %v3273 = vld [vmem:[%s10 + $0x50] sm:$0xf]
  %3275 = vset.pattern.permute.xlu0 0
  %3276 = vperm.xlu0 %3275, %v3263
  %v3277 = vpop.permute.xlu0 %3276
  %3280 = vset.pattern.permute.xlu0 0
  %3281 = vperm.xlu0 %3280, %v3264
  %v3282 = vpop.permute.xlu0 %3281
  %3285 = vset.pattern.permute.xlu0 0
  %3286 = vperm.xlu0 %3285, %v3265
  %v3287 = vpop.permute.xlu0 %3286
  %3290 = vset.pattern.permute.xlu0 0
  %3291 = vperm.xlu0 %3290, %v3266
  %v3292 = vpop.permute.xlu0 %3291
  %3295 = vset.pattern.permute.xlu0 0
  %3296 = vperm.xlu0 %3295, %v3267
  %v3297 = vpop.permute.xlu0 %3296
  %3300 = vset.pattern.permute.xlu0 0
  %3301 = vperm.xlu0 %3300, %v3268
  %v3302 = vpop.permute.xlu0 %3301
  %3305 = vset.pattern.permute.xlu0 0
  %3306 = vperm.xlu0 %3305, %v3269
  %v3307 = vpop.permute.xlu0 %3306
  %3310 = vset.pattern.permute.xlu0 0
  %3311 = vperm.xlu0 %3310, %v3270
  %v3312 = vpop.permute.xlu0 %3311
  %3315 = vset.pattern.permute.xlu0 0
  %3316 = vperm.xlu0 %3315, %v3271
  %v3317 = vpop.permute.xlu0 %3316
  %3320 = vset.pattern.permute.xlu0 0
  %3321 = vperm.xlu0 %3320, %v3272
  %v3322 = vpop.permute.xlu0 %3321
  %3325 = vset.pattern.permute.xlu0 0
  %3326 = vperm.xlu0 %3325, %v3273
  %v3327 = vpop.permute.xlu0 %3326
  %vm3329 = vcmask 982016
  %v3331 = vsel %vm3329, %v3252, 0
  %v3334 = vsel %vm3329, %v3253, 0
  %v3337 = vsel %vm3329, %v3254, 0
  %v3340 = vsel %vm3329, %v3255, 0
  %v3343 = vsel %vm3329, %v3256, 0
  %v3346 = vsel %vm3329, %v3257, 0
  %v3349 = vsel %vm3329, %v3258, 0
  %v3352 = vsel %vm3329, %v3259, 0
  %v3355 = vsel %vm3329, %v3260, 0
  %v3358 = vsel %vm3329, %v3261, 0
  %v3361 = vsel %vm3329, %v3262, 0
  %3363 = vmatprep.subr.mxu0 0.0
  %3364 = vmatpush1.msra.mxu0 %v3237
  %3365 = vmatprep.subr.mxu0 0.0
  %3366 = vmatpush1.msra.mxu0 %v3238
  %3367 = vmatprep.subr.mxu0 0.0
  %3368 = vmatpush1.msra.mxu0 %v3239
  %3369 = vmatprep.subr.mxu0 0.0
  %3370 = vmatpush1.msra.mxu0 %v3240
  %3371 = vmatprep.subr.mxu0 0.0
  %3372 = vmatpush1.msra.mxu0 %v3241
  %3373 = vmatprep.subr.mxu0 0.0
  %3374 = vmatpush1.msra.mxu0 %v3242
  %3375 = vmatprep.subr.mxu0 0.0
  %3376 = vmatpush1.msra.mxu0 %v3243
  %3377 = vmatprep.subr.mxu0 0.0
  %3378 = vmatpush1.msra.mxu0 %v3244
  %3379 = vmatprep.subr.mxu0 0.0
  %3380 = vmatpush1.msra.mxu0 %v3245
  %3381 = vmatprep.subr.mxu0 0.0
  %3382 = vmatpush1.msra.mxu0 %v3246
  %3383 = vmatprep.subr.mxu0 0.0
  %3384 = vmatpush1.msra.mxu0 %v3247
  %3385 = vmatprep.subr.mxu0 0.0
  %3386 = vmatpush1.msra.mxu0 %v3248
  %3387 = vmatprep.subr.mxu0 0.0
  %3388 = vmatpush1.msra.mxu0 %v3249
  %3389 = vmatprep.subr.mxu0 0.0
  %3390 = vmatpush1.msra.mxu0 %v3250
  %3391 = vmatprep.subr.mxu0 0.0
  %3392 = vmatpush1.msra.mxu0 %v3251
  %3393 = vmatprep.subr.mxu0 0.0
  %3394 = vmatpush1.msra.mxu0 0.0
  %3395 = vmatprep.subr.mxu0 0.0
  %3396 = vmatpush1.msra.mxu0 0.0
  %3397 = vmatprep.subr.mxu0 0.0
  %3398 = vmatpush1.msra.mxu0 0.0
  %3399 = vmatprep.subr.mxu0 0.0
  %3400 = vmatpush1.msra.mxu0 0.0
  %3401 = vmatprep.subr.mxu0 0.0
  %3402 = vmatpush1.msra.mxu0 0.0
  %3403 = vmatprep.subr.mxu0 0.0
  %3404 = vmatpush1.msra.mxu0 0.0
  %3405 = vmatprep.subr.mxu0 0.0
  %3406 = vmatpush1.msra.mxu0 0.0
  %3407 = vmatprep.subr.mxu0 0.0
  %3408 = vmatpush1.msra.mxu0 0.0
  %3409 = vmatprep.subr.mxu0 0.0
  %3410 = vmatpush1.msra.mxu0 0.0
  %3411 = vmatprep.subr.mxu0 0.0
  %3412 = vmatpush1.msra.mxu0 0.0
  %3413 = vmatprep.subr.mxu0 0.0
  %3414 = vmatpush1.msra.mxu0 0.0
  %3415 = vmatprep.subr.mxu0 0.0
  %3416 = vmatpush1.msra.mxu0 0.0
  %3417 = vmatprep.subr.mxu0 0.0
  %3418 = vmatpush1.msra.mxu0 0.0
  %3419 = vmatprep.subr.mxu0 0.0
  %3420 = vmatpush1.msra.mxu0 0.0
  %3421 = vmatprep.subr.mxu0 0.0
  %3422 = vmatpush1.msra.mxu0 0.0
  %3423 = vmatprep.subr.mxu0 0.0
  %3424 = vmatpush1.msra.mxu0 0.0
  %3425 = vmatprep.subr.mxu0 0.0
  %3426 = vmatpush1.msra.mxu0 0.0
  %3427 = vmatprep.mubr.f32.mxu0 0.0
  %3428 = vmatmul.mubr.f32.gmra.mrb[0].mxu0 %v3331
  %v3429 = vpop.f32.mrb[0].mxu0
  %v3430 = vadd.f32 %v3277, %v3429
  %v3431 = vpop.f32.mrb[0].mxu0
  %3432 = vmatprep.mubr.f32.mxu0 0.0
  %3433 = vmatmul.mubr.f32.gmra.mrb[0].mxu0 %v3334
  %v3434 = vpop.f32.mrb[0].mxu0
  %v3435 = vadd.f32 %v3282, %v3434
  %v3436 = vpop.f32.mrb[0].mxu0
  %3437 = vmatprep.mubr.f32.mxu0 0.0
  %3438 = vmatmul.mubr.f32.gmra.mrb[0].mxu0 %v3337
  %v3439 = vpop.f32.mrb[0].mxu0
  %v3440 = vadd.f32 %v3287, %v3439
  %v3441 = vpop.f32.mrb[0].mxu0
  %3442 = vmatprep.mubr.f32.mxu0 0.0
  %3443 = vmatmul.mubr.f32.gmra.mrb[0].mxu0 %v3340
  %v3444 = vpop.f32.mrb[0].mxu0
  %v3445 = vadd.f32 %v3292, %v3444
  %v3446 = vpop.f32.mrb[0].mxu0
  %3447 = vmatprep.mubr.f32.mxu0 0.0
  %3448 = vmatmul.mubr.f32.gmra.mrb[0].mxu0 %v3343
  %v3449 = vpop.f32.mrb[0].mxu0
  %v3450 = vadd.f32 %v3297, %v3449
  %v3451 = vpop.f32.mrb[0].mxu0
  %3452 = vmatprep.mubr.f32.mxu0 0.0
  %3453 = vmatmul.mubr.f32.gmra.mrb[0].mxu0 %v3346
  %v3454 = vpop.f32.mrb[0].mxu0
  %v3455 = vadd.f32 %v3302, %v3454
  %v3456 = vpop.f32.mrb[0].mxu0
  %3457 = vmatprep.mubr.f32.mxu0 0.0
  %3458 = vmatmul.mubr.f32.gmra.mrb[0].mxu0 %v3349
  %v3459 = vpop.f32.mrb[0].mxu0
  %v3460 = vadd.f32 %v3307, %v3459
  %v3461 = vpop.f32.mrb[0].mxu0
  %3462 = vmatprep.mubr.f32.mxu0 0.0
  %3463 = vmatmul.mubr.f32.gmra.mrb[0].mxu0 %v3352
  %v3464 = vpop.f32.mrb[0].mxu0
  %v3465 = vadd.f32 %v3312, %v3464
  %v3466 = vpop.f32.mrb[0].mxu0
  %3467 = vmatprep.mubr.f32.mxu0 0.0
  %3468 = vmatmul.mubr.f32.gmra.mrb[0].mxu0 %v3355
  %v3469 = vpop.f32.mrb[0].mxu0
  %v3470 = vadd.f32 %v3317, %v3469
  %v3471 = vpop.f32.mrb[0].mxu0
  %3472 = vmatprep.mubr.f32.mxu0 0.0
  %3473 = vmatmul.mubr.f32.gmra.mrb[0].mxu0 %v3358
  %v3474 = vpop.f32.mrb[0].mxu0
  %v3475 = vadd.f32 %v3322, %v3474
  %v3476 = vpop.f32.mrb[0].mxu0
  %3477 = vmatprep.mubr.f32.mxu0 0.0
  %3478 = vmatmul.mubr.f32.gmra.mrb[0].mxu0 %v3361
  %v3479 = vpop.f32.mrb[0].mxu0
  %v3480 = vadd.f32 %v3327, %v3479
  %v3481 = vpop.f32.mrb[0].mxu0
  %3482 = vdwg.mxu0
  %v3483 = vmax.f32 %v3430, 0.0
  %v3484 = vmax.f32 %v3435, 0.0
  %v3485 = vmax.f32 %v3440, 0.0
  %v3486 = vmax.f32 %v3445, 0.0
  %v3487 = vmax.f32 %v3450, 0.0
  %v3488 = vmax.f32 %v3455, 0.0
  %v3489 = vmax.f32 %v3460, 0.0
  %v3490 = vmax.f32 %v3465, 0.0
  %v3491 = vmax.f32 %v3470, 0.0
  %v3492 = vmax.f32 %v3475, 0.0
  %v3493 = vmax.f32 %v3480, 0.0
  %v3494 = vld [vmem:[%s11] sm:$0xff]
  %v3495 = vld [vmem:[%s11 + $0x8] sm:$0x3]
  %v3496 = vld [vmem:[%s12] sm:$0xff]
  %v3497 = vld [vmem:[%s12 + $0x8] sm:$0x3]
  %3499 = vset.pattern.permute.xlu0 0
  %3500 = vperm.xlu0 %3499, %v3496
  %v3501 = vpop.permute.xlu0 %3500
  %3504 = vset.pattern.permute.xlu0 0
  %3505 = vperm.xlu0 %3504, %v3497
  %v3506 = vpop.permute.xlu0 %3505
  %vm3508 = vcmask 687104
  %v3510 = vsel %vm3508, %v3494, 0
  %v3513 = vsel %vm3508, %v3495, 0
  %vm3515 = vcmask 1043456
  %v3517 = vsel %vm3515, %v3493, 0
  %3519 = vmatprep.subr.mxu0 0.0
  %3520 = vmatpush1.msra.mxu0 %v3483
  %3521 = vmatprep.subr.mxu0 0.0
  %3522 = vmatpush1.msra.mxu0 %v3484
  %3523 = vmatprep.subr.mxu0 0.0
  %3524 = vmatpush1.msra.mxu0 %v3485
  %3525 = vmatprep.subr.mxu0 0.0
  %3526 = vmatpush1.msra.mxu0 %v3486
  %3527 = vmatprep.subr.mxu0 0.0
  %3528 = vmatpush1.msra.mxu0 %v3487
  %3529 = vmatprep.subr.mxu0 0.0
  %3530 = vmatpush1.msra.mxu0 %v3488
  %3531 = vmatprep.subr.mxu0 0.0
  %3532 = vmatpush1.msra.mxu0 %v3489
  %3533 = vmatprep.subr.mxu0 0.0
  %3534 = vmatpush1.msra.mxu0 %v3490
  %3535 = vmatprep.subr.mxu0 0.0
  %3536 = vmatpush1.msra.mxu0 %v3491
  %3537 = vmatprep.subr.mxu0 0.0
  %3538 = vmatpush1.msra.mxu0 %v3492
  %3539 = vmatprep.subr.mxu0 0.0
  %3540 = vmatpush1.msra.mxu0 %v3517
  %3541 = vmatprep.subr.mxu0 0.0
  %3542 = vmatpush1.msra.mxu0 0.0
  %3543 = vmatprep.subr.mxu0 0.0
  %3544 = vmatpush1.msra.mxu0 0.0
  %3545 = vmatprep.subr.mxu0 0.0
  %3546 = vmatpush1.msra.mxu0 0.0
  %3547 = vmatprep.subr.mxu0 0.0
  %3548 = vmatpush1.msra.mxu0 0.0
  %3549 = vmatprep.subr.mxu0 0.0
  %3550 = vmatpush1.msra.mxu0 0.0
  %3551 = vmatprep.subr.mxu0 0.0
  %3552 = vmatpush1.msra.mxu0 0.0
  %3553 = vmatprep.subr.mxu0 0.0
  %3554 = vmatpush1.msra.mxu0 0.0
  %3555 = vmatprep.subr.mxu0 0.0
  %3556 = vmatpush1.msra.mxu0 0.0
  %3557 = vmatprep.subr.mxu0 0.0
  %3558 = vmatpush1.msra.mxu0 0.0
  %3559 = vmatprep.subr.mxu0 0.0
  %3560 = vmatpush1.msra.mxu0 0.0
  %3561 = vmatprep.subr.mxu0 0.0
  %3562 = vmatpush1.msra.mxu0 0.0
  %3563 = vmatprep.subr.mxu0 0.0
  %3564 = vmatpush1.msra.mxu0 0.0
  %3565 = vmatprep.subr.mxu0 0.0
  %3566 = vmatpush1.msra.mxu0 0.0
  %3567 = vmatprep.subr.mxu0 0.0
  %3568 = vmatpush1.msra.mxu0 0.0
  %3569 = vmatprep.subr.mxu0 0.0
  %3570 = vmatpush1.msra.mxu0 0.0
  %3571 = vmatprep.subr.mxu0 0.0
  %3572 = vmatpush1.msra.mxu0 0.0
  %3573 = vmatprep.subr.mxu0 0.0
  %3574 = vmatpush1.msra.mxu0 0.0
  %3575 = vmatprep.subr.mxu0 0.0
  %3576 = vmatpush1.msra.mxu0 0.0
  %3577 = vmatprep.subr.mxu0 0.0
  %3578 = vmatpush1.msra.mxu0 0.0
  %3579 = vmatprep.subr.mxu0 0.0
  %3580 = vmatpush1.msra.mxu0 0.0
  %3581 = vmatprep.subr.mxu0 0.0
  %3582 = vmatpush1.msra.mxu0 0.0
  %3583 = vmatprep.mubr.f32.mxu0 0.0
  %3584 = vmatmul.mubr.f32.gmra.mrb[0].mxu0 %v3510
  %v3585 = vpop.f32.mrb[0].mxu0
  %v3586 = vadd.f32 %v3501, %v3585
  %v3587 = vpop.f32.mrb[0].mxu0
  %3588 = vmatprep.mubr.f32.mxu0 0.0
  %3589 = vmatmul.mubr.f32.gmra.mrb[0].mxu0 %v3513
  %v3590 = vpop.f32.mrb[0].mxu0
  %v3591 = vadd.f32 %v3506, %v3590
  %v3592 = vpop.f32.mrb[0].mxu0
  %3593 = vdwg.mxu0
  %vm3594 = vcmask 15360
  %3595 = vst.msk [vmem:[%s13] sm:$0xff] %vm3594, %v3586
  %vm3596 = vcmask 9216
  %3597 = vst.msk [vmem:[%s13 + $0x8] sm:$0x3] %vm3596, %v3591
  // Predicated region
  $region68: #{cnn_forward.1} parent=0 // pred_check
    _
  $region69: #{cnn_forward.1} parent=0 // pred_check_branch
    %3599 = sbr.rel (0) target = $region71
  $region70: #{cnn_forward.1} parent=0 // pred_region
    _
  $region71: #{cnn_forward.1} parent=0 // pred_fallthru
    _
  // Predicated region
  $region72: #{cnn_forward.1} parent=0 // pred_check
    _
  $region73: #{cnn_forward.1} parent=0 // pred_check_branch
    %3601 = sbr.rel (0) target = $region75
  $region74: #{cnn_forward.1} parent=0 // pred_region
    _
  $region75: #{cnn_forward.1} parent=0 // pred_fallthru
    _

</llo_original>
